<compile_context>
chip_gen: v6e
topology: v6e:2x2x1
jax: 0.10.0
libtpu: 0.0.40
codegen_flags: <defaults>
</compile_context>

<pallas_src>
import math

import jax
import jax.numpy as jnp
from jax.experimental import pallas as pl
from jax.experimental.pallas import tpu as pltpu

BN_EPS = 1e-5
PACKED_MAX_C = 128   # below this, use the packed K = 9*C single-dot form


# ----------------------------------------------------------------------------
# Fused ConvBlock kernel
# ----------------------------------------------------------------------------
def _make_convblock_kernel(H, W, Cin, Cout, packed1, packed2):
    Hp, Wp, HW = H + 2, W + 2, H * W
    TAPS = [(dy, dx) for dy in range(3) for dx in range(3)]

    def conv3x3(get_tap, w_ref, C, packed):
        """3x3 'same' conv as MXU matmul(s); taps are bf16, accum f32."""
        if packed:
            # Small C: one K = 9*C dot (concat of 9 small taps is cheap here).
            p = jnp.concatenate(
                [get_tap(dy, dx).reshape(HW, C) for dy, dx in TAPS], axis=1)
            return jnp.dot(p, w_ref[...], preferred_element_type=jnp.float32)
        # Large C: unrolled per-tap accumulation, K = C >= 128 per dot,
        # no (HW, 9*C) temporary ever materialized.
        acc = None
        for t, (dy, dx) in enumerate(TAPS):
            tap = get_tap(dy, dx).reshape(HW, C)
            d = jnp.dot(tap, w_ref[t * C:(t + 1) * C, :],
                        preferred_element_type=jnp.float32)
            acc = d if acc is None else acc + d
        return acc

    def kernel(xp_ref, w1_ref, s1_ref, b1_ref, w2_ref, s2_ref, b2_ref,
               o_ref, y1p_ref):
        # xp_ref : (1, Hp, Wp, Cin) bf16  zero-padded NHWC input (one image)
        # w1_ref : (9*Cin, Cout)    bf16  conv1 weights, rows ordered (dy,dx,ci)
        # s1/b1  : (1, Cout)         f32  folded bn1 scale / shift
        # w2_ref : (9*Cout, Cout)   bf16  conv2 weights, rows ordered (dy,dx,ci)
        # s2/b2  : (1, Cout)         f32  folded bn2 scale / shift
        # o_ref  : (1, H*W, Cout)    f32  lane-dense output slab (NHWC order)
        # y1p_ref: (Hp, Wp, Cout)   bf16  VMEM scratch: padded intermediate

        # Zero only the halo ring of the padded scratch; the interior is fully
        # overwritten below.  (Cheap, and megacore-safe vs. a one-time init.)
        zrow = jnp.zeros((1, Wp, Cout), jnp.bfloat16)
        zcol = jnp.zeros((H, 1, Cout), jnp.bfloat16)
        y1p_ref[0:1, :, :] = zrow
        y1p_ref[Hp - 1:Hp, :, :] = zrow
        y1p_ref[1:H + 1, 0:1, :] = zcol
        y1p_ref[1:H + 1, Wp - 1:Wp, :] = zcol

        # conv1 -> bn1 -> ReLU
        y1 = conv3x3(lambda dy, dx: xp_ref[0, dy:dy + H, dx:dx + W, :],
                     w1_ref, Cin, packed1)                       # (HW, Cout) f32
        y1 = jnp.maximum(y1 * s1_ref[...] + b1_ref[...], 0.0)

        # Keep the padded intermediate activation in VMEM as bf16
        # (no HBM round-trip, half the store traffic of f32).
        y1p_ref[1:H + 1, 1:W + 1, :] = (
            y1.reshape(H, W, Cout).astype(jnp.bfloat16))

        # conv2 -> bn2 (dropout is identity at inference)
        y2 = conv3x3(lambda dy, dx: y1p_ref[dy:dy + H, dx:dx + W, :],
                     w2_ref, Cout, packed2)                      # (HW, Cout) f32
        y2 = y2 * s2_ref[...] + b2_ref[...]
        o_ref[0] = y2

    return kernel


def conv_block_forward(x_nchw, params):
    """ConvBlock forward.  x: (N, Cin, H, W) f32 -> (N, Cout, H, W) f32."""
    N, Cin, H, W = x_nchw.shape
    Cout = params["s1"].shape[0]
    Hp, Wp, HW = H + 2, W + 2, H * W
    packed1 = Cin < PACKED_MAX_C
    packed2 = Cout < PACKED_MAX_C

    # Layout glue: NCHW -> NHWC, cast to bf16 once, one spatial zero-pad.
    xp = jnp.pad(jnp.transpose(x_nchw, (0, 2, 3, 1)).astype(jnp.bfloat16),
                 ((0, 0), (1, 1), (1, 1), (0, 0)))

    # Weight / BN preparation (host side, tiny).
    w1m = params["w1"].reshape(9 * Cin, Cout).astype(jnp.bfloat16)
    w2m = params["w2"].reshape(9 * Cout, Cout).astype(jnp.bfloat16)
    s1 = params["s1"].reshape(1, Cout).astype(jnp.float32)
    b1 = params["b1"].reshape(1, Cout).astype(jnp.float32)
    s2 = params["s2"].reshape(1, Cout).astype(jnp.float32)
    b2 = params["b2"].reshape(1, Cout).astype(jnp.float32)

    flops = 2 * N * HW * 9 * (Cin + Cout) * Cout
    bytes_accessed = (xp.size * 2 + (w1m.size + w2m.size) * 2
                      + 4 * Cout * 4 + N * HW * Cout * 4)

    y = pl.pallas_call(
        _make_convblock_kernel(H, W, Cin, Cout, packed1, packed2),
        out_shape=jax.ShapeDtypeStruct((N, HW, Cout), jnp.float32),
        grid=(N,),
        in_specs=[
            pl.BlockSpec((1, Hp, Wp, Cin), lambda n: (n, 0, 0, 0)),
            pl.BlockSpec((9 * Cin, Cout), lambda n: (0, 0)),
            pl.BlockSpec((1, Cout), lambda n: (0, 0)),
            pl.BlockSpec((1, Cout), lambda n: (0, 0)),
            pl.BlockSpec((9 * Cout, Cout), lambda n: (0, 0)),
            pl.BlockSpec((1, Cout), lambda n: (0, 0)),
            pl.BlockSpec((1, Cout), lambda n: (0, 0)),
        ],
        out_specs=pl.BlockSpec((1, HW, Cout), lambda n: (n, 0, 0)),
        scratch_shapes=[pltpu.VMEM((Hp, Wp, Cout), jnp.bfloat16)],
        compiler_params=pltpu.CompilerParams(
            dimension_semantics=("parallel",),
            vmem_limit_bytes=64 * 1024 * 1024),
        cost_estimate=pl.CostEstimate(flops=flops, transcendentals=0,
                                      bytes_accessed=bytes_accessed),
    )(xp, w1m, s1, b1, w2m, s2, b2)

    # NHWC slab -> NCHW (done in the wrapper so the kernel stores lane-dense).
    return jnp.transpose(y.reshape(N, H, W, Cout), (0, 3, 1, 2))


# ----------------------------------------------------------------------------
# Deterministic synthetic parameters (inference-mode BN folded to scale/shift)
# ----------------------------------------------------------------------------
def _conv_w(key, cin, cout):
    fan_in = 9 * cin
    return jax.random.normal(key, (3, 3, cin, cout), jnp.float32) / math.sqrt(fan_in)


def _bn_fold(key, c):
    kg, kb, km, kv = jax.random.split(key, 4)
    gamma = 1.0 + 0.1 * jax.random.normal(kg, (c,), jnp.float32)
    beta = 0.1 * jax.random.normal(kb, (c,), jnp.float32)
    mean = 0.1 * jax.random.normal(km, (c,), jnp.float32)
    var = 1.0 + 0.1 * jax.random.uniform(kv, (c,), jnp.float32)
    scale = gamma / jnp.sqrt(var + BN_EPS)
    shift = beta - mean * scale
    return scale, shift


def init_conv_block(key, cin, cout):
    k1, k2, k3, k4 = jax.random.split(key, 4)
    s1, b1 = _bn_fold(k3, cout)
    s2, b2 = _bn_fold(k4, cout)
    return dict(w1=_conv_w(k1, cin, cout), s1=s1, b1=b1,
                w2=_conv_w(k2, cout, cout), s2=s2, b2=b2)


# ----------------------------------------------------------------------------
# Pure-JAX reference (same bf16-input / f32-accumulate precision as the kernel)
# ----------------------------------------------------------------------------
def _conv3x3_ref(x_nhwc, w_hwio):
    N, H, W, Cin = x_nhwc.shape
    Cout = w_hwio.shape[-1]
    xp = jnp.pad(x_nhwc, ((0, 0), (1, 1), (1, 1), (0, 0)))
    taps = jnp.concatenate(
        [xp[:, dy:dy + H, dx:dx + W, :] for dy in range(3) for dx in range(3)],
        axis=-1).astype(jnp.bfloat16)                            # (N,H,W,9*Cin)
    w = w_hwio.reshape(9 * Cin, Cout).astype(jnp.bfloat16)
    return jnp.einsum("nhwk,ko->nhwo", taps, w,
                      preferred_element_type=jnp.float32)


def conv_block_reference(x_nchw, p):
    x = jnp.transpose(x_nchw, (0, 2, 3, 1)).astype(jnp.float32)
    y = jnp.maximum(_conv3x3_ref(x, p["w1"]) * p["s1"] + p["b1"], 0.0)
    y = _conv3x3_ref(y, p["w2"]) * p["s2"] + p["b2"]
    return jnp.transpose(y, (0, 3, 1, 2))


if __name__ == "__main__":
    key = jax.random.PRNGKey(0)
    kx, kp, kx2, kp2 = jax.random.split(key, 4)

    # Small config (matches module defaults; exercises the packed K=9*C path).
    N, C_IN, C_OUT, H, W = 2, 4, 8, 16, 16
    x = jax.random.normal(kx, (N, C_IN, H, W), jnp.float32)
    params = init_conv_block(kp, C_IN, C_OUT)

    y = jax.jit(conv_block_forward)(x, params)
    jax.block_until_ready(y)
    assert y.shape == (N, C_OUT, H, W), y.shape
    assert bool(jnp.all(jnp.isfinite(y)))
    y_ref = conv_block_reference(x, params)
    max_err = float(jnp.max(jnp.abs(y - y_ref)))
    assert max_err < 3e-2, max_err

    # Larger-channel config (exercises the per-tap MXU-accumulation path and
    # the lane-dense (HW, Cout) output layout used by real CycleGAN blocks).
    N2, C2, H2, W2 = 2, 128, 16, 16
    x2 = jax.random.normal(kx2, (N2, C2, H2, W2), jnp.float32)
    params2 = init_conv_block(kp2, C2, C2)
    y2 = jax.jit(conv_block_forward)(x2, params2)
    jax.block_until_ready(y2)
    assert y2.shape == (N2, C2, H2, W2), y2.shape
    y2_ref = conv_block_reference(x2, params2)
    max_err2 = float(jnp.max(jnp.abs(y2 - y2_ref)))
    assert max_err2 < 3e-2, max_err2

    print("KERNEL_OK")
</pallas_src>

<mosaic_0001>
module attributes {stable_mosaic.version = 11 : i64} {
  func.func @kernel(%arg0: i32, %arg1: memref<1x18x18x4xbf16, #tpu.memory_space<vmem>>, %arg2: memref<36x8xbf16, #tpu.memory_space<vmem>>, %arg3: memref<1x8xf32, #tpu.memory_space<vmem>>, %arg4: memref<1x8xf32, #tpu.memory_space<vmem>>, %arg5: memref<72x8xbf16, #tpu.memory_space<vmem>>, %arg6: memref<1x8xf32, #tpu.memory_space<vmem>>, %arg7: memref<1x8xf32, #tpu.memory_space<vmem>>, %arg8: memref<1x256x8xf32, #tpu.memory_space<vmem>>, %arg9: memref<18x18x8xbf16, #tpu.memory_space<vmem>>) attributes {dimension_semantics = [#tpu.dimension_semantics<parallel>], iteration_bounds = array<i64: 2>, scalar_prefetch = 0 : i64, scratch_operands = 1 : i64, tpu.core_type = #tpu.core_type<tc>, window_params = [{transform_indices = @transform_0, window_bounds = array<i64: 1, 18, 18, 4>}, {pipeline_mode = #tpu.pipeline_mode<synchronous>, transform_indices = @transform_1, window_bounds = array<i64: 36, 8>}, {pipeline_mode = #tpu.pipeline_mode<synchronous>, transform_indices = @transform_2, window_bounds = array<i64: 1, 8>}, {pipeline_mode = #tpu.pipeline_mode<synchronous>, transform_indices = @transform_3, window_bounds = array<i64: 1, 8>}, {pipeline_mode = #tpu.pipeline_mode<synchronous>, transform_indices = @transform_4, window_bounds = array<i64: 72, 8>}, {pipeline_mode = #tpu.pipeline_mode<synchronous>, transform_indices = @transform_5, window_bounds = array<i64: 1, 8>}, {pipeline_mode = #tpu.pipeline_mode<synchronous>, transform_indices = @transform_6, window_bounds = array<i64: 1, 8>}, {transform_indices = @transform_7, window_bounds = array<i64: 1, 256, 8>}]} {
    %cst = arith.constant 0.000000e+00 : bf16
    %0 = vector.broadcast %cst : bf16 to vector<1x18x8xbf16>
    %cst_0 = arith.constant 0.000000e+00 : bf16
    %1 = vector.broadcast %cst_0 : bf16 to vector<16x1x8xbf16>
    %c0 = arith.constant 0 : index
    %c0_1 = arith.constant 0 : index
    %c0_2 = arith.constant 0 : index
    %2 = vector.load %arg9[%c0, %c0_1, %c0_2] : memref<18x18x8xbf16, #tpu.memory_space<vmem>>, vector<1x18x8xbf16>
    tpu.vector_store %arg9[%c0, %c0_1, %c0_2], %0 {strides = array<i32>} : memref<18x18x8xbf16, #tpu.memory_space<vmem>>, vector<1x18x8xbf16>,
    %c17 = arith.constant 17 : index
    %c0_3 = arith.constant 0 : index
    %c0_4 = arith.constant 0 : index
    %3 = vector.load %arg9[%c17, %c0_3, %c0_4] : memref<18x18x8xbf16, #tpu.memory_space<vmem>>, vector<1x18x8xbf16>
    tpu.vector_store %arg9[%c17, %c0_3, %c0_4], %0 {strides = array<i32>} : memref<18x18x8xbf16, #tpu.memory_space<vmem>>, vector<1x18x8xbf16>,
    %c1 = arith.constant 1 : index
    %c0_5 = arith.constant 0 : index
    %c0_6 = arith.constant 0 : index
    %4 = vector.load %arg9[%c1, %c0_5, %c0_6] : memref<18x18x8xbf16, #tpu.memory_space<vmem>>, vector<16x1x8xbf16>
    tpu.vector_store %arg9[%c1, %c0_5, %c0_6], %1 {strides = array<i32>} : memref<18x18x8xbf16, #tpu.memory_space<vmem>>, vector<16x1x8xbf16>,
    %c1_7 = arith.constant 1 : index
    %c17_8 = arith.constant 17 : index
    %c0_9 = arith.constant 0 : index
    %5 = vector.load %arg9[%c1_7, %c17_8, %c0_9] : memref<18x18x8xbf16, #tpu.memory_space<vmem>>, vector<16x1x8xbf16>
    tpu.vector_store %arg9[%c1_7, %c17_8, %c0_9], %1 {strides = array<i32>} : memref<18x18x8xbf16, #tpu.memory_space<vmem>>, vector<16x1x8xbf16>,
    %c0_10 = arith.constant 0 : index
    %c0_11 = arith.constant 0 : index
    %c0_12 = arith.constant 0 : index
    %c0_13 = arith.constant 0 : index
    %6 = vector.load %arg1[%c0_10, %c0_11, %c0_12, %c0_13] : memref<1x18x18x4xbf16, #tpu.memory_space<vmem>>, vector<1x16x16x4xbf16>
    %7 = vector.shape_cast %6 : vector<1x16x16x4xbf16> to vector<16x16x4xbf16>
    %8 = vector.shape_cast %7 : vector<16x16x4xbf16> to vector<256x4xbf16>
    %c0_14 = arith.constant 0 : index
    %c0_15 = arith.constant 0 : index
    %c1_16 = arith.constant 1 : index
    %c0_17 = arith.constant 0 : index
    %9 = vector.load %arg1[%c0_14, %c0_15, %c1_16, %c0_17] : memref<1x18x18x4xbf16, #tpu.memory_space<vmem>>, vector<1x16x16x4xbf16>
    %10 = vector.shape_cast %9 : vector<1x16x16x4xbf16> to vector<16x16x4xbf16>
    %11 = vector.shape_cast %10 : vector<16x16x4xbf16> to vector<256x4xbf16>
    %c0_18 = arith.constant 0 : index
    %c0_19 = arith.constant 0 : index
    %c2 = arith.constant 2 : index
    %c0_20 = arith.constant 0 : index
    %12 = vector.load %arg1[%c0_18, %c0_19, %c2, %c0_20] : memref<1x18x18x4xbf16, #tpu.memory_space<vmem>>, vector<1x16x16x4xbf16>
    %13 = vector.shape_cast %12 : vector<1x16x16x4xbf16> to vector<16x16x4xbf16>
    %14 = vector.shape_cast %13 : vector<16x16x4xbf16> to vector<256x4xbf16>
    %c0_21 = arith.constant 0 : index
    %c1_22 = arith.constant 1 : index
    %c0_23 = arith.constant 0 : index
    %c0_24 = arith.constant 0 : index
    %15 = vector.load %arg1[%c0_21, %c1_22, %c0_23, %c0_24] : memref<1x18x18x4xbf16, #tpu.memory_space<vmem>>, vector<1x16x16x4xbf16>
    %16 = vector.shape_cast %15 : vector<1x16x16x4xbf16> to vector<16x16x4xbf16>
    %17 = vector.shape_cast %16 : vector<16x16x4xbf16> to vector<256x4xbf16>
    %c0_25 = arith.constant 0 : index
    %c1_26 = arith.constant 1 : index
    %c1_27 = arith.constant 1 : index
    %c0_28 = arith.constant 0 : index
    %18 = vector.load %arg1[%c0_25, %c1_26, %c1_27, %c0_28] : memref<1x18x18x4xbf16, #tpu.memory_space<vmem>>, vector<1x16x16x4xbf16>
    %19 = vector.shape_cast %18 : vector<1x16x16x4xbf16> to vector<16x16x4xbf16>
    %20 = vector.shape_cast %19 : vector<16x16x4xbf16> to vector<256x4xbf16>
    %c0_29 = arith.constant 0 : index
    %c1_30 = arith.constant 1 : index
    %c2_31 = arith.constant 2 : index
    %c0_32 = arith.constant 0 : index
    %21 = vector.load %arg1[%c0_29, %c1_30, %c2_31, %c0_32] : memref<1x18x18x4xbf16, #tpu.memory_space<vmem>>, vector<1x16x16x4xbf16>
    %22 = vector.shape_cast %21 : vector<1x16x16x4xbf16> to vector<16x16x4xbf16>
    %23 = vector.shape_cast %22 : vector<16x16x4xbf16> to vector<256x4xbf16>
    %c0_33 = arith.constant 0 : index
    %c2_34 = arith.constant 2 : index
    %c0_35 = arith.constant 0 : index
    %c0_36 = arith.constant 0 : index
    %24 = vector.load %arg1[%c0_33, %c2_34, %c0_35, %c0_36] : memref<1x18x18x4xbf16, #tpu.memory_space<vmem>>, vector<1x16x16x4xbf16>
    %25 = vector.shape_cast %24 : vector<1x16x16x4xbf16> to vector<16x16x4xbf16>
    %26 = vector.shape_cast %25 : vector<16x16x4xbf16> to vector<256x4xbf16>
    %c0_37 = arith.constant 0 : index
    %c2_38 = arith.constant 2 : index
    %c1_39 = arith.constant 1 : index
    %c0_40 = arith.constant 0 : index
    %27 = vector.load %arg1[%c0_37, %c2_38, %c1_39, %c0_40] : memref<1x18x18x4xbf16, #tpu.memory_space<vmem>>, vector<1x16x16x4xbf16>
    %28 = vector.shape_cast %27 : vector<1x16x16x4xbf16> to vector<16x16x4xbf16>
    %29 = vector.shape_cast %28 : vector<16x16x4xbf16> to vector<256x4xbf16>
    %c0_41 = arith.constant 0 : index
    %c2_42 = arith.constant 2 : index
    %c2_43 = arith.constant 2 : index
    %c0_44 = arith.constant 0 : index
    %30 = vector.load %arg1[%c0_41, %c2_42, %c2_43, %c0_44] : memref<1x18x18x4xbf16, #tpu.memory_space<vmem>>, vector<1x16x16x4xbf16>
    %31 = vector.shape_cast %30 : vector<1x16x16x4xbf16> to vector<16x16x4xbf16>
    %32 = vector.shape_cast %31 : vector<16x16x4xbf16> to vector<256x4xbf16>
    %33 = tpu.concatenate %8, %11, %14, %17, %20, %23, %26, %29, %32 in 1 : vector<256x4xbf16>, vector<256x4xbf16>, vector<256x4xbf16>, vector<256x4xbf16>, vector<256x4xbf16>, vector<256x4xbf16>, vector<256x4xbf16>, vector<256x4xbf16>, vector<256x4xbf16> -> vector<256x36xbf16>
    %c0_45 = arith.constant 0 : index
    %c0_46 = arith.constant 0 : index
    %34 = vector.load %arg2[%c0_45, %c0_46] : memref<36x8xbf16, #tpu.memory_space<vmem>>, vector<36x8xbf16>
    %cst_47 = arith.constant dense<0.000000e+00> : vector<256x8xf32>
    %35 = tpu.matmul %33, %34, %cst_47 {dimension_numbers = #tpu.dot_dimension_numbers<[1], [0], [0], [1], [0, 0, 1, 1], [], []>} : vector<256x36xbf16>, vector<36x8xbf16>, vector<256x8xf32> -> vector<256x8xf32>
    %c0_48 = arith.constant 0 : index
    %c0_49 = arith.constant 0 : index
    %36 = vector.load %arg3[%c0_48, %c0_49] : memref<1x8xf32, #tpu.memory_space<vmem>>, vector<1x8xf32>
    %37 = vector.broadcast %36 : vector<1x8xf32> to vector<256x8xf32>
    %38 = arith.mulf %35, %37 : vector<256x8xf32>
    %c0_50 = arith.constant 0 : index
    %c0_51 = arith.constant 0 : index
    %39 = vector.load %arg4[%c0_50, %c0_51] : memref<1x8xf32, #tpu.memory_space<vmem>>, vector<1x8xf32>
    %40 = vector.broadcast %39 : vector<1x8xf32> to vector<256x8xf32>
    %41 = arith.addf %38, %40 : vector<256x8xf32>
    %cst_52 = arith.constant 0.000000e+00 : f32
    %42 = vector.broadcast %cst_52 : f32 to vector<256x8xf32>
    %43 = arith.maximumf %41, %42 : vector<256x8xf32>
    %44 = vector.shape_cast %43 : vector<256x8xf32> to vector<16x16x8xf32>
    %45 = arith.truncf %44 : vector<16x16x8xf32> to vector<16x16x8xbf16>
    %c1_53 = arith.constant 1 : index
    %c1_54 = arith.constant 1 : index
    %c0_55 = arith.constant 0 : index
    %46 = vector.load %arg9[%c1_53, %c1_54, %c0_55] : memref<18x18x8xbf16, #tpu.memory_space<vmem>>, vector<16x16x8xbf16>
    tpu.vector_store %arg9[%c1_53, %c1_54, %c0_55], %45 {strides = array<i32>} : memref<18x18x8xbf16, #tpu.memory_space<vmem>>, vector<16x16x8xbf16>,
    %c0_56 = arith.constant 0 : index
    %c0_57 = arith.constant 0 : index
    %c0_58 = arith.constant 0 : index
    %47 = vector.load %arg9[%c0_56, %c0_57, %c0_58] : memref<18x18x8xbf16, #tpu.memory_space<vmem>>, vector<16x16x8xbf16>
    %48 = vector.shape_cast %47 : vector<16x16x8xbf16> to vector<256x8xbf16>
    %c0_59 = arith.constant 0 : index
    %c1_60 = arith.constant 1 : index
    %c0_61 = arith.constant 0 : index
    %49 = vector.load %arg9[%c0_59, %c1_60, %c0_61] : memref<18x18x8xbf16, #tpu.memory_space<vmem>>, vector<16x16x8xbf16>
    %50 = vector.shape_cast %49 : vector<16x16x8xbf16> to vector<256x8xbf16>
    %c0_62 = arith.constant 0 : index
    %c2_63 = arith.constant 2 : index
    %c0_64 = arith.constant 0 : index
    %51 = vector.load %arg9[%c0_62, %c2_63, %c0_64] : memref<18x18x8xbf16, #tpu.memory_space<vmem>>, vector<16x16x8xbf16>
    %52 = vector.shape_cast %51 : vector<16x16x8xbf16> to vector<256x8xbf16>
    %c1_65 = arith.constant 1 : index
    %c0_66 = arith.constant 0 : index
    %c0_67 = arith.constant 0 : index
    %53 = vector.load %arg9[%c1_65, %c0_66, %c0_67] : memref<18x18x8xbf16, #tpu.memory_space<vmem>>, vector<16x16x8xbf16>
    %54 = vector.shape_cast %53 : vector<16x16x8xbf16> to vector<256x8xbf16>
    %c1_68 = arith.constant 1 : index
    %c1_69 = arith.constant 1 : index
    %c0_70 = arith.constant 0 : index
    %55 = vector.load %arg9[%c1_68, %c1_69, %c0_70] : memref<18x18x8xbf16, #tpu.memory_space<vmem>>, vector<16x16x8xbf16>
    %56 = vector.shape_cast %55 : vector<16x16x8xbf16> to vector<256x8xbf16>
    %c1_71 = arith.constant 1 : index
    %c2_72 = arith.constant 2 : index
    %c0_73 = arith.constant 0 : index
    %57 = vector.load %arg9[%c1_71, %c2_72, %c0_73] : memref<18x18x8xbf16, #tpu.memory_space<vmem>>, vector<16x16x8xbf16>
    %58 = vector.shape_cast %57 : vector<16x16x8xbf16> to vector<256x8xbf16>
    %c2_74 = arith.constant 2 : index
    %c0_75 = arith.constant 0 : index
    %c0_76 = arith.constant 0 : index
    %59 = vector.load %arg9[%c2_74, %c0_75, %c0_76] : memref<18x18x8xbf16, #tpu.memory_space<vmem>>, vector<16x16x8xbf16>
    %60 = vector.shape_cast %59 : vector<16x16x8xbf16> to vector<256x8xbf16>
    %c2_77 = arith.constant 2 : index
    %c1_78 = arith.constant 1 : index
    %c0_79 = arith.constant 0 : index
    %61 = vector.load %arg9[%c2_77, %c1_78, %c0_79] : memref<18x18x8xbf16, #tpu.memory_space<vmem>>, vector<16x16x8xbf16>
    %62 = vector.shape_cast %61 : vector<16x16x8xbf16> to vector<256x8xbf16>
    %c2_80 = arith.constant 2 : index
    %c2_81 = arith.constant 2 : index
    %c0_82 = arith.constant 0 : index
    %63 = vector.load %arg9[%c2_80, %c2_81, %c0_82] : memref<18x18x8xbf16, #tpu.memory_space<vmem>>, vector<16x16x8xbf16>
    %64 = vector.shape_cast %63 : vector<16x16x8xbf16> to vector<256x8xbf16>
    %65 = tpu.concatenate %48, %50, %52, %54, %56, %58, %60, %62, %64 in 1 : vector<256x8xbf16>, vector<256x8xbf16>, vector<256x8xbf16>, vector<256x8xbf16>, vector<256x8xbf16>, vector<256x8xbf16>, vector<256x8xbf16>, vector<256x8xbf16>, vector<256x8xbf16> -> vector<256x72xbf16>
    %c0_83 = arith.constant 0 : index
    %c0_84 = arith.constant 0 : index
    %66 = vector.load %arg5[%c0_83, %c0_84] : memref<72x8xbf16, #tpu.memory_space<vmem>>, vector<72x8xbf16>
    %cst_85 = arith.constant dense<0.000000e+00> : vector<256x8xf32>
    %67 = tpu.matmul %65, %66, %cst_85 {dimension_numbers = #tpu.dot_dimension_numbers<[1], [0], [0], [1], [0, 0, 1, 1], [], []>} : vector<256x72xbf16>, vector<72x8xbf16>, vector<256x8xf32> -> vector<256x8xf32>
    %c0_86 = arith.constant 0 : index
    %c0_87 = arith.constant 0 : index
    %68 = vector.load %arg6[%c0_86, %c0_87] : memref<1x8xf32, #tpu.memory_space<vmem>>, vector<1x8xf32>
    %69 = vector.broadcast %68 : vector<1x8xf32> to vector<256x8xf32>
    %70 = arith.mulf %67, %69 : vector<256x8xf32>
    %c0_88 = arith.constant 0 : index
    %c0_89 = arith.constant 0 : index
    %71 = vector.load %arg7[%c0_88, %c0_89] : memref<1x8xf32, #tpu.memory_space<vmem>>, vector<1x8xf32>
    %72 = vector.broadcast %71 : vector<1x8xf32> to vector<256x8xf32>
    %73 = arith.addf %70, %72 : vector<256x8xf32>
    %c0_90 = arith.constant 0 : index
    %c0_91 = arith.constant 0 : index
    %c0_92 = arith.constant 0 : index
    %74 = vector.load %arg8[%c0_90, %c0_91, %c0_92] : memref<1x256x8xf32, #tpu.memory_space<vmem>>, vector<1x256x8xf32>
    %75 = vector.shape_cast %74 : vector<1x256x8xf32> to vector<256x8xf32>
    %76 = vector.shape_cast %73 : vector<256x8xf32> to vector<1x256x8xf32>
    tpu.vector_store %arg8[%c0_90, %c0_91, %c0_92], %76 {strides = array<i32>} : memref<1x256x8xf32, #tpu.memory_space<vmem>>, vector<1x256x8xf32>,
    return
  }
  func.func @transform_0(%arg0: i32) -> (i32, i32, i32, i32) {
    %c0_i32 = arith.constant 0 : i32
    %c0_i32_0 = arith.constant 0 : i32
    %c0_i32_1 = arith.constant 0 : i32
    %c0_i32_2 = arith.constant 0 : i32
    return %arg0, %c0_i32, %c0_i32_0, %c0_i32_1 : i32, i32, i32, i32
  }
  func.func @transform_1(%arg0: i32) -> (i32, i32) {
    %c0_i32 = arith.constant 0 : i32
    %c0_i32_0 = arith.constant 0 : i32
    %c0_i32_1 = arith.constant 0 : i32
    return %c0_i32, %c0_i32_0 : i32, i32
  }
  func.func @transform_2(%arg0: i32) -> (i32, i32) {
    %c0_i32 = arith.constant 0 : i32
    %c0_i32_0 = arith.constant 0 : i32
    %c0_i32_1 = arith.constant 0 : i32
    return %c0_i32, %c0_i32_0 : i32, i32
  }
  func.func @transform_3(%arg0: i32) -> (i32, i32) {
    %c0_i32 = arith.constant 0 : i32
    %c0_i32_0 = arith.constant 0 : i32
    %c0_i32_1 = arith.constant 0 : i32
    return %c0_i32, %c0_i32_0 : i32, i32
  }
  func.func @transform_4(%arg0: i32) -> (i32, i32) {
    %c0_i32 = arith.constant 0 : i32
    %c0_i32_0 = arith.constant 0 : i32
    %c0_i32_1 = arith.constant 0 : i32
    return %c0_i32, %c0_i32_0 : i32, i32
  }
  func.func @transform_5(%arg0: i32) -> (i32, i32) {
    %c0_i32 = arith.constant 0 : i32
    %c0_i32_0 = arith.constant 0 : i32
    %c0_i32_1 = arith.constant 0 : i32
    return %c0_i32, %c0_i32_0 : i32, i32
  }
  func.func @transform_6(%arg0: i32) -> (i32, i32) {
    %c0_i32 = arith.constant 0 : i32
    %c0_i32_0 = arith.constant 0 : i32
    %c0_i32_1 = arith.constant 0 : i32
    return %c0_i32, %c0_i32_0 : i32, i32
  }
  func.func @transform_7(%arg0: i32) -> (i32, i32, i32) {
    %c0_i32 = arith.constant 0 : i32
    %c0_i32_0 = arith.constant 0 : i32
    %c0_i32_1 = arith.constant 0 : i32
    return %arg0, %c0_i32, %c0_i32_0 : i32, i32, i32
  }
}

</mosaic_0001>

<llo_original>
// kernel: conv_block_forward.1
$region0: #{conv_block_forward.1}
  #allocation0 [shape = 'u32[]', space=smem, size = 0x4, offset = 0x4, fixed_abs, tag = 'smem constant byte address 0x4 - core index']
  #allocation1 [shape = 'u32[144,128]{1,0:T(1,128)}', space=vmem, size = 0x12000, scoped, tag = 'internal scratch']
  #allocation2 [shape = 'bf16[18,18,8]{2,1,0:T(8,128)(2,1)}', space=vmem, size = 0x1b000, scoped, tag = 'scratch operand']
  %s0 = inlined_call_operand.vmem [shape: bf16[2,18,18,4], index: 0, kind: input, shape index: {}]
  %s1 = inlined_call_operand.vmem [shape: bf16[36,8], index: 1, kind: input, shape index: {}]
  %s2 = inlined_call_operand.vmem [shape: f32[1,8], index: 2, kind: input, shape index: {}]
  %s3 = inlined_call_operand.vmem [shape: f32[1,8], index: 3, kind: input, shape index: {}]
  %s4 = inlined_call_operand.vmem [shape: bf16[72,8], index: 4, kind: input, shape index: {}]
  %s5 = inlined_call_operand.vmem [shape: f32[1,8], index: 5, kind: input, shape index: {}]
  %s6 = inlined_call_operand.vmem [shape: f32[1,8], index: 6, kind: input, shape index: {}]
  %s7 = inlined_call_operand.vmem [shape: f32[2,256,8], index: 7, kind: output, shape index: {}]
  %s8 = sld [smem:[#allocation0]]
  $region61: #{conv_block_forward.1} parent=0
    _
  %s10 = ssub.s32 1, %s8
  %s11 = scalar_select 0, %s10, %s8
  loop: start=0, step=1, limit=4
  $region2: #{conv_block_forward.1} parent=0 // loop_pre_header
    _
  $region3: #{conv_block_forward.1} parent=0 // loop_header
    %s13 = sphi 0, %s17
    %p14 = scmp.ge.s32.totalorder %s13, 4
    %s23 = sphi 0, %s25
    %s26 = sphi 0, %s23
    %s27 = sphi 0, %s26
    %s43 = sphi 0, %s27
    %s47 = sphi 0, %s47
    %s49 = sphi 0, %s47
    %s50 = sphi 0, %s49
    %s64 = sphi 0, %s50
    %s68 = sphi 0, %s68
    %s70 = sphi 0, %s68
    %s71 = sphi 0, %s70
    %s85 = sphi 0, %s71
    %s89 = sphi 0, %s89
    %s91 = sphi 0, %s89
    %s92 = sphi 0, %s91
    %s106 = sphi 0, %s92
    %s110 = sphi 0, %s110
    %s112 = sphi 0, %s110
    %s113 = sphi 0, %s112
    %s127 = sphi 0, %s113
    %s131 = sphi 0, %s131
    %s133 = sphi 0, %s131
    %s134 = sphi 0, %s133
    %s148 = sphi 0, %s134
    %s152 = sphi 0, %s152
    %s154 = sphi 0, %s152
    %s155 = sphi 0, %s154
    %s169 = sphi 0, %s155
    %s175 = sphi 0, %s177
    %s178 = sphi 0, %s175
    %s179 = sphi 0, %s178
    %s195 = sphi 0, %s179
  $region4: #{conv_block_forward.1} parent=0 // loop_header_branch
    %16 = sbr.rel (%p14) target = $region8
  $region5: #{conv_block_forward.1} parent=0 // loop_body
    %s18 = ssub.s32 %s13, 1
    %s19 = ssub.s32 %s13, 2
    %s20 = sadd.s32 %s13, 1
    %s21 = ssub.s32 %s13, %s20
    %p22 = scmp.eq.s32.totalorder %s21, 0
    %s24 = sadd.s32 %s23, 1
    %s25 = scalar_select %p22, %s23, %s24
    %p28 = pneg %p22
    %p29 = scmp.eq.s32.totalorder %s13, 1
    %p30 = por %p28, %p29
    %p31 = scmp.ne.s32.totalorder %s23, %s26
    %p32 = scmp.eq.s32.totalorder %s13, 0
    %p33 = por %p31, %p32
    %p34 = scmp.ne.s32.totalorder %s23, %s26
    %p35 = scmp.eq.s32.totalorder %s18, 1
    %p36 = por %p34, %p35
    %p37 = scmp.ne.s32.totalorder %s26, %s27
    %p38 = scmp.eq.s32.totalorder %s18, 0
    %p39 = por %p37, %p38
    %p40 = scmp.ne.s32.totalorder %s26, %s27
    %p41 = scmp.eq.s32.totalorder %s19, 1
    %p42 = por %p40, %p41
    %p44 = scmp.ne.s32.totalorder %s27, %s43
    %p45 = scmp.eq.s32.totalorder %s19, 0
    %p46 = por %p44, %p45
    %s48 = sadd.s32 %s47, 1
    %p51 = scmp.eq.s32.totalorder %s13, 1
    %p52 = scmp.ne.s32.totalorder %s47, %s49
    %p53 = scmp.eq.s32.totalorder %s13, 0
    %p54 = por %p52, %p53
    %p55 = scmp.ne.s32.totalorder %s47, %s49
    %p56 = scmp.eq.s32.totalorder %s18, 1
    %p57 = por %p55, %p56
    %p58 = scmp.ne.s32.totalorder %s49, %s50
    %p59 = scmp.eq.s32.totalorder %s18, 0
    %p60 = por %p58, %p59
    %p61 = scmp.ne.s32.totalorder %s49, %s50
    %p62 = scmp.eq.s32.totalorder %s19, 1
    %p63 = por %p61, %p62
    %p65 = scmp.ne.s32.totalorder %s50, %s64
    %p66 = scmp.eq.s32.totalorder %s19, 0
    %p67 = por %p65, %p66
    %s69 = sadd.s32 %s68, 1
    %p72 = scmp.eq.s32.totalorder %s13, 1
    %p73 = scmp.ne.s32.totalorder %s68, %s70
    %p74 = scmp.eq.s32.totalorder %s13, 0
    %p75 = por %p73, %p74
    %p76 = scmp.ne.s32.totalorder %s68, %s70
    %p77 = scmp.eq.s32.totalorder %s18, 1
    %p78 = por %p76, %p77
    %p79 = scmp.ne.s32.totalorder %s70, %s71
    %p80 = scmp.eq.s32.totalorder %s18, 0
    %p81 = por %p79, %p80
    %p82 = scmp.ne.s32.totalorder %s70, %s71
    %p83 = scmp.eq.s32.totalorder %s19, 1
    %p84 = por %p82, %p83
    %p86 = scmp.ne.s32.totalorder %s71, %s85
    %p87 = scmp.eq.s32.totalorder %s19, 0
    %p88 = por %p86, %p87
    %s90 = sadd.s32 %s89, 1
    %p93 = scmp.eq.s32.totalorder %s13, 1
    %p94 = scmp.ne.s32.totalorder %s89, %s91
    %p95 = scmp.eq.s32.totalorder %s13, 0
    %p96 = por %p94, %p95
    %p97 = scmp.ne.s32.totalorder %s89, %s91
    %p98 = scmp.eq.s32.totalorder %s18, 1
    %p99 = por %p97, %p98
    %p100 = scmp.ne.s32.totalorder %s91, %s92
    %p101 = scmp.eq.s32.totalorder %s18, 0
    %p102 = por %p100, %p101
    %p103 = scmp.ne.s32.totalorder %s91, %s92
    %p104 = scmp.eq.s32.totalorder %s19, 1
    %p105 = por %p103, %p104
    %p107 = scmp.ne.s32.totalorder %s92, %s106
    %p108 = scmp.eq.s32.totalorder %s19, 0
    %p109 = por %p107, %p108
    %s111 = sadd.s32 %s110, 1
    %p114 = scmp.eq.s32.totalorder %s13, 1
    %p115 = scmp.ne.s32.totalorder %s110, %s112
    %p116 = scmp.eq.s32.totalorder %s13, 0
    %p117 = por %p115, %p116
    %p118 = scmp.ne.s32.totalorder %s110, %s112
    %p119 = scmp.eq.s32.totalorder %s18, 1
    %p120 = por %p118, %p119
    %p121 = scmp.ne.s32.totalorder %s112, %s113
    %p122 = scmp.eq.s32.totalorder %s18, 0
    %p123 = por %p121, %p122
    %p124 = scmp.ne.s32.totalorder %s112, %s113
    %p125 = scmp.eq.s32.totalorder %s19, 1
    %p126 = por %p124, %p125
    %p128 = scmp.ne.s32.totalorder %s113, %s127
    %p129 = scmp.eq.s32.totalorder %s19, 0
    %p130 = por %p128, %p129
    %s132 = sadd.s32 %s131, 1
    %p135 = scmp.eq.s32.totalorder %s13, 1
    %p136 = scmp.ne.s32.totalorder %s131, %s133
    %p137 = scmp.eq.s32.totalorder %s13, 0
    %p138 = por %p136, %p137
    %p139 = scmp.ne.s32.totalorder %s131, %s133
    %p140 = scmp.eq.s32.totalorder %s18, 1
    %p141 = por %p139, %p140
    %p142 = scmp.ne.s32.totalorder %s133, %s134
    %p143 = scmp.eq.s32.totalorder %s18, 0
    %p144 = por %p142, %p143
    %p145 = scmp.ne.s32.totalorder %s133, %s134
    %p146 = scmp.eq.s32.totalorder %s19, 1
    %p147 = por %p145, %p146
    %p149 = scmp.ne.s32.totalorder %s134, %s148
    %p150 = scmp.eq.s32.totalorder %s19, 0
    %p151 = por %p149, %p150
    %s153 = sadd.s32 %s152, 1
    %p156 = scmp.eq.s32.totalorder %s13, 1
    %p157 = scmp.ne.s32.totalorder %s152, %s154
    %p158 = scmp.eq.s32.totalorder %s13, 0
    %p159 = por %p157, %p158
    %p160 = scmp.ne.s32.totalorder %s152, %s154
    %p161 = scmp.eq.s32.totalorder %s18, 1
    %p162 = por %p160, %p161
    %p163 = scmp.ne.s32.totalorder %s154, %s155
    %p164 = scmp.eq.s32.totalorder %s18, 0
    %p165 = por %p163, %p164
    %p166 = scmp.ne.s32.totalorder %s154, %s155
    %p167 = scmp.eq.s32.totalorder %s19, 1
    %p168 = por %p166, %p167
    %p170 = scmp.ne.s32.totalorder %s155, %s169
    %p171 = scmp.eq.s32.totalorder %s19, 0
    %p172 = por %p170, %p171
    %s173 = ssub.s32 %s13, %s20
    %p174 = scmp.eq.s32.totalorder %s173, 0
    %s176 = sadd.s32 %s175, 1
    %s177 = scalar_select %p174, %s175, %s176
    %p180 = pneg %p174
    %p181 = scmp.eq.s32.totalorder %s13, 1
    %p182 = por %p180, %p181
    %p183 = scmp.ne.s32.totalorder %s175, %s178
    %p184 = scmp.eq.s32.totalorder %s13, 0
    %p185 = por %p183, %p184
    %p186 = scmp.ne.s32.totalorder %s175, %s178
    %p187 = scmp.eq.s32.totalorder %s18, 1
    %p188 = por %p186, %p187
    %p189 = scmp.ne.s32.totalorder %s178, %s179
    %p190 = scmp.eq.s32.totalorder %s18, 0
    %p191 = por %p189, %p190
    %p192 = scmp.ne.s32.totalorder %s178, %s179
    %p193 = scmp.eq.s32.totalorder %s19, 1
    %p194 = por %p192, %p193
    %p196 = scmp.ne.s32.totalorder %s179, %s195
    %p197 = scmp.eq.s32.totalorder %s19, 0
    %p198 = por %p196, %p197
    %p199 = scmp.le.s32.totalorder 1, %s13
    %p200 = scmp.lt.s32.totalorder %s13, 3
    %p201 = pnand %p199, %p200
    %p202 = pneg %p201
    // Predicated region
    $region9: #{conv_block_forward.1} parent=5 // pred_check
      _
    $region10: #{conv_block_forward.1} parent=5 // pred_check_branch
      %204 = sbr.rel (%p201) target = $region12
    $region11: #{conv_block_forward.1} parent=5 // pred_region
      %s205 = ssub.s32 %s13, 1
      // Predicated region
      $region13: #{conv_block_forward.1} parent=11 // pred_check
        %p206 = pneg %p60
      $region14: #{conv_block_forward.1} parent=11 // pred_check_branch
        %208 = sbr.rel (%p206) target = $region16
      $region15: #{conv_block_forward.1} parent=11 // pred_region
        _
      $region16: #{conv_block_forward.1} parent=11 // pred_fallthru
        _
      // Predicated region
      $region17: #{conv_block_forward.1} parent=11 // pred_check
        %p209 = pneg %p81
      $region18: #{conv_block_forward.1} parent=11 // pred_check_branch
        %211 = sbr.rel (%p209) target = $region20
      $region19: #{conv_block_forward.1} parent=11 // pred_region
        _
      $region20: #{conv_block_forward.1} parent=11 // pred_fallthru
        _
      // Predicated region
      $region21: #{conv_block_forward.1} parent=11 // pred_check
        %p212 = pneg %p102
      $region22: #{conv_block_forward.1} parent=11 // pred_check_branch
        %214 = sbr.rel (%p212) target = $region24
      $region23: #{conv_block_forward.1} parent=11 // pred_region
        _
      $region24: #{conv_block_forward.1} parent=11 // pred_fallthru
        _
      // Predicated region
      $region25: #{conv_block_forward.1} parent=11 // pred_check
        %p215 = pneg %p123
      $region26: #{conv_block_forward.1} parent=11 // pred_check_branch
        %217 = sbr.rel (%p215) target = $region28
      $region27: #{conv_block_forward.1} parent=11 // pred_region
        _
      $region28: #{conv_block_forward.1} parent=11 // pred_fallthru
        _
      // Predicated region
      $region29: #{conv_block_forward.1} parent=11 // pred_check
        %p218 = pneg %p144
      $region30: #{conv_block_forward.1} parent=11 // pred_check_branch
        %220 = sbr.rel (%p218) target = $region32
      $region31: #{conv_block_forward.1} parent=11 // pred_region
        _
      $region32: #{conv_block_forward.1} parent=11 // pred_fallthru
        _
      // Predicated region
      $region33: #{conv_block_forward.1} parent=11 // pred_check
        %p221 = pneg %p165
      $region34: #{conv_block_forward.1} parent=11 // pred_check_branch
        %223 = sbr.rel (%p221) target = $region36
      $region35: #{conv_block_forward.1} parent=11 // pred_region
        _
      $region36: #{conv_block_forward.1} parent=11 // pred_fallthru
        _
    $region12: #{conv_block_forward.1} parent=5 // pred_fallthru
      _
    %p224 = scmp.lt.s32.totalorder %s13, 2
    // Predicated region
    $region37: #{conv_block_forward.1} parent=5 // pred_check
      %p225 = pneg %p224
    $region38: #{conv_block_forward.1} parent=5 // pred_check_branch
      %227 = sbr.rel (%p225) target = $region40
    $region39: #{conv_block_forward.1} parent=5 // pred_region
      // Predicated region
      $region41: #{conv_block_forward.1} parent=39 // pred_check
        %p228 = pneg %p33
      $region42: #{conv_block_forward.1} parent=39 // pred_check_branch
        %230 = sbr.rel (%p228) target = $region44
      $region43: #{conv_block_forward.1} parent=39 // pred_region
        %p231 = scmp.lt.s32.totalorder %s13, 1
        %s232 = scalar_select %p231, %s13, 1
        %s233 = smul.addr %s232, 54
        %s234 = smul.addr %s233, 4
        %s235 = scalar_lea.vmem %s0, %s234
      $region44: #{conv_block_forward.1} parent=39 // pred_fallthru
        _
    $region40: #{conv_block_forward.1} parent=5 // pred_fallthru
      _
    %p236 = scmp.le.s32.totalorder 1, %s13
    %p237 = scmp.lt.s32.totalorder %s13, 3
    %p238 = pnand %p236, %p237
    %p239 = pneg %p238
    // Predicated region
    $region45: #{conv_block_forward.1} parent=5 // pred_check
      _
    $region46: #{conv_block_forward.1} parent=5 // pred_check_branch
      %241 = sbr.rel (%p238) target = $region48
    $region47: #{conv_block_forward.1} parent=5 // pred_region
      %s242 = ssub.s32 %s13, 1
      %p243 = scmp.lt.s32.totalorder %s18, 1
      %s244 = scalar_select %p243, %s18, 1
      %s245 = smul.addr %s244, 54
      %s246 = smul.addr %s245, 4
      %s247 = scalar_lea.vmem %s0, %s246
      %p248 = pneg %p39
      %p249 = pneg %p36
      %p250 = pneg %p60
      %p251 = pneg %p57
      %p252 = pneg %p81
      %p253 = pneg %p78
      %p254 = pneg %p102
      %p255 = pneg %p99
      %p256 = pneg %p123
      %p257 = pneg %p120
      %p258 = pneg %p144
      %p259 = pneg %p141
      %p260 = pneg %p165
      %p261 = pneg %p162
      %p262 = pneg %p191
      %p263 = pneg %p188
      %p264 = scmp.lt.s32.totalorder %s18, 1
      %s265 = scalar_select %p264, %s18, 1
      %s266 = smul.addr %s265, 32
      %s267 = smul.addr %s266, 8
      %s268 = scalar_lea.vmem %s7, %s267
      %p269 = scmp.lt.s32.totalorder %s18, 1
      %s270 = scalar_select %p269, %s18, 1
      %s271 = smul.addr %s270, 54
      %s272 = smul.addr %s271, 4
      %s273 = scalar_lea.vmem %s0, %s272
      %p274 = scmp.lt.s32.totalorder %s18, 1
      %s275 = scalar_select %p274, %s18, 1
      %s276 = smul.addr %s275, 32
      %s277 = smul.addr %s276, 8
      %s278 = scalar_lea.vmem %s7, %s277
      %vm280 = vcmask 60416
      %281 = vst.msk [vmem:[#allocation2] sm:$0xf] %vm280, 0
      %282 = vst.msk [vmem:[#allocation2 + $0x4] sm:$0xf] %vm280, 0
      %vm283 = vcmask 57344
      %284 = vst.msk [vmem:[#allocation2 + $0x8] sm:$0x1] %vm283, 0
      %s285 = scalar_lea.vmem [#allocation2], 204
      %286 = vst.msk [vmem:[%s285] sm:$0xf] %vm280, 0
      %287 = vst.msk [vmem:[%s285 + $0x4] sm:$0xf] %vm280, 0
      %288 = vst.msk [vmem:[%s285 + $0x8] sm:$0x1] %vm283, 0
      %s289 = scalar_lea.vmem [#allocation2], 12
      %vm290 = vcmask 57344
      %vm291 = vsmask.f32 256
      %vm292 = vmand %vm290, %vm291
      %v293 = vld [vmem:[%s289] sm:$0x1]
      %v294 = vsel %vm292, 0, %v293
      %295 = vst [vmem:[%s289] sm:$0x1] %v294
      %v296 = vld [vmem:[%s289 + $0xc] sm:$0x1]
      %v297 = vsel %vm292, 0, %v296
      %298 = vst [vmem:[%s289 + $0xc] sm:$0x1] %v297
      %v299 = vld [vmem:[%s289 + $0x18] sm:$0x1]
      %v300 = vsel %vm292, 0, %v299
      %301 = vst [vmem:[%s289 + $0x18] sm:$0x1] %v300
      %v302 = vld [vmem:[%s289 + $0x24] sm:$0x1]
      %v303 = vsel %vm292, 0, %v302
      %304 = vst [vmem:[%s289 + $0x24] sm:$0x1] %v303
      %v305 = vld [vmem:[%s289 + $0x30] sm:$0x1]
      %v306 = vsel %vm292, 0, %v305
      %307 = vst [vmem:[%s289 + $0x30] sm:$0x1] %v306
      %v308 = vld [vmem:[%s289 + $0x3c] sm:$0x1]
      %v309 = vsel %vm292, 0, %v308
      %310 = vst [vmem:[%s289 + $0x3c] sm:$0x1] %v309
      %v311 = vld [vmem:[%s289 + $0x48] sm:$0x1]
      %v312 = vsel %vm292, 0, %v311
      %313 = vst [vmem:[%s289 + $0x48] sm:$0x1] %v312
      %v314 = vld [vmem:[%s289 + $0x54] sm:$0x1]
      %v315 = vsel %vm292, 0, %v314
      %316 = vst [vmem:[%s289 + $0x54] sm:$0x1] %v315
      %v317 = vld [vmem:[%s289 + $0x60] sm:$0x1]
      %v318 = vsel %vm292, 0, %v317
      %319 = vst [vmem:[%s289 + $0x60] sm:$0x1] %v318
      %v320 = vld [vmem:[%s289 + $0x6c] sm:$0x1]
      %v321 = vsel %vm292, 0, %v320
      %322 = vst [vmem:[%s289 + $0x6c] sm:$0x1] %v321
      %v323 = vld [vmem:[%s289 + $0x78] sm:$0x1]
      %v324 = vsel %vm292, 0, %v323
      %325 = vst [vmem:[%s289 + $0x78] sm:$0x1] %v324
      %v326 = vld [vmem:[%s289 + $0x84] sm:$0x1]
      %v327 = vsel %vm292, 0, %v326
      %328 = vst [vmem:[%s289 + $0x84] sm:$0x1] %v327
      %v329 = vld [vmem:[%s289 + $0x90] sm:$0x1]
      %v330 = vsel %vm292, 0, %v329
      %331 = vst [vmem:[%s289 + $0x90] sm:$0x1] %v330
      %v332 = vld [vmem:[%s289 + $0x9c] sm:$0x1]
      %v333 = vsel %vm292, 0, %v332
      %334 = vst [vmem:[%s289 + $0x9c] sm:$0x1] %v333
      %v335 = vld [vmem:[%s289 + $0xa8] sm:$0x1]
      %v336 = vsel %vm292, 0, %v335
      %337 = vst [vmem:[%s289 + $0xa8] sm:$0x1] %v336
      %v338 = vld [vmem:[%s289 + $0xb4] sm:$0x1]
      %v339 = vsel %vm292, 0, %v338
      %340 = vst [vmem:[%s289 + $0xb4] sm:$0x1] %v339
      %vm341 = vsmask.f32 7938
      %vm342 = vmand %vm290, %vm341
      %v343 = vld [vmem:[%s289 + $0x8] sm:$0x1]
      %v344 = vsel %vm342, 0, %v343
      %345 = vst [vmem:[%s289 + $0x8] sm:$0x1] %v344
      %v346 = vld [vmem:[%s289 + $0x14] sm:$0x1]
      %v347 = vsel %vm342, 0, %v346
      %348 = vst [vmem:[%s289 + $0x14] sm:$0x1] %v347
      %v349 = vld [vmem:[%s289 + $0x20] sm:$0x1]
      %v350 = vsel %vm342, 0, %v349
      %351 = vst [vmem:[%s289 + $0x20] sm:$0x1] %v350
      %v352 = vld [vmem:[%s289 + $0x2c] sm:$0x1]
      %v353 = vsel %vm342, 0, %v352
      %354 = vst [vmem:[%s289 + $0x2c] sm:$0x1] %v353
      %v355 = vld [vmem:[%s289 + $0x38] sm:$0x1]
      %v356 = vsel %vm342, 0, %v355
      %357 = vst [vmem:[%s289 + $0x38] sm:$0x1] %v356
      %v358 = vld [vmem:[%s289 + $0x44] sm:$0x1]
      %v359 = vsel %vm342, 0, %v358
      %360 = vst [vmem:[%s289 + $0x44] sm:$0x1] %v359
      %v361 = vld [vmem:[%s289 + $0x50] sm:$0x1]
      %v362 = vsel %vm342, 0, %v361
      %363 = vst [vmem:[%s289 + $0x50] sm:$0x1] %v362
      %v364 = vld [vmem:[%s289 + $0x5c] sm:$0x1]
      %v365 = vsel %vm342, 0, %v364
      %366 = vst [vmem:[%s289 + $0x5c] sm:$0x1] %v365
      %v367 = vld [vmem:[%s289 + $0x68] sm:$0x1]
      %v368 = vsel %vm342, 0, %v367
      %369 = vst [vmem:[%s289 + $0x68] sm:$0x1] %v368
      %v370 = vld [vmem:[%s289 + $0x74] sm:$0x1]
      %v371 = vsel %vm342, 0, %v370
      %372 = vst [vmem:[%s289 + $0x74] sm:$0x1] %v371
      %v373 = vld [vmem:[%s289 + $0x80] sm:$0x1]
      %v374 = vsel %vm342, 0, %v373
      %375 = vst [vmem:[%s289 + $0x80] sm:$0x1] %v374
      %v376 = vld [vmem:[%s289 + $0x8c] sm:$0x1]
      %v377 = vsel %vm342, 0, %v376
      %378 = vst [vmem:[%s289 + $0x8c] sm:$0x1] %v377
      %v379 = vld [vmem:[%s289 + $0x98] sm:$0x1]
      %v380 = vsel %vm342, 0, %v379
      %381 = vst [vmem:[%s289 + $0x98] sm:$0x1] %v380
      %v382 = vld [vmem:[%s289 + $0xa4] sm:$0x1]
      %v383 = vsel %vm342, 0, %v382
      %384 = vst [vmem:[%s289 + $0xa4] sm:$0x1] %v383
      %v385 = vld [vmem:[%s289 + $0xb0] sm:$0x1]
      %v386 = vsel %vm342, 0, %v385
      %387 = vst [vmem:[%s289 + $0xb0] sm:$0x1] %v386
      %v388 = vld [vmem:[%s289 + $0xbc] sm:$0x1]
      %v389 = vsel %vm342, 0, %v388
      %390 = vst [vmem:[%s289 + $0xbc] sm:$0x1] %v389
      %v391 = vld [vmem:[%s273] sm:$0xf]
      %v392 = vld [vmem:[%s273 + $0x4] sm:$0xf]
      %v393 = vld [vmem:[%s273 + $0xc] sm:$0xf]
      %v394 = vld [vmem:[%s273 + $0x10] sm:$0xf]
      %v395 = vld [vmem:[%s273 + $0x18] sm:$0xf]
      %v396 = vld [vmem:[%s273 + $0x1c] sm:$0xf]
      %v397 = vld [vmem:[%s273 + $0x24] sm:$0xf]
      %v398 = vld [vmem:[%s273 + $0x28] sm:$0xf]
      %v399 = vld [vmem:[%s273 + $0x30] sm:$0xf]
      %v400 = vld [vmem:[%s273 + $0x34] sm:$0xf]
      %v401 = vld [vmem:[%s273 + $0x3c] sm:$0xf]
      %v402 = vld [vmem:[%s273 + $0x40] sm:$0xf]
      %v403 = vld [vmem:[%s273 + $0x48] sm:$0xf]
      %v404 = vld [vmem:[%s273 + $0x4c] sm:$0xf]
      %v405 = vld [vmem:[%s273 + $0x54] sm:$0xf]
      %v406 = vld [vmem:[%s273 + $0x58] sm:$0xf]
      %v407 = vld [vmem:[%s273 + $0x60] sm:$0xf]
      %v408 = vld [vmem:[%s273 + $0x64] sm:$0xf]
      %v409 = vld [vmem:[%s273 + $0x6c] sm:$0xf]
      %v410 = vld [vmem:[%s273 + $0x70] sm:$0xf]
      %v411 = vld [vmem:[%s273 + $0x78] sm:$0xf]
      %v412 = vld [vmem:[%s273 + $0x7c] sm:$0xf]
      %v413 = vld [vmem:[%s273 + $0x84] sm:$0xf]
      %v414 = vld [vmem:[%s273 + $0x88] sm:$0xf]
      %v415 = vld [vmem:[%s273 + $0x90] sm:$0xf]
      %v416 = vld [vmem:[%s273 + $0x94] sm:$0xf]
      %v417 = vld [vmem:[%s273 + $0x9c] sm:$0xf]
      %v418 = vld [vmem:[%s273 + $0xa0] sm:$0xf]
      %v419 = vld [vmem:[%s273 + $0xa8] sm:$0xf]
      %v420 = vld [vmem:[%s273 + $0xac] sm:$0xf]
      %v421 = vld [vmem:[%s273 + $0xb4] sm:$0xf]
      %v422 = vld [vmem:[%s273 + $0xb8] sm:$0xf]
      %v423 = vld [vmem:[%s273 + $0x8] sm:$0x1]
      %v424 = vld [vmem:[%s273 + $0x14] sm:$0x1]
      %v425 = vld [vmem:[%s273 + $0x20] sm:$0x1]
      %v426 = vld [vmem:[%s273 + $0x2c] sm:$0x1]
      %v427 = vld [vmem:[%s273 + $0x38] sm:$0x1]
      %v428 = vld [vmem:[%s273 + $0x44] sm:$0x1]
      %v429 = vld [vmem:[%s273 + $0x50] sm:$0x1]
      %v430 = vld [vmem:[%s273 + $0x5c] sm:$0x1]
      %v431 = vld [vmem:[%s273 + $0x68] sm:$0x1]
      %v432 = vld [vmem:[%s273 + $0x74] sm:$0x1]
      %v433 = vld [vmem:[%s273 + $0x80] sm:$0x1]
      %v434 = vld [vmem:[%s273 + $0x8c] sm:$0x1]
      %v435 = vld [vmem:[%s273 + $0x98] sm:$0x1]
      %v436 = vld [vmem:[%s273 + $0xa4] sm:$0x1]
      %v437 = vld [vmem:[%s273 + $0xb0] sm:$0x1]
      %v438 = vld [vmem:[%s273 + $0xbc] sm:$0x1]
      %vm439 = vsmask.f32 3328
      %vm440 = vsmask.f32 7440
      %vm441 = vmor %vm439, %vm440
      %v443 = vshrl.u32 %v391, 16
      %v445 = vrot.slane %v443, 4
      %v446 = vshll.u32 %v391, 16
      %v448 = vrot.slane %v446, 5
      %v449 = vor.u32 %v445, %v448
      %v450 = vrot.slane %v449, 4
      %v452 = vshll.u32 %v392, 16
      %v454 = vrot.slane %v452, 5
      %v455 = vsel %vm441, %v450, %v454
      %v456 = vshrl.u32 %v392, 16
      %v458 = vrot.slane %v456, 4
      %v459 = vor.u32 %v458, %v454
      %v460 = vrot.slane %v459, 4
      %v462 = vshll.u32 %v423, 16
      %v464 = vrot.slane %v462, 5
      %v465 = vsel %vm441, %v460, %v464
      %v467 = vshrl.u32 %v393, 16
      %v469 = vrot.slane %v467, 4
      %v470 = vshll.u32 %v393, 16
      %v472 = vrot.slane %v470, 5
      %v473 = vor.u32 %v469, %v472
      %v474 = vrot.slane %v473, 4
      %v476 = vshll.u32 %v394, 16
      %v478 = vrot.slane %v476, 5
      %v479 = vsel %vm441, %v474, %v478
      %v480 = vshrl.u32 %v394, 16
      %v482 = vrot.slane %v480, 4
      %v483 = vor.u32 %v482, %v478
      %v484 = vrot.slane %v483, 4
      %v486 = vshll.u32 %v424, 16
      %v488 = vrot.slane %v486, 5
      %v489 = vsel %vm441, %v484, %v488
      %v491 = vshrl.u32 %v395, 16
      %v493 = vrot.slane %v491, 4
      %v494 = vshll.u32 %v395, 16
      %v496 = vrot.slane %v494, 5
      %v497 = vor.u32 %v493, %v496
      %v498 = vrot.slane %v497, 4
      %v500 = vshll.u32 %v396, 16
      %v502 = vrot.slane %v500, 5
      %v503 = vsel %vm441, %v498, %v502
      %v504 = vshrl.u32 %v396, 16
      %v506 = vrot.slane %v504, 4
      %v507 = vor.u32 %v506, %v502
      %v508 = vrot.slane %v507, 4
      %v510 = vshll.u32 %v425, 16
      %v512 = vrot.slane %v510, 5
      %v513 = vsel %vm441, %v508, %v512
      %v515 = vshrl.u32 %v397, 16
      %v517 = vrot.slane %v515, 4
      %v518 = vshll.u32 %v397, 16
      %v520 = vrot.slane %v518, 5
      %v521 = vor.u32 %v517, %v520
      %v522 = vrot.slane %v521, 4
      %v524 = vshll.u32 %v398, 16
      %v526 = vrot.slane %v524, 5
      %v527 = vsel %vm441, %v522, %v526
      %v528 = vshrl.u32 %v398, 16
      %v530 = vrot.slane %v528, 4
      %v531 = vor.u32 %v530, %v526
      %v532 = vrot.slane %v531, 4
      %v534 = vshll.u32 %v426, 16
      %v536 = vrot.slane %v534, 5
      %v537 = vsel %vm441, %v532, %v536
      %v539 = vshrl.u32 %v399, 16
      %v541 = vrot.slane %v539, 4
      %v542 = vshll.u32 %v399, 16
      %v544 = vrot.slane %v542, 5
      %v545 = vor.u32 %v541, %v544
      %v546 = vrot.slane %v545, 4
      %v548 = vshll.u32 %v400, 16
      %v550 = vrot.slane %v548, 5
      %v551 = vsel %vm441, %v546, %v550
      %v552 = vshrl.u32 %v400, 16
      %v554 = vrot.slane %v552, 4
      %v555 = vor.u32 %v554, %v550
      %v556 = vrot.slane %v555, 4
      %v558 = vshll.u32 %v427, 16
      %v560 = vrot.slane %v558, 5
      %v561 = vsel %vm441, %v556, %v560
      %v563 = vshrl.u32 %v401, 16
      %v565 = vrot.slane %v563, 4
      %v566 = vshll.u32 %v401, 16
      %v568 = vrot.slane %v566, 5
      %v569 = vor.u32 %v565, %v568
      %v570 = vrot.slane %v569, 4
      %v572 = vshll.u32 %v402, 16
      %v574 = vrot.slane %v572, 5
      %v575 = vsel %vm441, %v570, %v574
      %v576 = vshrl.u32 %v402, 16
      %v578 = vrot.slane %v576, 4
      %v579 = vor.u32 %v578, %v574
      %v580 = vrot.slane %v579, 4
      %v582 = vshll.u32 %v428, 16
      %v584 = vrot.slane %v582, 5
      %v585 = vsel %vm441, %v580, %v584
      %v587 = vshrl.u32 %v403, 16
      %v589 = vrot.slane %v587, 4
      %v590 = vshll.u32 %v403, 16
      %v592 = vrot.slane %v590, 5
      %v593 = vor.u32 %v589, %v592
      %v594 = vrot.slane %v593, 4
      %v596 = vshll.u32 %v404, 16
      %v598 = vrot.slane %v596, 5
      %v599 = vsel %vm441, %v594, %v598
      %v600 = vshrl.u32 %v404, 16
      %v602 = vrot.slane %v600, 4
      %v603 = vor.u32 %v602, %v598
      %v604 = vrot.slane %v603, 4
      %v606 = vshll.u32 %v429, 16
      %v608 = vrot.slane %v606, 5
      %v609 = vsel %vm441, %v604, %v608
      %v611 = vshrl.u32 %v405, 16
      %v613 = vrot.slane %v611, 4
      %v614 = vshll.u32 %v405, 16
      %v616 = vrot.slane %v614, 5
      %v617 = vor.u32 %v613, %v616
      %v618 = vrot.slane %v617, 4
      %v620 = vshll.u32 %v406, 16
      %v622 = vrot.slane %v620, 5
      %v623 = vsel %vm441, %v618, %v622
      %v624 = vshrl.u32 %v406, 16
      %v626 = vrot.slane %v624, 4
      %v627 = vor.u32 %v626, %v622
      %v628 = vrot.slane %v627, 4
      %v630 = vshll.u32 %v430, 16
      %v632 = vrot.slane %v630, 5
      %v633 = vsel %vm441, %v628, %v632
      %v635 = vshrl.u32 %v407, 16
      %v637 = vrot.slane %v635, 4
      %v638 = vshll.u32 %v407, 16
      %v640 = vrot.slane %v638, 5
      %v641 = vor.u32 %v637, %v640
      %v642 = vrot.slane %v641, 4
      %v644 = vshll.u32 %v408, 16
      %v646 = vrot.slane %v644, 5
      %v647 = vsel %vm441, %v642, %v646
      %v648 = vshrl.u32 %v408, 16
      %v650 = vrot.slane %v648, 4
      %v651 = vor.u32 %v650, %v646
      %v652 = vrot.slane %v651, 4
      %v654 = vshll.u32 %v431, 16
      %v656 = vrot.slane %v654, 5
      %v657 = vsel %vm441, %v652, %v656
      %v659 = vshrl.u32 %v409, 16
      %v661 = vrot.slane %v659, 4
      %v662 = vshll.u32 %v409, 16
      %v664 = vrot.slane %v662, 5
      %v665 = vor.u32 %v661, %v664
      %v666 = vrot.slane %v665, 4
      %v668 = vshll.u32 %v410, 16
      %v670 = vrot.slane %v668, 5
      %v671 = vsel %vm441, %v666, %v670
      %v672 = vshrl.u32 %v410, 16
      %v674 = vrot.slane %v672, 4
      %v675 = vor.u32 %v674, %v670
      %v676 = vrot.slane %v675, 4
      %v678 = vshll.u32 %v432, 16
      %v680 = vrot.slane %v678, 5
      %v681 = vsel %vm441, %v676, %v680
      %v683 = vshrl.u32 %v411, 16
      %v685 = vrot.slane %v683, 4
      %v686 = vshll.u32 %v411, 16
      %v688 = vrot.slane %v686, 5
      %v689 = vor.u32 %v685, %v688
      %v690 = vrot.slane %v689, 4
      %v692 = vshll.u32 %v412, 16
      %v694 = vrot.slane %v692, 5
      %v695 = vsel %vm441, %v690, %v694
      %v696 = vshrl.u32 %v412, 16
      %v698 = vrot.slane %v696, 4
      %v699 = vor.u32 %v698, %v694
      %v700 = vrot.slane %v699, 4
      %v702 = vshll.u32 %v433, 16
      %v704 = vrot.slane %v702, 5
      %v705 = vsel %vm441, %v700, %v704
      %v707 = vshrl.u32 %v413, 16
      %v709 = vrot.slane %v707, 4
      %v710 = vshll.u32 %v413, 16
      %v712 = vrot.slane %v710, 5
      %v713 = vor.u32 %v709, %v712
      %v714 = vrot.slane %v713, 4
      %v716 = vshll.u32 %v414, 16
      %v718 = vrot.slane %v716, 5
      %v719 = vsel %vm441, %v714, %v718
      %v720 = vshrl.u32 %v414, 16
      %v722 = vrot.slane %v720, 4
      %v723 = vor.u32 %v722, %v718
      %v724 = vrot.slane %v723, 4
      %v726 = vshll.u32 %v434, 16
      %v728 = vrot.slane %v726, 5
      %v729 = vsel %vm441, %v724, %v728
      %v731 = vshrl.u32 %v415, 16
      %v733 = vrot.slane %v731, 4
      %v734 = vshll.u32 %v415, 16
      %v736 = vrot.slane %v734, 5
      %v737 = vor.u32 %v733, %v736
      %v738 = vrot.slane %v737, 4
      %v740 = vshll.u32 %v416, 16
      %v742 = vrot.slane %v740, 5
      %v743 = vsel %vm441, %v738, %v742
      %v744 = vshrl.u32 %v416, 16
      %v746 = vrot.slane %v744, 4
      %v747 = vor.u32 %v746, %v742
      %v748 = vrot.slane %v747, 4
      %v750 = vshll.u32 %v435, 16
      %v752 = vrot.slane %v750, 5
      %v753 = vsel %vm441, %v748, %v752
      %v755 = vshrl.u32 %v417, 16
      %v757 = vrot.slane %v755, 4
      %v758 = vshll.u32 %v417, 16
      %v760 = vrot.slane %v758, 5
      %v761 = vor.u32 %v757, %v760
      %v762 = vrot.slane %v761, 4
      %v764 = vshll.u32 %v418, 16
      %v766 = vrot.slane %v764, 5
      %v767 = vsel %vm441, %v762, %v766
      %v768 = vshrl.u32 %v418, 16
      %v770 = vrot.slane %v768, 4
      %v771 = vor.u32 %v770, %v766
      %v772 = vrot.slane %v771, 4
      %v774 = vshll.u32 %v436, 16
      %v776 = vrot.slane %v774, 5
      %v777 = vsel %vm441, %v772, %v776
      %v779 = vshrl.u32 %v419, 16
      %v781 = vrot.slane %v779, 4
      %v782 = vshll.u32 %v419, 16
      %v784 = vrot.slane %v782, 5
      %v785 = vor.u32 %v781, %v784
      %v786 = vrot.slane %v785, 4
      %v788 = vshll.u32 %v420, 16
      %v790 = vrot.slane %v788, 5
      %v791 = vsel %vm441, %v786, %v790
      %v792 = vshrl.u32 %v420, 16
      %v794 = vrot.slane %v792, 4
      %v795 = vor.u32 %v794, %v790
      %v796 = vrot.slane %v795, 4
      %v798 = vshll.u32 %v437, 16
      %v800 = vrot.slane %v798, 5
      %v801 = vsel %vm441, %v796, %v800
      %v803 = vshrl.u32 %v421, 16
      %v805 = vrot.slane %v803, 4
      %v806 = vshll.u32 %v421, 16
      %v808 = vrot.slane %v806, 5
      %v809 = vor.u32 %v805, %v808
      %v810 = vrot.slane %v809, 4
      %v812 = vshll.u32 %v422, 16
      %v814 = vrot.slane %v812, 5
      %v815 = vsel %vm441, %v810, %v814
      %v816 = vshrl.u32 %v422, 16
      %v818 = vrot.slane %v816, 4
      %v819 = vor.u32 %v818, %v814
      %v820 = vrot.slane %v819, 4
      %v822 = vshll.u32 %v438, 16
      %v824 = vrot.slane %v822, 5
      %v825 = vsel %vm441, %v820, %v824
      %v826 = vld [vmem:[%s273] sm:$0xe]
      %v827 = vld [vmem:[%s273 + $0xc] sm:$0xe]
      %v828 = vld [vmem:[%s273 + $0x18] sm:$0xe]
      %v829 = vld [vmem:[%s273 + $0x24] sm:$0xe]
      %v830 = vld [vmem:[%s273 + $0x30] sm:$0xe]
      %v831 = vld [vmem:[%s273 + $0x3c] sm:$0xe]
      %v832 = vld [vmem:[%s273 + $0x48] sm:$0xe]
      %v833 = vld [vmem:[%s273 + $0x54] sm:$0xe]
      %v834 = vld [vmem:[%s273 + $0x60] sm:$0xe]
      %v835 = vld [vmem:[%s273 + $0x6c] sm:$0xe]
      %v836 = vld [vmem:[%s273 + $0x78] sm:$0xe]
      %v837 = vld [vmem:[%s273 + $0x84] sm:$0xe]
      %v838 = vld [vmem:[%s273 + $0x90] sm:$0xe]
      %v839 = vld [vmem:[%s273 + $0x9c] sm:$0xe]
      %v840 = vld [vmem:[%s273 + $0xa8] sm:$0xe]
      %v841 = vld [vmem:[%s273 + $0xb4] sm:$0xe]
      %vm890 = vcmask 1042432
      %vm891 = vcmask 1046532
      %vm892 = vmor %vm890, %vm891
      %v893 = vrot.slane %v826, 5
      %v894 = vrot.slane %v893, 4
      %v895 = vrot.slane %v392, 5
      %v896 = vsel %vm892, %v894, %v895
      %v897 = vrot.slane %v895, 4
      %v898 = vrot.slane %v423, 5
      %v899 = vsel %vm892, %v897, %v898
      %v900 = vrot.slane %v827, 5
      %v901 = vrot.slane %v900, 4
      %v902 = vrot.slane %v394, 5
      %v903 = vsel %vm892, %v901, %v902
      %v904 = vrot.slane %v902, 4
      %v905 = vrot.slane %v424, 5
      %v906 = vsel %vm892, %v904, %v905
      %v907 = vrot.slane %v828, 5
      %v908 = vrot.slane %v907, 4
      %v909 = vrot.slane %v396, 5
      %v910 = vsel %vm892, %v908, %v909
      %v911 = vrot.slane %v909, 4
      %v912 = vrot.slane %v425, 5
      %v913 = vsel %vm892, %v911, %v912
      %v914 = vrot.slane %v829, 5
      %v915 = vrot.slane %v914, 4
      %v916 = vrot.slane %v398, 5
      %v917 = vsel %vm892, %v915, %v916
      %v918 = vrot.slane %v916, 4
      %v919 = vrot.slane %v426, 5
      %v920 = vsel %vm892, %v918, %v919
      %v921 = vrot.slane %v830, 5
      %v922 = vrot.slane %v921, 4
      %v923 = vrot.slane %v400, 5
      %v924 = vsel %vm892, %v922, %v923
      %v925 = vrot.slane %v923, 4
      %v926 = vrot.slane %v427, 5
      %v927 = vsel %vm892, %v925, %v926
      %v928 = vrot.slane %v831, 5
      %v929 = vrot.slane %v928, 4
      %v930 = vrot.slane %v402, 5
      %v931 = vsel %vm892, %v929, %v930
      %v932 = vrot.slane %v930, 4
      %v933 = vrot.slane %v428, 5
      %v934 = vsel %vm892, %v932, %v933
      %v935 = vrot.slane %v832, 5
      %v936 = vrot.slane %v935, 4
      %v937 = vrot.slane %v404, 5
      %v938 = vsel %vm892, %v936, %v937
      %v939 = vrot.slane %v937, 4
      %v940 = vrot.slane %v429, 5
      %v941 = vsel %vm892, %v939, %v940
      %v942 = vrot.slane %v833, 5
      %v943 = vrot.slane %v942, 4
      %v944 = vrot.slane %v406, 5
      %v945 = vsel %vm892, %v943, %v944
      %v946 = vrot.slane %v944, 4
      %v947 = vrot.slane %v430, 5
      %v948 = vsel %vm892, %v946, %v947
      %v949 = vrot.slane %v834, 5
      %v950 = vrot.slane %v949, 4
      %v951 = vrot.slane %v408, 5
      %v952 = vsel %vm892, %v950, %v951
      %v953 = vrot.slane %v951, 4
      %v954 = vrot.slane %v431, 5
      %v955 = vsel %vm892, %v953, %v954
      %v956 = vrot.slane %v835, 5
      %v957 = vrot.slane %v956, 4
      %v958 = vrot.slane %v410, 5
      %v959 = vsel %vm892, %v957, %v958
      %v960 = vrot.slane %v958, 4
      %v961 = vrot.slane %v432, 5
      %v962 = vsel %vm892, %v960, %v961
      %v963 = vrot.slane %v836, 5
      %v964 = vrot.slane %v963, 4
      %v965 = vrot.slane %v412, 5
      %v966 = vsel %vm892, %v964, %v965
      %v967 = vrot.slane %v965, 4
      %v968 = vrot.slane %v433, 5
      %v969 = vsel %vm892, %v967, %v968
      %v970 = vrot.slane %v837, 5
      %v971 = vrot.slane %v970, 4
      %v972 = vrot.slane %v414, 5
      %v973 = vsel %vm892, %v971, %v972
      %v974 = vrot.slane %v972, 4
      %v975 = vrot.slane %v434, 5
      %v976 = vsel %vm892, %v974, %v975
      %v977 = vrot.slane %v838, 5
      %v978 = vrot.slane %v977, 4
      %v979 = vrot.slane %v416, 5
      %v980 = vsel %vm892, %v978, %v979
      %v981 = vrot.slane %v979, 4
      %v982 = vrot.slane %v435, 5
      %v983 = vsel %vm892, %v981, %v982
      %v984 = vrot.slane %v839, 5
      %v985 = vrot.slane %v984, 4
      %v986 = vrot.slane %v418, 5
      %v987 = vsel %vm892, %v985, %v986
      %v988 = vrot.slane %v986, 4
      %v989 = vrot.slane %v436, 5
      %v990 = vsel %vm892, %v988, %v989
      %v991 = vrot.slane %v840, 5
      %v992 = vrot.slane %v991, 4
      %v993 = vrot.slane %v420, 5
      %v994 = vsel %vm892, %v992, %v993
      %v995 = vrot.slane %v993, 4
      %v996 = vrot.slane %v437, 5
      %v997 = vsel %vm892, %v995, %v996
      %v998 = vrot.slane %v841, 5
      %v999 = vrot.slane %v998, 4
      %v1000 = vrot.slane %v422, 5
      %v1001 = vsel %vm892, %v999, %v1000
      %v1002 = vrot.slane %v1000, 4
      %v1003 = vrot.slane %v438, 5
      %v1004 = vsel %vm892, %v1002, %v1003
      %s1005 = scalar_lea.vmem %s273, 12
      %v1006 = vld [vmem:[%s1005] sm:$0xf]
      %v1007 = vld [vmem:[%s1005 + $0x4] sm:$0xf]
      %v1008 = vld [vmem:[%s1005 + $0xc] sm:$0xf]
      %v1009 = vld [vmem:[%s1005 + $0x10] sm:$0xf]
      %v1010 = vld [vmem:[%s1005 + $0x18] sm:$0xf]
      %v1011 = vld [vmem:[%s1005 + $0x1c] sm:$0xf]
      %v1012 = vld [vmem:[%s1005 + $0x24] sm:$0xf]
      %v1013 = vld [vmem:[%s1005 + $0x28] sm:$0xf]
      %v1014 = vld [vmem:[%s1005 + $0x30] sm:$0xf]
      %v1015 = vld [vmem:[%s1005 + $0x34] sm:$0xf]
      %v1016 = vld [vmem:[%s1005 + $0x3c] sm:$0xf]
      %v1017 = vld [vmem:[%s1005 + $0x40] sm:$0xf]
      %v1018 = vld [vmem:[%s1005 + $0x48] sm:$0xf]
      %v1019 = vld [vmem:[%s1005 + $0x4c] sm:$0xf]
      %v1020 = vld [vmem:[%s1005 + $0x54] sm:$0xf]
      %v1021 = vld [vmem:[%s1005 + $0x58] sm:$0xf]
      %v1022 = vld [vmem:[%s1005 + $0x60] sm:$0xf]
      %v1023 = vld [vmem:[%s1005 + $0x64] sm:$0xf]
      %v1024 = vld [vmem:[%s1005 + $0x6c] sm:$0xf]
      %v1025 = vld [vmem:[%s1005 + $0x70] sm:$0xf]
      %v1026 = vld [vmem:[%s1005 + $0x78] sm:$0xf]
      %v1027 = vld [vmem:[%s1005 + $0x7c] sm:$0xf]
      %v1028 = vld [vmem:[%s1005 + $0x84] sm:$0xf]
      %v1029 = vld [vmem:[%s1005 + $0x88] sm:$0xf]
      %v1030 = vld [vmem:[%s1005 + $0x90] sm:$0xf]
      %v1031 = vld [vmem:[%s1005 + $0x94] sm:$0xf]
      %v1032 = vld [vmem:[%s1005 + $0x9c] sm:$0xf]
      %v1033 = vld [vmem:[%s1005 + $0xa0] sm:$0xf]
      %v1034 = vld [vmem:[%s1005 + $0xa8] sm:$0xf]
      %v1035 = vld [vmem:[%s1005 + $0xac] sm:$0xf]
      %v1036 = vld [vmem:[%s1005 + $0xb4] sm:$0xf]
      %v1037 = vld [vmem:[%s1005 + $0xb8] sm:$0xf]
      %v1038 = vld [vmem:[%s1005 + $0x8] sm:$0x1]
      %v1039 = vld [vmem:[%s1005 + $0x14] sm:$0x1]
      %v1040 = vld [vmem:[%s1005 + $0x20] sm:$0x1]
      %v1041 = vld [vmem:[%s1005 + $0x2c] sm:$0x1]
      %v1042 = vld [vmem:[%s1005 + $0x38] sm:$0x1]
      %v1043 = vld [vmem:[%s1005 + $0x44] sm:$0x1]
      %v1044 = vld [vmem:[%s1005 + $0x50] sm:$0x1]
      %v1045 = vld [vmem:[%s1005 + $0x5c] sm:$0x1]
      %v1046 = vld [vmem:[%s1005 + $0x68] sm:$0x1]
      %v1047 = vld [vmem:[%s1005 + $0x74] sm:$0x1]
      %v1048 = vld [vmem:[%s1005 + $0x80] sm:$0x1]
      %v1049 = vld [vmem:[%s1005 + $0x8c] sm:$0x1]
      %v1050 = vld [vmem:[%s1005 + $0x98] sm:$0x1]
      %v1051 = vld [vmem:[%s1005 + $0xa4] sm:$0x1]
      %v1052 = vld [vmem:[%s1005 + $0xb0] sm:$0x1]
      %v1053 = vld [vmem:[%s1005 + $0xbc] sm:$0x1]
      %v1055 = vshrl.u32 %v1006, 16
      %v1057 = vrot.slane %v1055, 4
      %v1058 = vshll.u32 %v1006, 16
      %v1060 = vrot.slane %v1058, 5
      %v1061 = vor.u32 %v1057, %v1060
      %v1062 = vrot.slane %v1061, 4
      %v1064 = vshll.u32 %v1007, 16
      %v1066 = vrot.slane %v1064, 5
      %v1067 = vsel %vm441, %v1062, %v1066
      %v1068 = vshrl.u32 %v1007, 16
      %v1070 = vrot.slane %v1068, 4
      %v1071 = vor.u32 %v1070, %v1066
      %v1072 = vrot.slane %v1071, 4
      %v1074 = vshll.u32 %v1038, 16
      %v1076 = vrot.slane %v1074, 5
      %v1077 = vsel %vm441, %v1072, %v1076
      %v1079 = vshrl.u32 %v1008, 16
      %v1081 = vrot.slane %v1079, 4
      %v1082 = vshll.u32 %v1008, 16
      %v1084 = vrot.slane %v1082, 5
      %v1085 = vor.u32 %v1081, %v1084
      %v1086 = vrot.slane %v1085, 4
      %v1088 = vshll.u32 %v1009, 16
      %v1090 = vrot.slane %v1088, 5
      %v1091 = vsel %vm441, %v1086, %v1090
      %v1092 = vshrl.u32 %v1009, 16
      %v1094 = vrot.slane %v1092, 4
      %v1095 = vor.u32 %v1094, %v1090
      %v1096 = vrot.slane %v1095, 4
      %v1098 = vshll.u32 %v1039, 16
      %v1100 = vrot.slane %v1098, 5
      %v1101 = vsel %vm441, %v1096, %v1100
      %v1103 = vshrl.u32 %v1010, 16
      %v1105 = vrot.slane %v1103, 4
      %v1106 = vshll.u32 %v1010, 16
      %v1108 = vrot.slane %v1106, 5
      %v1109 = vor.u32 %v1105, %v1108
      %v1110 = vrot.slane %v1109, 4
      %v1112 = vshll.u32 %v1011, 16
      %v1114 = vrot.slane %v1112, 5
      %v1115 = vsel %vm441, %v1110, %v1114
      %v1116 = vshrl.u32 %v1011, 16
      %v1118 = vrot.slane %v1116, 4
      %v1119 = vor.u32 %v1118, %v1114
      %v1120 = vrot.slane %v1119, 4
      %v1122 = vshll.u32 %v1040, 16
      %v1124 = vrot.slane %v1122, 5
      %v1125 = vsel %vm441, %v1120, %v1124
      %v1127 = vshrl.u32 %v1012, 16
      %v1129 = vrot.slane %v1127, 4
      %v1130 = vshll.u32 %v1012, 16
      %v1132 = vrot.slane %v1130, 5
      %v1133 = vor.u32 %v1129, %v1132
      %v1134 = vrot.slane %v1133, 4
      %v1136 = vshll.u32 %v1013, 16
      %v1138 = vrot.slane %v1136, 5
      %v1139 = vsel %vm441, %v1134, %v1138
      %v1140 = vshrl.u32 %v1013, 16
      %v1142 = vrot.slane %v1140, 4
      %v1143 = vor.u32 %v1142, %v1138
      %v1144 = vrot.slane %v1143, 4
      %v1146 = vshll.u32 %v1041, 16
      %v1148 = vrot.slane %v1146, 5
      %v1149 = vsel %vm441, %v1144, %v1148
      %v1151 = vshrl.u32 %v1014, 16
      %v1153 = vrot.slane %v1151, 4
      %v1154 = vshll.u32 %v1014, 16
      %v1156 = vrot.slane %v1154, 5
      %v1157 = vor.u32 %v1153, %v1156
      %v1158 = vrot.slane %v1157, 4
      %v1160 = vshll.u32 %v1015, 16
      %v1162 = vrot.slane %v1160, 5
      %v1163 = vsel %vm441, %v1158, %v1162
      %v1164 = vshrl.u32 %v1015, 16
      %v1166 = vrot.slane %v1164, 4
      %v1167 = vor.u32 %v1166, %v1162
      %v1168 = vrot.slane %v1167, 4
      %v1170 = vshll.u32 %v1042, 16
      %v1172 = vrot.slane %v1170, 5
      %v1173 = vsel %vm441, %v1168, %v1172
      %v1175 = vshrl.u32 %v1016, 16
      %v1177 = vrot.slane %v1175, 4
      %v1178 = vshll.u32 %v1016, 16
      %v1180 = vrot.slane %v1178, 5
      %v1181 = vor.u32 %v1177, %v1180
      %v1182 = vrot.slane %v1181, 4
      %v1184 = vshll.u32 %v1017, 16
      %v1186 = vrot.slane %v1184, 5
      %v1187 = vsel %vm441, %v1182, %v1186
      %v1188 = vshrl.u32 %v1017, 16
      %v1190 = vrot.slane %v1188, 4
      %v1191 = vor.u32 %v1190, %v1186
      %v1192 = vrot.slane %v1191, 4
      %v1194 = vshll.u32 %v1043, 16
      %v1196 = vrot.slane %v1194, 5
      %v1197 = vsel %vm441, %v1192, %v1196
      %v1199 = vshrl.u32 %v1018, 16
      %v1201 = vrot.slane %v1199, 4
      %v1202 = vshll.u32 %v1018, 16
      %v1204 = vrot.slane %v1202, 5
      %v1205 = vor.u32 %v1201, %v1204
      %v1206 = vrot.slane %v1205, 4
      %v1208 = vshll.u32 %v1019, 16
      %v1210 = vrot.slane %v1208, 5
      %v1211 = vsel %vm441, %v1206, %v1210
      %v1212 = vshrl.u32 %v1019, 16
      %v1214 = vrot.slane %v1212, 4
      %v1215 = vor.u32 %v1214, %v1210
      %v1216 = vrot.slane %v1215, 4
      %v1218 = vshll.u32 %v1044, 16
      %v1220 = vrot.slane %v1218, 5
      %v1221 = vsel %vm441, %v1216, %v1220
      %v1223 = vshrl.u32 %v1020, 16
      %v1225 = vrot.slane %v1223, 4
      %v1226 = vshll.u32 %v1020, 16
      %v1228 = vrot.slane %v1226, 5
      %v1229 = vor.u32 %v1225, %v1228
      %v1230 = vrot.slane %v1229, 4
      %v1232 = vshll.u32 %v1021, 16
      %v1234 = vrot.slane %v1232, 5
      %v1235 = vsel %vm441, %v1230, %v1234
      %v1236 = vshrl.u32 %v1021, 16
      %v1238 = vrot.slane %v1236, 4
      %v1239 = vor.u32 %v1238, %v1234
      %v1240 = vrot.slane %v1239, 4
      %v1242 = vshll.u32 %v1045, 16
      %v1244 = vrot.slane %v1242, 5
      %v1245 = vsel %vm441, %v1240, %v1244
      %v1247 = vshrl.u32 %v1022, 16
      %v1249 = vrot.slane %v1247, 4
      %v1250 = vshll.u32 %v1022, 16
      %v1252 = vrot.slane %v1250, 5
      %v1253 = vor.u32 %v1249, %v1252
      %v1254 = vrot.slane %v1253, 4
      %v1256 = vshll.u32 %v1023, 16
      %v1258 = vrot.slane %v1256, 5
      %v1259 = vsel %vm441, %v1254, %v1258
      %v1260 = vshrl.u32 %v1023, 16
      %v1262 = vrot.slane %v1260, 4
      %v1263 = vor.u32 %v1262, %v1258
      %v1264 = vrot.slane %v1263, 4
      %v1266 = vshll.u32 %v1046, 16
      %v1268 = vrot.slane %v1266, 5
      %v1269 = vsel %vm441, %v1264, %v1268
      %v1271 = vshrl.u32 %v1024, 16
      %v1273 = vrot.slane %v1271, 4
      %v1274 = vshll.u32 %v1024, 16
      %v1276 = vrot.slane %v1274, 5
      %v1277 = vor.u32 %v1273, %v1276
      %v1278 = vrot.slane %v1277, 4
      %v1280 = vshll.u32 %v1025, 16
      %v1282 = vrot.slane %v1280, 5
      %v1283 = vsel %vm441, %v1278, %v1282
      %v1284 = vshrl.u32 %v1025, 16
      %v1286 = vrot.slane %v1284, 4
      %v1287 = vor.u32 %v1286, %v1282
      %v1288 = vrot.slane %v1287, 4
      %v1290 = vshll.u32 %v1047, 16
      %v1292 = vrot.slane %v1290, 5
      %v1293 = vsel %vm441, %v1288, %v1292
      %v1295 = vshrl.u32 %v1026, 16
      %v1297 = vrot.slane %v1295, 4
      %v1298 = vshll.u32 %v1026, 16
      %v1300 = vrot.slane %v1298, 5
      %v1301 = vor.u32 %v1297, %v1300
      %v1302 = vrot.slane %v1301, 4
      %v1304 = vshll.u32 %v1027, 16
      %v1306 = vrot.slane %v1304, 5
      %v1307 = vsel %vm441, %v1302, %v1306
      %v1308 = vshrl.u32 %v1027, 16
      %v1310 = vrot.slane %v1308, 4
      %v1311 = vor.u32 %v1310, %v1306
      %v1312 = vrot.slane %v1311, 4
      %v1314 = vshll.u32 %v1048, 16
      %v1316 = vrot.slane %v1314, 5
      %v1317 = vsel %vm441, %v1312, %v1316
      %v1319 = vshrl.u32 %v1028, 16
      %v1321 = vrot.slane %v1319, 4
      %v1322 = vshll.u32 %v1028, 16
      %v1324 = vrot.slane %v1322, 5
      %v1325 = vor.u32 %v1321, %v1324
      %v1326 = vrot.slane %v1325, 4
      %v1328 = vshll.u32 %v1029, 16
      %v1330 = vrot.slane %v1328, 5
      %v1331 = vsel %vm441, %v1326, %v1330
      %v1332 = vshrl.u32 %v1029, 16
      %v1334 = vrot.slane %v1332, 4
      %v1335 = vor.u32 %v1334, %v1330
      %v1336 = vrot.slane %v1335, 4
      %v1338 = vshll.u32 %v1049, 16
      %v1340 = vrot.slane %v1338, 5
      %v1341 = vsel %vm441, %v1336, %v1340
      %v1343 = vshrl.u32 %v1030, 16
      %v1345 = vrot.slane %v1343, 4
      %v1346 = vshll.u32 %v1030, 16
      %v1348 = vrot.slane %v1346, 5
      %v1349 = vor.u32 %v1345, %v1348
      %v1350 = vrot.slane %v1349, 4
      %v1352 = vshll.u32 %v1031, 16
      %v1354 = vrot.slane %v1352, 5
      %v1355 = vsel %vm441, %v1350, %v1354
      %v1356 = vshrl.u32 %v1031, 16
      %v1358 = vrot.slane %v1356, 4
      %v1359 = vor.u32 %v1358, %v1354
      %v1360 = vrot.slane %v1359, 4
      %v1362 = vshll.u32 %v1050, 16
      %v1364 = vrot.slane %v1362, 5
      %v1365 = vsel %vm441, %v1360, %v1364
      %v1367 = vshrl.u32 %v1032, 16
      %v1369 = vrot.slane %v1367, 4
      %v1370 = vshll.u32 %v1032, 16
      %v1372 = vrot.slane %v1370, 5
      %v1373 = vor.u32 %v1369, %v1372
      %v1374 = vrot.slane %v1373, 4
      %v1376 = vshll.u32 %v1033, 16
      %v1378 = vrot.slane %v1376, 5
      %v1379 = vsel %vm441, %v1374, %v1378
      %v1380 = vshrl.u32 %v1033, 16
      %v1382 = vrot.slane %v1380, 4
      %v1383 = vor.u32 %v1382, %v1378
      %v1384 = vrot.slane %v1383, 4
      %v1386 = vshll.u32 %v1051, 16
      %v1388 = vrot.slane %v1386, 5
      %v1389 = vsel %vm441, %v1384, %v1388
      %v1391 = vshrl.u32 %v1034, 16
      %v1393 = vrot.slane %v1391, 4
      %v1394 = vshll.u32 %v1034, 16
      %v1396 = vrot.slane %v1394, 5
      %v1397 = vor.u32 %v1393, %v1396
      %v1398 = vrot.slane %v1397, 4
      %v1400 = vshll.u32 %v1035, 16
      %v1402 = vrot.slane %v1400, 5
      %v1403 = vsel %vm441, %v1398, %v1402
      %v1404 = vshrl.u32 %v1035, 16
      %v1406 = vrot.slane %v1404, 4
      %v1407 = vor.u32 %v1406, %v1402
      %v1408 = vrot.slane %v1407, 4
      %v1410 = vshll.u32 %v1052, 16
      %v1412 = vrot.slane %v1410, 5
      %v1413 = vsel %vm441, %v1408, %v1412
      %v1415 = vshrl.u32 %v1036, 16
      %v1417 = vrot.slane %v1415, 4
      %v1418 = vshll.u32 %v1036, 16
      %v1420 = vrot.slane %v1418, 5
      %v1421 = vor.u32 %v1417, %v1420
      %v1422 = vrot.slane %v1421, 4
      %v1424 = vshll.u32 %v1037, 16
      %v1426 = vrot.slane %v1424, 5
      %v1427 = vsel %vm441, %v1422, %v1426
      %v1428 = vshrl.u32 %v1037, 16
      %v1430 = vrot.slane %v1428, 4
      %v1431 = vor.u32 %v1430, %v1426
      %v1432 = vrot.slane %v1431, 4
      %v1434 = vshll.u32 %v1053, 16
      %v1436 = vrot.slane %v1434, 5
      %v1437 = vsel %vm441, %v1432, %v1436
      %v1438 = vld [vmem:[%s1005] sm:$0xe]
      %v1439 = vld [vmem:[%s1005 + $0xc] sm:$0xe]
      %v1440 = vld [vmem:[%s1005 + $0x18] sm:$0xe]
      %v1441 = vld [vmem:[%s1005 + $0x24] sm:$0xe]
      %v1442 = vld [vmem:[%s1005 + $0x30] sm:$0xe]
      %v1443 = vld [vmem:[%s1005 + $0x3c] sm:$0xe]
      %v1444 = vld [vmem:[%s1005 + $0x48] sm:$0xe]
      %v1445 = vld [vmem:[%s1005 + $0x54] sm:$0xe]
      %v1446 = vld [vmem:[%s1005 + $0x60] sm:$0xe]
      %v1447 = vld [vmem:[%s1005 + $0x6c] sm:$0xe]
      %v1448 = vld [vmem:[%s1005 + $0x78] sm:$0xe]
      %v1449 = vld [vmem:[%s1005 + $0x84] sm:$0xe]
      %v1450 = vld [vmem:[%s1005 + $0x90] sm:$0xe]
      %v1451 = vld [vmem:[%s1005 + $0x9c] sm:$0xe]
      %v1452 = vld [vmem:[%s1005 + $0xa8] sm:$0xe]
      %v1453 = vld [vmem:[%s1005 + $0xb4] sm:$0xe]
      %v1502 = vrot.slane %v1438, 5
      %v1503 = vrot.slane %v1502, 4
      %v1504 = vrot.slane %v1007, 5
      %v1505 = vsel %vm892, %v1503, %v1504
      %v1506 = vrot.slane %v1504, 4
      %v1507 = vrot.slane %v1038, 5
      %v1508 = vsel %vm892, %v1506, %v1507
      %v1509 = vrot.slane %v1439, 5
      %v1510 = vrot.slane %v1509, 4
      %v1511 = vrot.slane %v1009, 5
      %v1512 = vsel %vm892, %v1510, %v1511
      %v1513 = vrot.slane %v1511, 4
      %v1514 = vrot.slane %v1039, 5
      %v1515 = vsel %vm892, %v1513, %v1514
      %v1516 = vrot.slane %v1440, 5
      %v1517 = vrot.slane %v1516, 4
      %v1518 = vrot.slane %v1011, 5
      %v1519 = vsel %vm892, %v1517, %v1518
      %v1520 = vrot.slane %v1518, 4
      %v1521 = vrot.slane %v1040, 5
      %v1522 = vsel %vm892, %v1520, %v1521
      %v1523 = vrot.slane %v1441, 5
      %v1524 = vrot.slane %v1523, 4
      %v1525 = vrot.slane %v1013, 5
      %v1526 = vsel %vm892, %v1524, %v1525
      %v1527 = vrot.slane %v1525, 4
      %v1528 = vrot.slane %v1041, 5
      %v1529 = vsel %vm892, %v1527, %v1528
      %v1530 = vrot.slane %v1442, 5
      %v1531 = vrot.slane %v1530, 4
      %v1532 = vrot.slane %v1015, 5
      %v1533 = vsel %vm892, %v1531, %v1532
      %v1534 = vrot.slane %v1532, 4
      %v1535 = vrot.slane %v1042, 5
      %v1536 = vsel %vm892, %v1534, %v1535
      %v1537 = vrot.slane %v1443, 5
      %v1538 = vrot.slane %v1537, 4
      %v1539 = vrot.slane %v1017, 5
      %v1540 = vsel %vm892, %v1538, %v1539
      %v1541 = vrot.slane %v1539, 4
      %v1542 = vrot.slane %v1043, 5
      %v1543 = vsel %vm892, %v1541, %v1542
      %v1544 = vrot.slane %v1444, 5
      %v1545 = vrot.slane %v1544, 4
      %v1546 = vrot.slane %v1019, 5
      %v1547 = vsel %vm892, %v1545, %v1546
      %v1548 = vrot.slane %v1546, 4
      %v1549 = vrot.slane %v1044, 5
      %v1550 = vsel %vm892, %v1548, %v1549
      %v1551 = vrot.slane %v1445, 5
      %v1552 = vrot.slane %v1551, 4
      %v1553 = vrot.slane %v1021, 5
      %v1554 = vsel %vm892, %v1552, %v1553
      %v1555 = vrot.slane %v1553, 4
      %v1556 = vrot.slane %v1045, 5
      %v1557 = vsel %vm892, %v1555, %v1556
      %v1558 = vrot.slane %v1446, 5
      %v1559 = vrot.slane %v1558, 4
      %v1560 = vrot.slane %v1023, 5
      %v1561 = vsel %vm892, %v1559, %v1560
      %v1562 = vrot.slane %v1560, 4
      %v1563 = vrot.slane %v1046, 5
      %v1564 = vsel %vm892, %v1562, %v1563
      %v1565 = vrot.slane %v1447, 5
      %v1566 = vrot.slane %v1565, 4
      %v1567 = vrot.slane %v1025, 5
      %v1568 = vsel %vm892, %v1566, %v1567
      %v1569 = vrot.slane %v1567, 4
      %v1570 = vrot.slane %v1047, 5
      %v1571 = vsel %vm892, %v1569, %v1570
      %v1572 = vrot.slane %v1448, 5
      %v1573 = vrot.slane %v1572, 4
      %v1574 = vrot.slane %v1027, 5
      %v1575 = vsel %vm892, %v1573, %v1574
      %v1576 = vrot.slane %v1574, 4
      %v1577 = vrot.slane %v1048, 5
      %v1578 = vsel %vm892, %v1576, %v1577
      %v1579 = vrot.slane %v1449, 5
      %v1580 = vrot.slane %v1579, 4
      %v1581 = vrot.slane %v1029, 5
      %v1582 = vsel %vm892, %v1580, %v1581
      %v1583 = vrot.slane %v1581, 4
      %v1584 = vrot.slane %v1049, 5
      %v1585 = vsel %vm892, %v1583, %v1584
      %v1586 = vrot.slane %v1450, 5
      %v1587 = vrot.slane %v1586, 4
      %v1588 = vrot.slane %v1031, 5
      %v1589 = vsel %vm892, %v1587, %v1588
      %v1590 = vrot.slane %v1588, 4
      %v1591 = vrot.slane %v1050, 5
      %v1592 = vsel %vm892, %v1590, %v1591
      %v1593 = vrot.slane %v1451, 5
      %v1594 = vrot.slane %v1593, 4
      %v1595 = vrot.slane %v1033, 5
      %v1596 = vsel %vm892, %v1594, %v1595
      %v1597 = vrot.slane %v1595, 4
      %v1598 = vrot.slane %v1051, 5
      %v1599 = vsel %vm892, %v1597, %v1598
      %v1600 = vrot.slane %v1452, 5
      %v1601 = vrot.slane %v1600, 4
      %v1602 = vrot.slane %v1035, 5
      %v1603 = vsel %vm892, %v1601, %v1602
      %v1604 = vrot.slane %v1602, 4
      %v1605 = vrot.slane %v1052, 5
      %v1606 = vsel %vm892, %v1604, %v1605
      %v1607 = vrot.slane %v1453, 5
      %v1608 = vrot.slane %v1607, 4
      %v1609 = vrot.slane %v1037, 5
      %v1610 = vsel %vm892, %v1608, %v1609
      %v1611 = vrot.slane %v1609, 4
      %v1612 = vrot.slane %v1053, 5
      %v1613 = vsel %vm892, %v1611, %v1612
      %s1614 = scalar_lea.vmem %s273, 24
      %v1615 = vld [vmem:[%s1614] sm:$0xf]
      %v1616 = vld [vmem:[%s1614 + $0x4] sm:$0xf]
      %v1617 = vld [vmem:[%s1614 + $0xc] sm:$0xf]
      %v1618 = vld [vmem:[%s1614 + $0x10] sm:$0xf]
      %v1619 = vld [vmem:[%s1614 + $0x18] sm:$0xf]
      %v1620 = vld [vmem:[%s1614 + $0x1c] sm:$0xf]
      %v1621 = vld [vmem:[%s1614 + $0x24] sm:$0xf]
      %v1622 = vld [vmem:[%s1614 + $0x28] sm:$0xf]
      %v1623 = vld [vmem:[%s1614 + $0x30] sm:$0xf]
      %v1624 = vld [vmem:[%s1614 + $0x34] sm:$0xf]
      %v1625 = vld [vmem:[%s1614 + $0x3c] sm:$0xf]
      %v1626 = vld [vmem:[%s1614 + $0x40] sm:$0xf]
      %v1627 = vld [vmem:[%s1614 + $0x48] sm:$0xf]
      %v1628 = vld [vmem:[%s1614 + $0x4c] sm:$0xf]
      %v1629 = vld [vmem:[%s1614 + $0x54] sm:$0xf]
      %v1630 = vld [vmem:[%s1614 + $0x58] sm:$0xf]
      %v1631 = vld [vmem:[%s1614 + $0x60] sm:$0xf]
      %v1632 = vld [vmem:[%s1614 + $0x64] sm:$0xf]
      %v1633 = vld [vmem:[%s1614 + $0x6c] sm:$0xf]
      %v1634 = vld [vmem:[%s1614 + $0x70] sm:$0xf]
      %v1635 = vld [vmem:[%s1614 + $0x78] sm:$0xf]
      %v1636 = vld [vmem:[%s1614 + $0x7c] sm:$0xf]
      %v1637 = vld [vmem:[%s1614 + $0x84] sm:$0xf]
      %v1638 = vld [vmem:[%s1614 + $0x88] sm:$0xf]
      %v1639 = vld [vmem:[%s1614 + $0x90] sm:$0xf]
      %v1640 = vld [vmem:[%s1614 + $0x94] sm:$0xf]
      %v1641 = vld [vmem:[%s1614 + $0x9c] sm:$0xf]
      %v1642 = vld [vmem:[%s1614 + $0xa0] sm:$0xf]
      %v1643 = vld [vmem:[%s1614 + $0xa8] sm:$0xf]
      %v1644 = vld [vmem:[%s1614 + $0xac] sm:$0xf]
      %v1645 = vld [vmem:[%s1614 + $0xb4] sm:$0xf]
      %v1646 = vld [vmem:[%s1614 + $0xb8] sm:$0xf]
      %v1647 = vld [vmem:[%s1614 + $0x8] sm:$0x1]
      %v1648 = vld [vmem:[%s1614 + $0x14] sm:$0x1]
      %v1649 = vld [vmem:[%s1614 + $0x20] sm:$0x1]
      %v1650 = vld [vmem:[%s1614 + $0x2c] sm:$0x1]
      %v1651 = vld [vmem:[%s1614 + $0x38] sm:$0x1]
      %v1652 = vld [vmem:[%s1614 + $0x44] sm:$0x1]
      %v1653 = vld [vmem:[%s1614 + $0x50] sm:$0x1]
      %v1654 = vld [vmem:[%s1614 + $0x5c] sm:$0x1]
      %v1655 = vld [vmem:[%s1614 + $0x68] sm:$0x1]
      %v1656 = vld [vmem:[%s1614 + $0x74] sm:$0x1]
      %v1657 = vld [vmem:[%s1614 + $0x80] sm:$0x1]
      %v1658 = vld [vmem:[%s1614 + $0x8c] sm:$0x1]
      %v1659 = vld [vmem:[%s1614 + $0x98] sm:$0x1]
      %v1660 = vld [vmem:[%s1614 + $0xa4] sm:$0x1]
      %v1661 = vld [vmem:[%s1614 + $0xb0] sm:$0x1]
      %v1662 = vld [vmem:[%s1614 + $0xbc] sm:$0x1]
      %v1664 = vshrl.u32 %v1615, 16
      %v1666 = vrot.slane %v1664, 4
      %v1667 = vshll.u32 %v1615, 16
      %v1669 = vrot.slane %v1667, 5
      %v1670 = vor.u32 %v1666, %v1669
      %v1671 = vrot.slane %v1670, 4
      %v1673 = vshll.u32 %v1616, 16
      %v1675 = vrot.slane %v1673, 5
      %v1676 = vsel %vm441, %v1671, %v1675
      %v1677 = vshrl.u32 %v1616, 16
      %v1679 = vrot.slane %v1677, 4
      %v1680 = vor.u32 %v1679, %v1675
      %v1681 = vrot.slane %v1680, 4
      %v1683 = vshll.u32 %v1647, 16
      %v1685 = vrot.slane %v1683, 5
      %v1686 = vsel %vm441, %v1681, %v1685
      %v1688 = vshrl.u32 %v1617, 16
      %v1690 = vrot.slane %v1688, 4
      %v1691 = vshll.u32 %v1617, 16
      %v1693 = vrot.slane %v1691, 5
      %v1694 = vor.u32 %v1690, %v1693
      %v1695 = vrot.slane %v1694, 4
      %v1697 = vshll.u32 %v1618, 16
      %v1699 = vrot.slane %v1697, 5
      %v1700 = vsel %vm441, %v1695, %v1699
      %v1701 = vshrl.u32 %v1618, 16
      %v1703 = vrot.slane %v1701, 4
      %v1704 = vor.u32 %v1703, %v1699
      %v1705 = vrot.slane %v1704, 4
      %v1707 = vshll.u32 %v1648, 16
      %v1709 = vrot.slane %v1707, 5
      %v1710 = vsel %vm441, %v1705, %v1709
      %v1712 = vshrl.u32 %v1619, 16
      %v1714 = vrot.slane %v1712, 4
      %v1715 = vshll.u32 %v1619, 16
      %v1717 = vrot.slane %v1715, 5
      %v1718 = vor.u32 %v1714, %v1717
      %v1719 = vrot.slane %v1718, 4
      %v1721 = vshll.u32 %v1620, 16
      %v1723 = vrot.slane %v1721, 5
      %v1724 = vsel %vm441, %v1719, %v1723
      %v1725 = vshrl.u32 %v1620, 16
      %v1727 = vrot.slane %v1725, 4
      %v1728 = vor.u32 %v1727, %v1723
      %v1729 = vrot.slane %v1728, 4
      %v1731 = vshll.u32 %v1649, 16
      %v1733 = vrot.slane %v1731, 5
      %v1734 = vsel %vm441, %v1729, %v1733
      %v1736 = vshrl.u32 %v1621, 16
      %v1738 = vrot.slane %v1736, 4
      %v1739 = vshll.u32 %v1621, 16
      %v1741 = vrot.slane %v1739, 5
      %v1742 = vor.u32 %v1738, %v1741
      %v1743 = vrot.slane %v1742, 4
      %v1745 = vshll.u32 %v1622, 16
      %v1747 = vrot.slane %v1745, 5
      %v1748 = vsel %vm441, %v1743, %v1747
      %v1749 = vshrl.u32 %v1622, 16
      %v1751 = vrot.slane %v1749, 4
      %v1752 = vor.u32 %v1751, %v1747
      %v1753 = vrot.slane %v1752, 4
      %v1755 = vshll.u32 %v1650, 16
      %v1757 = vrot.slane %v1755, 5
      %v1758 = vsel %vm441, %v1753, %v1757
      %v1760 = vshrl.u32 %v1623, 16
      %v1762 = vrot.slane %v1760, 4
      %v1763 = vshll.u32 %v1623, 16
      %v1765 = vrot.slane %v1763, 5
      %v1766 = vor.u32 %v1762, %v1765
      %v1767 = vrot.slane %v1766, 4
      %v1769 = vshll.u32 %v1624, 16
      %v1771 = vrot.slane %v1769, 5
      %v1772 = vsel %vm441, %v1767, %v1771
      %v1773 = vshrl.u32 %v1624, 16
      %v1775 = vrot.slane %v1773, 4
      %v1776 = vor.u32 %v1775, %v1771
      %v1777 = vrot.slane %v1776, 4
      %v1779 = vshll.u32 %v1651, 16
      %v1781 = vrot.slane %v1779, 5
      %v1782 = vsel %vm441, %v1777, %v1781
      %v1784 = vshrl.u32 %v1625, 16
      %v1786 = vrot.slane %v1784, 4
      %v1787 = vshll.u32 %v1625, 16
      %v1789 = vrot.slane %v1787, 5
      %v1790 = vor.u32 %v1786, %v1789
      %v1791 = vrot.slane %v1790, 4
      %v1793 = vshll.u32 %v1626, 16
      %v1795 = vrot.slane %v1793, 5
      %v1796 = vsel %vm441, %v1791, %v1795
      %v1797 = vshrl.u32 %v1626, 16
      %v1799 = vrot.slane %v1797, 4
      %v1800 = vor.u32 %v1799, %v1795
      %v1801 = vrot.slane %v1800, 4
      %v1803 = vshll.u32 %v1652, 16
      %v1805 = vrot.slane %v1803, 5
      %v1806 = vsel %vm441, %v1801, %v1805
      %v1808 = vshrl.u32 %v1627, 16
      %v1810 = vrot.slane %v1808, 4
      %v1811 = vshll.u32 %v1627, 16
      %v1813 = vrot.slane %v1811, 5
      %v1814 = vor.u32 %v1810, %v1813
      %v1815 = vrot.slane %v1814, 4
      %v1817 = vshll.u32 %v1628, 16
      %v1819 = vrot.slane %v1817, 5
      %v1820 = vsel %vm441, %v1815, %v1819
      %v1821 = vshrl.u32 %v1628, 16
      %v1823 = vrot.slane %v1821, 4
      %v1824 = vor.u32 %v1823, %v1819
      %v1825 = vrot.slane %v1824, 4
      %v1827 = vshll.u32 %v1653, 16
      %v1829 = vrot.slane %v1827, 5
      %v1830 = vsel %vm441, %v1825, %v1829
      %v1832 = vshrl.u32 %v1629, 16
      %v1834 = vrot.slane %v1832, 4
      %v1835 = vshll.u32 %v1629, 16
      %v1837 = vrot.slane %v1835, 5
      %v1838 = vor.u32 %v1834, %v1837
      %v1839 = vrot.slane %v1838, 4
      %v1841 = vshll.u32 %v1630, 16
      %v1843 = vrot.slane %v1841, 5
      %v1844 = vsel %vm441, %v1839, %v1843
      %v1845 = vshrl.u32 %v1630, 16
      %v1847 = vrot.slane %v1845, 4
      %v1848 = vor.u32 %v1847, %v1843
      %v1849 = vrot.slane %v1848, 4
      %v1851 = vshll.u32 %v1654, 16
      %v1853 = vrot.slane %v1851, 5
      %v1854 = vsel %vm441, %v1849, %v1853
      %v1856 = vshrl.u32 %v1631, 16
      %v1858 = vrot.slane %v1856, 4
      %v1859 = vshll.u32 %v1631, 16
      %v1861 = vrot.slane %v1859, 5
      %v1862 = vor.u32 %v1858, %v1861
      %v1863 = vrot.slane %v1862, 4
      %v1865 = vshll.u32 %v1632, 16
      %v1867 = vrot.slane %v1865, 5
      %v1868 = vsel %vm441, %v1863, %v1867
      %v1869 = vshrl.u32 %v1632, 16
      %v1871 = vrot.slane %v1869, 4
      %v1872 = vor.u32 %v1871, %v1867
      %v1873 = vrot.slane %v1872, 4
      %v1875 = vshll.u32 %v1655, 16
      %v1877 = vrot.slane %v1875, 5
      %v1878 = vsel %vm441, %v1873, %v1877
      %v1880 = vshrl.u32 %v1633, 16
      %v1882 = vrot.slane %v1880, 4
      %v1883 = vshll.u32 %v1633, 16
      %v1885 = vrot.slane %v1883, 5
      %v1886 = vor.u32 %v1882, %v1885
      %v1887 = vrot.slane %v1886, 4
      %v1889 = vshll.u32 %v1634, 16
      %v1891 = vrot.slane %v1889, 5
      %v1892 = vsel %vm441, %v1887, %v1891
      %v1893 = vshrl.u32 %v1634, 16
      %v1895 = vrot.slane %v1893, 4
      %v1896 = vor.u32 %v1895, %v1891
      %v1897 = vrot.slane %v1896, 4
      %v1899 = vshll.u32 %v1656, 16
      %v1901 = vrot.slane %v1899, 5
      %v1902 = vsel %vm441, %v1897, %v1901
      %v1904 = vshrl.u32 %v1635, 16
      %v1906 = vrot.slane %v1904, 4
      %v1907 = vshll.u32 %v1635, 16
      %v1909 = vrot.slane %v1907, 5
      %v1910 = vor.u32 %v1906, %v1909
      %v1911 = vrot.slane %v1910, 4
      %v1913 = vshll.u32 %v1636, 16
      %v1915 = vrot.slane %v1913, 5
      %v1916 = vsel %vm441, %v1911, %v1915
      %v1917 = vshrl.u32 %v1636, 16
      %v1919 = vrot.slane %v1917, 4
      %v1920 = vor.u32 %v1919, %v1915
      %v1921 = vrot.slane %v1920, 4
      %v1923 = vshll.u32 %v1657, 16
      %v1925 = vrot.slane %v1923, 5
      %v1926 = vsel %vm441, %v1921, %v1925
      %v1928 = vshrl.u32 %v1637, 16
      %v1930 = vrot.slane %v1928, 4
      %v1931 = vshll.u32 %v1637, 16
      %v1933 = vrot.slane %v1931, 5
      %v1934 = vor.u32 %v1930, %v1933
      %v1935 = vrot.slane %v1934, 4
      %v1937 = vshll.u32 %v1638, 16
      %v1939 = vrot.slane %v1937, 5
      %v1940 = vsel %vm441, %v1935, %v1939
      %v1941 = vshrl.u32 %v1638, 16
      %v1943 = vrot.slane %v1941, 4
      %v1944 = vor.u32 %v1943, %v1939
      %v1945 = vrot.slane %v1944, 4
      %v1947 = vshll.u32 %v1658, 16
      %v1949 = vrot.slane %v1947, 5
      %v1950 = vsel %vm441, %v1945, %v1949
      %v1952 = vshrl.u32 %v1639, 16
      %v1954 = vrot.slane %v1952, 4
      %v1955 = vshll.u32 %v1639, 16
      %v1957 = vrot.slane %v1955, 5
      %v1958 = vor.u32 %v1954, %v1957
      %v1959 = vrot.slane %v1958, 4
      %v1961 = vshll.u32 %v1640, 16
      %v1963 = vrot.slane %v1961, 5
      %v1964 = vsel %vm441, %v1959, %v1963
      %v1965 = vshrl.u32 %v1640, 16
      %v1967 = vrot.slane %v1965, 4
      %v1968 = vor.u32 %v1967, %v1963
      %v1969 = vrot.slane %v1968, 4
      %v1971 = vshll.u32 %v1659, 16
      %v1973 = vrot.slane %v1971, 5
      %v1974 = vsel %vm441, %v1969, %v1973
      %v1976 = vshrl.u32 %v1641, 16
      %v1978 = vrot.slane %v1976, 4
      %v1979 = vshll.u32 %v1641, 16
      %v1981 = vrot.slane %v1979, 5
      %v1982 = vor.u32 %v1978, %v1981
      %v1983 = vrot.slane %v1982, 4
      %v1985 = vshll.u32 %v1642, 16
      %v1987 = vrot.slane %v1985, 5
      %v1988 = vsel %vm441, %v1983, %v1987
      %v1989 = vshrl.u32 %v1642, 16
      %v1991 = vrot.slane %v1989, 4
      %v1992 = vor.u32 %v1991, %v1987
      %v1993 = vrot.slane %v1992, 4
      %v1995 = vshll.u32 %v1660, 16
      %v1997 = vrot.slane %v1995, 5
      %v1998 = vsel %vm441, %v1993, %v1997
      %v2000 = vshrl.u32 %v1643, 16
      %v2002 = vrot.slane %v2000, 4
      %v2003 = vshll.u32 %v1643, 16
      %v2005 = vrot.slane %v2003, 5
      %v2006 = vor.u32 %v2002, %v2005
      %v2007 = vrot.slane %v2006, 4
      %v2009 = vshll.u32 %v1644, 16
      %v2011 = vrot.slane %v2009, 5
      %v2012 = vsel %vm441, %v2007, %v2011
      %v2013 = vshrl.u32 %v1644, 16
      %v2015 = vrot.slane %v2013, 4
      %v2016 = vor.u32 %v2015, %v2011
      %v2017 = vrot.slane %v2016, 4
      %v2019 = vshll.u32 %v1661, 16
      %v2021 = vrot.slane %v2019, 5
      %v2022 = vsel %vm441, %v2017, %v2021
      %v2024 = vshrl.u32 %v1645, 16
      %v2026 = vrot.slane %v2024, 4
      %v2027 = vshll.u32 %v1645, 16
      %v2029 = vrot.slane %v2027, 5
      %v2030 = vor.u32 %v2026, %v2029
      %v2031 = vrot.slane %v2030, 4
      %v2033 = vshll.u32 %v1646, 16
      %v2035 = vrot.slane %v2033, 5
      %v2036 = vsel %vm441, %v2031, %v2035
      %v2037 = vshrl.u32 %v1646, 16
      %v2039 = vrot.slane %v2037, 4
      %v2040 = vor.u32 %v2039, %v2035
      %v2041 = vrot.slane %v2040, 4
      %v2043 = vshll.u32 %v1662, 16
      %v2045 = vrot.slane %v2043, 5
      %v2046 = vsel %vm441, %v2041, %v2045
      %v2047 = vld [vmem:[%s1614] sm:$0xe]
      %v2048 = vld [vmem:[%s1614 + $0xc] sm:$0xe]
      %v2049 = vld [vmem:[%s1614 + $0x18] sm:$0xe]
      %v2050 = vld [vmem:[%s1614 + $0x24] sm:$0xe]
      %v2051 = vld [vmem:[%s1614 + $0x30] sm:$0xe]
      %v2052 = vld [vmem:[%s1614 + $0x3c] sm:$0xe]
      %v2053 = vld [vmem:[%s1614 + $0x48] sm:$0xe]
      %v2054 = vld [vmem:[%s1614 + $0x54] sm:$0xe]
      %v2055 = vld [vmem:[%s1614 + $0x60] sm:$0xe]
      %v2056 = vld [vmem:[%s1614 + $0x6c] sm:$0xe]
      %v2057 = vld [vmem:[%s1614 + $0x78] sm:$0xe]
      %v2058 = vld [vmem:[%s1614 + $0x84] sm:$0xe]
      %v2059 = vld [vmem:[%s1614 + $0x90] sm:$0xe]
      %v2060 = vld [vmem:[%s1614 + $0x9c] sm:$0xe]
      %v2061 = vld [vmem:[%s1614 + $0xa8] sm:$0xe]
      %v2062 = vld [vmem:[%s1614 + $0xb4] sm:$0xe]
      %v2111 = vrot.slane %v2047, 5
      %v2112 = vrot.slane %v2111, 4
      %v2113 = vrot.slane %v1616, 5
      %v2114 = vsel %vm892, %v2112, %v2113
      %v2115 = vrot.slane %v2113, 4
      %v2116 = vrot.slane %v1647, 5
      %v2117 = vsel %vm892, %v2115, %v2116
      %v2118 = vrot.slane %v2048, 5
      %v2119 = vrot.slane %v2118, 4
      %v2120 = vrot.slane %v1618, 5
      %v2121 = vsel %vm892, %v2119, %v2120
      %v2122 = vrot.slane %v2120, 4
      %v2123 = vrot.slane %v1648, 5
      %v2124 = vsel %vm892, %v2122, %v2123
      %v2125 = vrot.slane %v2049, 5
      %v2126 = vrot.slane %v2125, 4
      %v2127 = vrot.slane %v1620, 5
      %v2128 = vsel %vm892, %v2126, %v2127
      %v2129 = vrot.slane %v2127, 4
      %v2130 = vrot.slane %v1649, 5
      %v2131 = vsel %vm892, %v2129, %v2130
      %v2132 = vrot.slane %v2050, 5
      %v2133 = vrot.slane %v2132, 4
      %v2134 = vrot.slane %v1622, 5
      %v2135 = vsel %vm892, %v2133, %v2134
      %v2136 = vrot.slane %v2134, 4
      %v2137 = vrot.slane %v1650, 5
      %v2138 = vsel %vm892, %v2136, %v2137
      %v2139 = vrot.slane %v2051, 5
      %v2140 = vrot.slane %v2139, 4
      %v2141 = vrot.slane %v1624, 5
      %v2142 = vsel %vm892, %v2140, %v2141
      %v2143 = vrot.slane %v2141, 4
      %v2144 = vrot.slane %v1651, 5
      %v2145 = vsel %vm892, %v2143, %v2144
      %v2146 = vrot.slane %v2052, 5
      %v2147 = vrot.slane %v2146, 4
      %v2148 = vrot.slane %v1626, 5
      %v2149 = vsel %vm892, %v2147, %v2148
      %v2150 = vrot.slane %v2148, 4
      %v2151 = vrot.slane %v1652, 5
      %v2152 = vsel %vm892, %v2150, %v2151
      %v2153 = vrot.slane %v2053, 5
      %v2154 = vrot.slane %v2153, 4
      %v2155 = vrot.slane %v1628, 5
      %v2156 = vsel %vm892, %v2154, %v2155
      %v2157 = vrot.slane %v2155, 4
      %v2158 = vrot.slane %v1653, 5
      %v2159 = vsel %vm892, %v2157, %v2158
      %v2160 = vrot.slane %v2054, 5
      %v2161 = vrot.slane %v2160, 4
      %v2162 = vrot.slane %v1630, 5
      %v2163 = vsel %vm892, %v2161, %v2162
      %v2164 = vrot.slane %v2162, 4
      %v2165 = vrot.slane %v1654, 5
      %v2166 = vsel %vm892, %v2164, %v2165
      %v2167 = vrot.slane %v2055, 5
      %v2168 = vrot.slane %v2167, 4
      %v2169 = vrot.slane %v1632, 5
      %v2170 = vsel %vm892, %v2168, %v2169
      %v2171 = vrot.slane %v2169, 4
      %v2172 = vrot.slane %v1655, 5
      %v2173 = vsel %vm892, %v2171, %v2172
      %v2174 = vrot.slane %v2056, 5
      %v2175 = vrot.slane %v2174, 4
      %v2176 = vrot.slane %v1634, 5
      %v2177 = vsel %vm892, %v2175, %v2176
      %v2178 = vrot.slane %v2176, 4
      %v2179 = vrot.slane %v1656, 5
      %v2180 = vsel %vm892, %v2178, %v2179
      %v2181 = vrot.slane %v2057, 5
      %v2182 = vrot.slane %v2181, 4
      %v2183 = vrot.slane %v1636, 5
      %v2184 = vsel %vm892, %v2182, %v2183
      %v2185 = vrot.slane %v2183, 4
      %v2186 = vrot.slane %v1657, 5
      %v2187 = vsel %vm892, %v2185, %v2186
      %v2188 = vrot.slane %v2058, 5
      %v2189 = vrot.slane %v2188, 4
      %v2190 = vrot.slane %v1638, 5
      %v2191 = vsel %vm892, %v2189, %v2190
      %v2192 = vrot.slane %v2190, 4
      %v2193 = vrot.slane %v1658, 5
      %v2194 = vsel %vm892, %v2192, %v2193
      %v2195 = vrot.slane %v2059, 5
      %v2196 = vrot.slane %v2195, 4
      %v2197 = vrot.slane %v1640, 5
      %v2198 = vsel %vm892, %v2196, %v2197
      %v2199 = vrot.slane %v2197, 4
      %v2200 = vrot.slane %v1659, 5
      %v2201 = vsel %vm892, %v2199, %v2200
      %v2202 = vrot.slane %v2060, 5
      %v2203 = vrot.slane %v2202, 4
      %v2204 = vrot.slane %v1642, 5
      %v2205 = vsel %vm892, %v2203, %v2204
      %v2206 = vrot.slane %v2204, 4
      %v2207 = vrot.slane %v1660, 5
      %v2208 = vsel %vm892, %v2206, %v2207
      %v2209 = vrot.slane %v2061, 5
      %v2210 = vrot.slane %v2209, 4
      %v2211 = vrot.slane %v1644, 5
      %v2212 = vsel %vm892, %v2210, %v2211
      %v2213 = vrot.slane %v2211, 4
      %v2214 = vrot.slane %v1661, 5
      %v2215 = vsel %vm892, %v2213, %v2214
      %v2216 = vrot.slane %v2062, 5
      %v2217 = vrot.slane %v2216, 4
      %v2218 = vrot.slane %v1646, 5
      %v2219 = vsel %vm892, %v2217, %v2218
      %v2220 = vrot.slane %v2218, 4
      %v2221 = vrot.slane %v1662, 5
      %v2222 = vsel %vm892, %v2220, %v2221
      %v2239 = vunpack.c.l.b16 %v391
      %v2240 = vunpack.c.l.b16 %v392
      %v2241 = vunpack.c.l.b16 %v393
      %v2242 = vunpack.c.l.b16 %v394
      %v2243 = vunpack.c.l.b16 %v395
      %v2244 = vunpack.c.l.b16 %v396
      %v2245 = vunpack.c.l.b16 %v397
      %v2246 = vunpack.c.l.b16 %v398
      %v2247 = vunpack.c.l.b16 %v399
      %v2248 = vunpack.c.l.b16 %v400
      %v2249 = vunpack.c.l.b16 %v401
      %v2250 = vunpack.c.l.b16 %v402
      %v2251 = vunpack.c.l.b16 %v403
      %v2252 = vunpack.c.l.b16 %v404
      %v2253 = vunpack.c.l.b16 %v405
      %v2254 = vunpack.c.l.b16 %v406
      %v2255 = vunpack.c.l.b16 %v407
      %v2256 = vunpack.c.l.b16 %v408
      %v2257 = vunpack.c.l.b16 %v409
      %v2258 = vunpack.c.l.b16 %v410
      %v2259 = vunpack.c.l.b16 %v411
      %v2260 = vunpack.c.l.b16 %v412
      %v2261 = vunpack.c.l.b16 %v413
      %v2262 = vunpack.c.l.b16 %v414
      %v2263 = vunpack.c.l.b16 %v415
      %v2264 = vunpack.c.l.b16 %v416
      %v2265 = vunpack.c.l.b16 %v417
      %v2266 = vunpack.c.l.b16 %v418
      %v2267 = vunpack.c.l.b16 %v419
      %v2268 = vunpack.c.l.b16 %v420
      %v2269 = vunpack.c.l.b16 %v421
      %v2270 = vunpack.c.l.b16 %v422
      %v2271 = vpack.c.b16 %v2240, %v2239
      %v2272 = vpack.c.b16 %v2242, %v2241
      %v2273 = vpack.c.b16 %v2244, %v2243
      %v2274 = vpack.c.b16 %v2246, %v2245
      %v2275 = vpack.c.b16 %v2248, %v2247
      %v2276 = vpack.c.b16 %v2250, %v2249
      %v2277 = vpack.c.b16 %v2252, %v2251
      %v2278 = vpack.c.b16 %v2254, %v2253
      %v2279 = vpack.c.b16 %v2256, %v2255
      %v2280 = vpack.c.b16 %v2258, %v2257
      %v2281 = vpack.c.b16 %v2260, %v2259
      %v2282 = vpack.c.b16 %v2262, %v2261
      %v2283 = vpack.c.b16 %v2264, %v2263
      %v2284 = vpack.c.b16 %v2266, %v2265
      %v2285 = vpack.c.b16 %v2268, %v2267
      %v2286 = vpack.c.b16 %v2270, %v2269
      %v2287 = vunpack.c.l.b16 %v455
      %v2288 = vunpack.c.l.b16 %v465
      %v2289 = vunpack.c.l.b16 %v479
      %v2290 = vunpack.c.l.b16 %v489
      %v2291 = vunpack.c.l.b16 %v503
      %v2292 = vunpack.c.l.b16 %v513
      %v2293 = vunpack.c.l.b16 %v527
      %v2294 = vunpack.c.l.b16 %v537
      %v2295 = vunpack.c.l.b16 %v551
      %v2296 = vunpack.c.l.b16 %v561
      %v2297 = vunpack.c.l.b16 %v575
      %v2298 = vunpack.c.l.b16 %v585
      %v2299 = vunpack.c.l.b16 %v599
      %v2300 = vunpack.c.l.b16 %v609
      %v2301 = vunpack.c.l.b16 %v623
      %v2302 = vunpack.c.l.b16 %v633
      %v2303 = vunpack.c.l.b16 %v647
      %v2304 = vunpack.c.l.b16 %v657
      %v2305 = vunpack.c.l.b16 %v671
      %v2306 = vunpack.c.l.b16 %v681
      %v2307 = vunpack.c.l.b16 %v695
      %v2308 = vunpack.c.l.b16 %v705
      %v2309 = vunpack.c.l.b16 %v719
      %v2310 = vunpack.c.l.b16 %v729
      %v2311 = vunpack.c.l.b16 %v743
      %v2312 = vunpack.c.l.b16 %v753
      %v2313 = vunpack.c.l.b16 %v767
      %v2314 = vunpack.c.l.b16 %v777
      %v2315 = vunpack.c.l.b16 %v791
      %v2316 = vunpack.c.l.b16 %v801
      %v2317 = vunpack.c.l.b16 %v815
      %v2318 = vunpack.c.l.b16 %v825
      %v2319 = vpack.c.b16 %v2288, %v2287
      %v2320 = vpack.c.b16 %v2290, %v2289
      %v2321 = vpack.c.b16 %v2292, %v2291
      %v2322 = vpack.c.b16 %v2294, %v2293
      %v2323 = vpack.c.b16 %v2296, %v2295
      %v2324 = vpack.c.b16 %v2298, %v2297
      %v2325 = vpack.c.b16 %v2300, %v2299
      %v2326 = vpack.c.b16 %v2302, %v2301
      %v2327 = vpack.c.b16 %v2304, %v2303
      %v2328 = vpack.c.b16 %v2306, %v2305
      %v2329 = vpack.c.b16 %v2308, %v2307
      %v2330 = vpack.c.b16 %v2310, %v2309
      %v2331 = vpack.c.b16 %v2312, %v2311
      %v2332 = vpack.c.b16 %v2314, %v2313
      %v2333 = vpack.c.b16 %v2316, %v2315
      %v2334 = vpack.c.b16 %v2318, %v2317
      %2335 = vrot.lane.b32.xlu0 %v2319, 4
      %v2336 = vpop.permute.xlu0 %2335
      %2337 = vrot.lane.b32.xlu0 %v2320, 4
      %v2338 = vpop.permute.xlu0 %2337
      %2339 = vrot.lane.b32.xlu0 %v2321, 4
      %v2340 = vpop.permute.xlu0 %2339
      %2341 = vrot.lane.b32.xlu0 %v2322, 4
      %v2342 = vpop.permute.xlu0 %2341
      %2343 = vrot.lane.b32.xlu0 %v2323, 4
      %v2344 = vpop.permute.xlu0 %2343
      %2345 = vrot.lane.b32.xlu0 %v2324, 4
      %v2346 = vpop.permute.xlu0 %2345
      %2347 = vrot.lane.b32.xlu0 %v2325, 4
      %v2348 = vpop.permute.xlu0 %2347
      %2349 = vrot.lane.b32.xlu0 %v2326, 4
      %v2350 = vpop.permute.xlu0 %2349
      %2351 = vrot.lane.b32.xlu0 %v2327, 4
      %v2352 = vpop.permute.xlu0 %2351
      %2353 = vrot.lane.b32.xlu0 %v2328, 4
      %v2354 = vpop.permute.xlu0 %2353
      %2355 = vrot.lane.b32.xlu0 %v2329, 4
      %v2356 = vpop.permute.xlu0 %2355
      %2357 = vrot.lane.b32.xlu0 %v2330, 4
      %v2358 = vpop.permute.xlu0 %2357
      %2359 = vrot.lane.b32.xlu0 %v2331, 4
      %v2360 = vpop.permute.xlu0 %2359
      %2361 = vrot.lane.b32.xlu0 %v2332, 4
      %v2362 = vpop.permute.xlu0 %2361
      %2363 = vrot.lane.b32.xlu0 %v2333, 4
      %v2364 = vpop.permute.xlu0 %2363
      %2365 = vrot.lane.b32.xlu0 %v2334, 4
      %v2366 = vpop.permute.xlu0 %2365
      %v2367 = vunpack.c.l.b16 %v896
      %v2368 = vunpack.c.l.b16 %v899
      %v2369 = vunpack.c.l.b16 %v903
      %v2370 = vunpack.c.l.b16 %v906
      %v2371 = vunpack.c.l.b16 %v910
      %v2372 = vunpack.c.l.b16 %v913
      %v2373 = vunpack.c.l.b16 %v917
      %v2374 = vunpack.c.l.b16 %v920
      %v2375 = vunpack.c.l.b16 %v924
      %v2376 = vunpack.c.l.b16 %v927
      %v2377 = vunpack.c.l.b16 %v931
      %v2378 = vunpack.c.l.b16 %v934
      %v2379 = vunpack.c.l.b16 %v938
      %v2380 = vunpack.c.l.b16 %v941
      %v2381 = vunpack.c.l.b16 %v945
      %v2382 = vunpack.c.l.b16 %v948
      %v2383 = vunpack.c.l.b16 %v952
      %v2384 = vunpack.c.l.b16 %v955
      %v2385 = vunpack.c.l.b16 %v959
      %v2386 = vunpack.c.l.b16 %v962
      %v2387 = vunpack.c.l.b16 %v966
      %v2388 = vunpack.c.l.b16 %v969
      %v2389 = vunpack.c.l.b16 %v973
      %v2390 = vunpack.c.l.b16 %v976
      %v2391 = vunpack.c.l.b16 %v980
      %v2392 = vunpack.c.l.b16 %v983
      %v2393 = vunpack.c.l.b16 %v987
      %v2394 = vunpack.c.l.b16 %v990
      %v2395 = vunpack.c.l.b16 %v994
      %v2396 = vunpack.c.l.b16 %v997
      %v2397 = vunpack.c.l.b16 %v1001
      %v2398 = vunpack.c.l.b16 %v1004
      %v2399 = vpack.c.b16 %v2368, %v2367
      %v2400 = vpack.c.b16 %v2370, %v2369
      %v2401 = vpack.c.b16 %v2372, %v2371
      %v2402 = vpack.c.b16 %v2374, %v2373
      %v2403 = vpack.c.b16 %v2376, %v2375
      %v2404 = vpack.c.b16 %v2378, %v2377
      %v2405 = vpack.c.b16 %v2380, %v2379
      %v2406 = vpack.c.b16 %v2382, %v2381
      %v2407 = vpack.c.b16 %v2384, %v2383
      %v2408 = vpack.c.b16 %v2386, %v2385
      %v2409 = vpack.c.b16 %v2388, %v2387
      %v2410 = vpack.c.b16 %v2390, %v2389
      %v2411 = vpack.c.b16 %v2392, %v2391
      %v2412 = vpack.c.b16 %v2394, %v2393
      %v2413 = vpack.c.b16 %v2396, %v2395
      %v2414 = vpack.c.b16 %v2398, %v2397
      %2415 = vrot.lane.b32.xlu0 %v2399, 8
      %v2416 = vpop.permute.xlu0 %2415
      %2417 = vrot.lane.b32.xlu0 %v2400, 8
      %v2418 = vpop.permute.xlu0 %2417
      %2419 = vrot.lane.b32.xlu0 %v2401, 8
      %v2420 = vpop.permute.xlu0 %2419
      %2421 = vrot.lane.b32.xlu0 %v2402, 8
      %v2422 = vpop.permute.xlu0 %2421
      %2423 = vrot.lane.b32.xlu0 %v2403, 8
      %v2424 = vpop.permute.xlu0 %2423
      %2425 = vrot.lane.b32.xlu0 %v2404, 8
      %v2426 = vpop.permute.xlu0 %2425
      %2427 = vrot.lane.b32.xlu0 %v2405, 8
      %v2428 = vpop.permute.xlu0 %2427
      %2429 = vrot.lane.b32.xlu0 %v2406, 8
      %v2430 = vpop.permute.xlu0 %2429
      %2431 = vrot.lane.b32.xlu0 %v2407, 8
      %v2432 = vpop.permute.xlu0 %2431
      %2433 = vrot.lane.b32.xlu0 %v2408, 8
      %v2434 = vpop.permute.xlu0 %2433
      %2435 = vrot.lane.b32.xlu0 %v2409, 8
      %v2436 = vpop.permute.xlu0 %2435
      %2437 = vrot.lane.b32.xlu0 %v2410, 8
      %v2438 = vpop.permute.xlu0 %2437
      %2439 = vrot.lane.b32.xlu0 %v2411, 8
      %v2440 = vpop.permute.xlu0 %2439
      %2441 = vrot.lane.b32.xlu0 %v2412, 8
      %v2442 = vpop.permute.xlu0 %2441
      %2443 = vrot.lane.b32.xlu0 %v2413, 8
      %v2444 = vpop.permute.xlu0 %2443
      %2445 = vrot.lane.b32.xlu0 %v2414, 8
      %v2446 = vpop.permute.xlu0 %2445
      %v2463 = vunpack.c.l.b16 %v1006
      %v2464 = vunpack.c.l.b16 %v1007
      %v2465 = vunpack.c.l.b16 %v1008
      %v2466 = vunpack.c.l.b16 %v1009
      %v2467 = vunpack.c.l.b16 %v1010
      %v2468 = vunpack.c.l.b16 %v1011
      %v2469 = vunpack.c.l.b16 %v1012
      %v2470 = vunpack.c.l.b16 %v1013
      %v2471 = vunpack.c.l.b16 %v1014
      %v2472 = vunpack.c.l.b16 %v1015
      %v2473 = vunpack.c.l.b16 %v1016
      %v2474 = vunpack.c.l.b16 %v1017
      %v2475 = vunpack.c.l.b16 %v1018
      %v2476 = vunpack.c.l.b16 %v1019
      %v2477 = vunpack.c.l.b16 %v1020
      %v2478 = vunpack.c.l.b16 %v1021
      %v2479 = vunpack.c.l.b16 %v1022
      %v2480 = vunpack.c.l.b16 %v1023
      %v2481 = vunpack.c.l.b16 %v1024
      %v2482 = vunpack.c.l.b16 %v1025
      %v2483 = vunpack.c.l.b16 %v1026
      %v2484 = vunpack.c.l.b16 %v1027
      %v2485 = vunpack.c.l.b16 %v1028
      %v2486 = vunpack.c.l.b16 %v1029
      %v2487 = vunpack.c.l.b16 %v1030
      %v2488 = vunpack.c.l.b16 %v1031
      %v2489 = vunpack.c.l.b16 %v1032
      %v2490 = vunpack.c.l.b16 %v1033
      %v2491 = vunpack.c.l.b16 %v1034
      %v2492 = vunpack.c.l.b16 %v1035
      %v2493 = vunpack.c.l.b16 %v1036
      %v2494 = vunpack.c.l.b16 %v1037
      %v2495 = vpack.c.b16 %v2464, %v2463
      %v2496 = vpack.c.b16 %v2466, %v2465
      %v2497 = vpack.c.b16 %v2468, %v2467
      %v2498 = vpack.c.b16 %v2470, %v2469
      %v2499 = vpack.c.b16 %v2472, %v2471
      %v2500 = vpack.c.b16 %v2474, %v2473
      %v2501 = vpack.c.b16 %v2476, %v2475
      %v2502 = vpack.c.b16 %v2478, %v2477
      %v2503 = vpack.c.b16 %v2480, %v2479
      %v2504 = vpack.c.b16 %v2482, %v2481
      %v2505 = vpack.c.b16 %v2484, %v2483
      %v2506 = vpack.c.b16 %v2486, %v2485
      %v2507 = vpack.c.b16 %v2488, %v2487
      %v2508 = vpack.c.b16 %v2490, %v2489
      %v2509 = vpack.c.b16 %v2492, %v2491
      %v2510 = vpack.c.b16 %v2494, %v2493
      %2511 = vrot.lane.b32.xlu0 %v2495, 12
      %v2512 = vpop.permute.xlu0 %2511
      %2513 = vrot.lane.b32.xlu0 %v2496, 12
      %v2514 = vpop.permute.xlu0 %2513
      %2515 = vrot.lane.b32.xlu0 %v2497, 12
      %v2516 = vpop.permute.xlu0 %2515
      %2517 = vrot.lane.b32.xlu0 %v2498, 12
      %v2518 = vpop.permute.xlu0 %2517
      %2519 = vrot.lane.b32.xlu0 %v2499, 12
      %v2520 = vpop.permute.xlu0 %2519
      %2521 = vrot.lane.b32.xlu0 %v2500, 12
      %v2522 = vpop.permute.xlu0 %2521
      %2523 = vrot.lane.b32.xlu0 %v2501, 12
      %v2524 = vpop.permute.xlu0 %2523
      %2525 = vrot.lane.b32.xlu0 %v2502, 12
      %v2526 = vpop.permute.xlu0 %2525
      %2527 = vrot.lane.b32.xlu0 %v2503, 12
      %v2528 = vpop.permute.xlu0 %2527
      %2529 = vrot.lane.b32.xlu0 %v2504, 12
      %v2530 = vpop.permute.xlu0 %2529
      %2531 = vrot.lane.b32.xlu0 %v2505, 12
      %v2532 = vpop.permute.xlu0 %2531
      %2533 = vrot.lane.b32.xlu0 %v2506, 12
      %v2534 = vpop.permute.xlu0 %2533
      %2535 = vrot.lane.b32.xlu0 %v2507, 12
      %v2536 = vpop.permute.xlu0 %2535
      %2537 = vrot.lane.b32.xlu0 %v2508, 12
      %v2538 = vpop.permute.xlu0 %2537
      %2539 = vrot.lane.b32.xlu0 %v2509, 12
      %v2540 = vpop.permute.xlu0 %2539
      %2541 = vrot.lane.b32.xlu0 %v2510, 12
      %v2542 = vpop.permute.xlu0 %2541
      %v2543 = vunpack.c.l.b16 %v1067
      %v2544 = vunpack.c.l.b16 %v1077
      %v2545 = vunpack.c.l.b16 %v1091
      %v2546 = vunpack.c.l.b16 %v1101
      %v2547 = vunpack.c.l.b16 %v1115
      %v2548 = vunpack.c.l.b16 %v1125
      %v2549 = vunpack.c.l.b16 %v1139
      %v2550 = vunpack.c.l.b16 %v1149
      %v2551 = vunpack.c.l.b16 %v1163
      %v2552 = vunpack.c.l.b16 %v1173
      %v2553 = vunpack.c.l.b16 %v1187
      %v2554 = vunpack.c.l.b16 %v1197
      %v2555 = vunpack.c.l.b16 %v1211
      %v2556 = vunpack.c.l.b16 %v1221
      %v2557 = vunpack.c.l.b16 %v1235
      %v2558 = vunpack.c.l.b16 %v1245
      %v2559 = vunpack.c.l.b16 %v1259
      %v2560 = vunpack.c.l.b16 %v1269
      %v2561 = vunpack.c.l.b16 %v1283
      %v2562 = vunpack.c.l.b16 %v1293
      %v2563 = vunpack.c.l.b16 %v1307
      %v2564 = vunpack.c.l.b16 %v1317
      %v2565 = vunpack.c.l.b16 %v1331
      %v2566 = vunpack.c.l.b16 %v1341
      %v2567 = vunpack.c.l.b16 %v1355
      %v2568 = vunpack.c.l.b16 %v1365
      %v2569 = vunpack.c.l.b16 %v1379
      %v2570 = vunpack.c.l.b16 %v1389
      %v2571 = vunpack.c.l.b16 %v1403
      %v2572 = vunpack.c.l.b16 %v1413
      %v2573 = vunpack.c.l.b16 %v1427
      %v2574 = vunpack.c.l.b16 %v1437
      %v2575 = vpack.c.b16 %v2544, %v2543
      %v2576 = vpack.c.b16 %v2546, %v2545
      %v2577 = vpack.c.b16 %v2548, %v2547
      %v2578 = vpack.c.b16 %v2550, %v2549
      %v2579 = vpack.c.b16 %v2552, %v2551
      %v2580 = vpack.c.b16 %v2554, %v2553
      %v2581 = vpack.c.b16 %v2556, %v2555
      %v2582 = vpack.c.b16 %v2558, %v2557
      %v2583 = vpack.c.b16 %v2560, %v2559
      %v2584 = vpack.c.b16 %v2562, %v2561
      %v2585 = vpack.c.b16 %v2564, %v2563
      %v2586 = vpack.c.b16 %v2566, %v2565
      %v2587 = vpack.c.b16 %v2568, %v2567
      %v2588 = vpack.c.b16 %v2570, %v2569
      %v2589 = vpack.c.b16 %v2572, %v2571
      %v2590 = vpack.c.b16 %v2574, %v2573
      %2591 = vrot.lane.b32.xlu0 %v2575, 16
      %v2592 = vpop.permute.xlu0 %2591
      %2593 = vrot.lane.b32.xlu0 %v2576, 16
      %v2594 = vpop.permute.xlu0 %2593
      %2595 = vrot.lane.b32.xlu0 %v2577, 16
      %v2596 = vpop.permute.xlu0 %2595
      %2597 = vrot.lane.b32.xlu0 %v2578, 16
      %v2598 = vpop.permute.xlu0 %2597
      %2599 = vrot.lane.b32.xlu0 %v2579, 16
      %v2600 = vpop.permute.xlu0 %2599
      %2601 = vrot.lane.b32.xlu0 %v2580, 16
      %v2602 = vpop.permute.xlu0 %2601
      %2603 = vrot.lane.b32.xlu0 %v2581, 16
      %v2604 = vpop.permute.xlu0 %2603
      %2605 = vrot.lane.b32.xlu0 %v2582, 16
      %v2606 = vpop.permute.xlu0 %2605
      %2607 = vrot.lane.b32.xlu0 %v2583, 16
      %v2608 = vpop.permute.xlu0 %2607
      %2609 = vrot.lane.b32.xlu0 %v2584, 16
      %v2610 = vpop.permute.xlu0 %2609
      %2611 = vrot.lane.b32.xlu0 %v2585, 16
      %v2612 = vpop.permute.xlu0 %2611
      %2613 = vrot.lane.b32.xlu0 %v2586, 16
      %v2614 = vpop.permute.xlu0 %2613
      %2615 = vrot.lane.b32.xlu0 %v2587, 16
      %v2616 = vpop.permute.xlu0 %2615
      %2617 = vrot.lane.b32.xlu0 %v2588, 16
      %v2618 = vpop.permute.xlu0 %2617
      %2619 = vrot.lane.b32.xlu0 %v2589, 16
      %v2620 = vpop.permute.xlu0 %2619
      %2621 = vrot.lane.b32.xlu0 %v2590, 16
      %v2622 = vpop.permute.xlu0 %2621
      %v2623 = vunpack.c.l.b16 %v1505
      %v2624 = vunpack.c.l.b16 %v1508
      %v2625 = vunpack.c.l.b16 %v1512
      %v2626 = vunpack.c.l.b16 %v1515
      %v2627 = vunpack.c.l.b16 %v1519
      %v2628 = vunpack.c.l.b16 %v1522
      %v2629 = vunpack.c.l.b16 %v1526
      %v2630 = vunpack.c.l.b16 %v1529
      %v2631 = vunpack.c.l.b16 %v1533
      %v2632 = vunpack.c.l.b16 %v1536
      %v2633 = vunpack.c.l.b16 %v1540
      %v2634 = vunpack.c.l.b16 %v1543
      %v2635 = vunpack.c.l.b16 %v1547
      %v2636 = vunpack.c.l.b16 %v1550
      %v2637 = vunpack.c.l.b16 %v1554
      %v2638 = vunpack.c.l.b16 %v1557
      %v2639 = vunpack.c.l.b16 %v1561
      %v2640 = vunpack.c.l.b16 %v1564
      %v2641 = vunpack.c.l.b16 %v1568
      %v2642 = vunpack.c.l.b16 %v1571
      %v2643 = vunpack.c.l.b16 %v1575
      %v2644 = vunpack.c.l.b16 %v1578
      %v2645 = vunpack.c.l.b16 %v1582
      %v2646 = vunpack.c.l.b16 %v1585
      %v2647 = vunpack.c.l.b16 %v1589
      %v2648 = vunpack.c.l.b16 %v1592
      %v2649 = vunpack.c.l.b16 %v1596
      %v2650 = vunpack.c.l.b16 %v1599
      %v2651 = vunpack.c.l.b16 %v1603
      %v2652 = vunpack.c.l.b16 %v1606
      %v2653 = vunpack.c.l.b16 %v1610
      %v2654 = vunpack.c.l.b16 %v1613
      %v2655 = vpack.c.b16 %v2624, %v2623
      %v2656 = vpack.c.b16 %v2626, %v2625
      %v2657 = vpack.c.b16 %v2628, %v2627
      %v2658 = vpack.c.b16 %v2630, %v2629
      %v2659 = vpack.c.b16 %v2632, %v2631
      %v2660 = vpack.c.b16 %v2634, %v2633
      %v2661 = vpack.c.b16 %v2636, %v2635
      %v2662 = vpack.c.b16 %v2638, %v2637
      %v2663 = vpack.c.b16 %v2640, %v2639
      %v2664 = vpack.c.b16 %v2642, %v2641
      %v2665 = vpack.c.b16 %v2644, %v2643
      %v2666 = vpack.c.b16 %v2646, %v2645
      %v2667 = vpack.c.b16 %v2648, %v2647
      %v2668 = vpack.c.b16 %v2650, %v2649
      %v2669 = vpack.c.b16 %v2652, %v2651
      %v2670 = vpack.c.b16 %v2654, %v2653
      %2671 = vrot.lane.b32.xlu0 %v2655, 20
      %v2672 = vpop.permute.xlu0 %2671
      %2673 = vrot.lane.b32.xlu0 %v2656, 20
      %v2674 = vpop.permute.xlu0 %2673
      %2675 = vrot.lane.b32.xlu0 %v2657, 20
      %v2676 = vpop.permute.xlu0 %2675
      %2677 = vrot.lane.b32.xlu0 %v2658, 20
      %v2678 = vpop.permute.xlu0 %2677
      %2679 = vrot.lane.b32.xlu0 %v2659, 20
      %v2680 = vpop.permute.xlu0 %2679
      %2681 = vrot.lane.b32.xlu0 %v2660, 20
      %v2682 = vpop.permute.xlu0 %2681
      %2683 = vrot.lane.b32.xlu0 %v2661, 20
      %v2684 = vpop.permute.xlu0 %2683
      %2685 = vrot.lane.b32.xlu0 %v2662, 20
      %v2686 = vpop.permute.xlu0 %2685
      %2687 = vrot.lane.b32.xlu0 %v2663, 20
      %v2688 = vpop.permute.xlu0 %2687
      %2689 = vrot.lane.b32.xlu0 %v2664, 20
      %v2690 = vpop.permute.xlu0 %2689
      %2691 = vrot.lane.b32.xlu0 %v2665, 20
      %v2692 = vpop.permute.xlu0 %2691
      %2693 = vrot.lane.b32.xlu0 %v2666, 20
      %v2694 = vpop.permute.xlu0 %2693
      %2695 = vrot.lane.b32.xlu0 %v2667, 20
      %v2696 = vpop.permute.xlu0 %2695
      %2697 = vrot.lane.b32.xlu0 %v2668, 20
      %v2698 = vpop.permute.xlu0 %2697
      %2699 = vrot.lane.b32.xlu0 %v2669, 20
      %v2700 = vpop.permute.xlu0 %2699
      %2701 = vrot.lane.b32.xlu0 %v2670, 20
      %v2702 = vpop.permute.xlu0 %2701
      %v2719 = vunpack.c.l.b16 %v1615
      %v2720 = vunpack.c.l.b16 %v1616
      %v2721 = vunpack.c.l.b16 %v1617
      %v2722 = vunpack.c.l.b16 %v1618
      %v2723 = vunpack.c.l.b16 %v1619
      %v2724 = vunpack.c.l.b16 %v1620
      %v2725 = vunpack.c.l.b16 %v1621
      %v2726 = vunpack.c.l.b16 %v1622
      %v2727 = vunpack.c.l.b16 %v1623
      %v2728 = vunpack.c.l.b16 %v1624
      %v2729 = vunpack.c.l.b16 %v1625
      %v2730 = vunpack.c.l.b16 %v1626
      %v2731 = vunpack.c.l.b16 %v1627
      %v2732 = vunpack.c.l.b16 %v1628
      %v2733 = vunpack.c.l.b16 %v1629
      %v2734 = vunpack.c.l.b16 %v1630
      %v2735 = vunpack.c.l.b16 %v1631
      %v2736 = vunpack.c.l.b16 %v1632
      %v2737 = vunpack.c.l.b16 %v1633
      %v2738 = vunpack.c.l.b16 %v1634
      %v2739 = vunpack.c.l.b16 %v1635
      %v2740 = vunpack.c.l.b16 %v1636
      %v2741 = vunpack.c.l.b16 %v1637
      %v2742 = vunpack.c.l.b16 %v1638
      %v2743 = vunpack.c.l.b16 %v1639
      %v2744 = vunpack.c.l.b16 %v1640
      %v2745 = vunpack.c.l.b16 %v1641
      %v2746 = vunpack.c.l.b16 %v1642
      %v2747 = vunpack.c.l.b16 %v1643
      %v2748 = vunpack.c.l.b16 %v1644
      %v2749 = vunpack.c.l.b16 %v1645
      %v2750 = vunpack.c.l.b16 %v1646
      %v2751 = vpack.c.b16 %v2720, %v2719
      %v2752 = vpack.c.b16 %v2722, %v2721
      %v2753 = vpack.c.b16 %v2724, %v2723
      %v2754 = vpack.c.b16 %v2726, %v2725
      %v2755 = vpack.c.b16 %v2728, %v2727
      %v2756 = vpack.c.b16 %v2730, %v2729
      %v2757 = vpack.c.b16 %v2732, %v2731
      %v2758 = vpack.c.b16 %v2734, %v2733
      %v2759 = vpack.c.b16 %v2736, %v2735
      %v2760 = vpack.c.b16 %v2738, %v2737
      %v2761 = vpack.c.b16 %v2740, %v2739
      %v2762 = vpack.c.b16 %v2742, %v2741
      %v2763 = vpack.c.b16 %v2744, %v2743
      %v2764 = vpack.c.b16 %v2746, %v2745
      %v2765 = vpack.c.b16 %v2748, %v2747
      %v2766 = vpack.c.b16 %v2750, %v2749
      %2767 = vrot.lane.b32.xlu0 %v2751, 24
      %v2768 = vpop.permute.xlu0 %2767
      %2769 = vrot.lane.b32.xlu0 %v2752, 24
      %v2770 = vpop.permute.xlu0 %2769
      %2771 = vrot.lane.b32.xlu0 %v2753, 24
      %v2772 = vpop.permute.xlu0 %2771
      %2773 = vrot.lane.b32.xlu0 %v2754, 24
      %v2774 = vpop.permute.xlu0 %2773
      %2775 = vrot.lane.b32.xlu0 %v2755, 24
      %v2776 = vpop.permute.xlu0 %2775
      %2777 = vrot.lane.b32.xlu0 %v2756, 24
      %v2778 = vpop.permute.xlu0 %2777
      %2779 = vrot.lane.b32.xlu0 %v2757, 24
      %v2780 = vpop.permute.xlu0 %2779
      %2781 = vrot.lane.b32.xlu0 %v2758, 24
      %v2782 = vpop.permute.xlu0 %2781
      %2783 = vrot.lane.b32.xlu0 %v2759, 24
      %v2784 = vpop.permute.xlu0 %2783
      %2785 = vrot.lane.b32.xlu0 %v2760, 24
      %v2786 = vpop.permute.xlu0 %2785
      %2787 = vrot.lane.b32.xlu0 %v2761, 24
      %v2788 = vpop.permute.xlu0 %2787
      %2789 = vrot.lane.b32.xlu0 %v2762, 24
      %v2790 = vpop.permute.xlu0 %2789
      %2791 = vrot.lane.b32.xlu0 %v2763, 24
      %v2792 = vpop.permute.xlu0 %2791
      %2793 = vrot.lane.b32.xlu0 %v2764, 24
      %v2794 = vpop.permute.xlu0 %2793
      %2795 = vrot.lane.b32.xlu0 %v2765, 24
      %v2796 = vpop.permute.xlu0 %2795
      %2797 = vrot.lane.b32.xlu0 %v2766, 24
      %v2798 = vpop.permute.xlu0 %2797
      %v2799 = vunpack.c.l.b16 %v1676
      %v2800 = vunpack.c.l.b16 %v1686
      %v2801 = vunpack.c.l.b16 %v1700
      %v2802 = vunpack.c.l.b16 %v1710
      %v2803 = vunpack.c.l.b16 %v1724
      %v2804 = vunpack.c.l.b16 %v1734
      %v2805 = vunpack.c.l.b16 %v1748
      %v2806 = vunpack.c.l.b16 %v1758
      %v2807 = vunpack.c.l.b16 %v1772
      %v2808 = vunpack.c.l.b16 %v1782
      %v2809 = vunpack.c.l.b16 %v1796
      %v2810 = vunpack.c.l.b16 %v1806
      %v2811 = vunpack.c.l.b16 %v1820
      %v2812 = vunpack.c.l.b16 %v1830
      %v2813 = vunpack.c.l.b16 %v1844
      %v2814 = vunpack.c.l.b16 %v1854
      %v2815 = vunpack.c.l.b16 %v1868
      %v2816 = vunpack.c.l.b16 %v1878
      %v2817 = vunpack.c.l.b16 %v1892
      %v2818 = vunpack.c.l.b16 %v1902
      %v2819 = vunpack.c.l.b16 %v1916
      %v2820 = vunpack.c.l.b16 %v1926
      %v2821 = vunpack.c.l.b16 %v1940
      %v2822 = vunpack.c.l.b16 %v1950
      %v2823 = vunpack.c.l.b16 %v1964
      %v2824 = vunpack.c.l.b16 %v1974
      %v2825 = vunpack.c.l.b16 %v1988
      %v2826 = vunpack.c.l.b16 %v1998
      %v2827 = vunpack.c.l.b16 %v2012
      %v2828 = vunpack.c.l.b16 %v2022
      %v2829 = vunpack.c.l.b16 %v2036
      %v2830 = vunpack.c.l.b16 %v2046
      %v2831 = vpack.c.b16 %v2800, %v2799
      %v2832 = vpack.c.b16 %v2802, %v2801
      %v2833 = vpack.c.b16 %v2804, %v2803
      %v2834 = vpack.c.b16 %v2806, %v2805
      %v2835 = vpack.c.b16 %v2808, %v2807
      %v2836 = vpack.c.b16 %v2810, %v2809
      %v2837 = vpack.c.b16 %v2812, %v2811
      %v2838 = vpack.c.b16 %v2814, %v2813
      %v2839 = vpack.c.b16 %v2816, %v2815
      %v2840 = vpack.c.b16 %v2818, %v2817
      %v2841 = vpack.c.b16 %v2820, %v2819
      %v2842 = vpack.c.b16 %v2822, %v2821
      %v2843 = vpack.c.b16 %v2824, %v2823
      %v2844 = vpack.c.b16 %v2826, %v2825
      %v2845 = vpack.c.b16 %v2828, %v2827
      %v2846 = vpack.c.b16 %v2830, %v2829
      %2847 = vrot.lane.b32.xlu0 %v2831, 28
      %v2848 = vpop.permute.xlu0 %2847
      %2849 = vrot.lane.b32.xlu0 %v2832, 28
      %v2850 = vpop.permute.xlu0 %2849
      %2851 = vrot.lane.b32.xlu0 %v2833, 28
      %v2852 = vpop.permute.xlu0 %2851
      %2853 = vrot.lane.b32.xlu0 %v2834, 28
      %v2854 = vpop.permute.xlu0 %2853
      %2855 = vrot.lane.b32.xlu0 %v2835, 28
      %v2856 = vpop.permute.xlu0 %2855
      %2857 = vrot.lane.b32.xlu0 %v2836, 28
      %v2858 = vpop.permute.xlu0 %2857
      %2859 = vrot.lane.b32.xlu0 %v2837, 28
      %v2860 = vpop.permute.xlu0 %2859
      %2861 = vrot.lane.b32.xlu0 %v2838, 28
      %v2862 = vpop.permute.xlu0 %2861
      %2863 = vrot.lane.b32.xlu0 %v2839, 28
      %v2864 = vpop.permute.xlu0 %2863
      %2865 = vrot.lane.b32.xlu0 %v2840, 28
      %v2866 = vpop.permute.xlu0 %2865
      %2867 = vrot.lane.b32.xlu0 %v2841, 28
      %v2868 = vpop.permute.xlu0 %2867
      %2869 = vrot.lane.b32.xlu0 %v2842, 28
      %v2870 = vpop.permute.xlu0 %2869
      %2871 = vrot.lane.b32.xlu0 %v2843, 28
      %v2872 = vpop.permute.xlu0 %2871
      %2873 = vrot.lane.b32.xlu0 %v2844, 28
      %v2874 = vpop.permute.xlu0 %2873
      %2875 = vrot.lane.b32.xlu0 %v2845, 28
      %v2876 = vpop.permute.xlu0 %2875
      %2877 = vrot.lane.b32.xlu0 %v2846, 28
      %v2878 = vpop.permute.xlu0 %2877
      %v2879 = vunpack.c.l.b16 %v2114
      %v2880 = vunpack.c.l.b16 %v2117
      %v2881 = vunpack.c.l.b16 %v2121
      %v2882 = vunpack.c.l.b16 %v2124
      %v2883 = vunpack.c.l.b16 %v2128
      %v2884 = vunpack.c.l.b16 %v2131
      %v2885 = vunpack.c.l.b16 %v2135
      %v2886 = vunpack.c.l.b16 %v2138
      %v2887 = vunpack.c.l.b16 %v2142
      %v2888 = vunpack.c.l.b16 %v2145
      %v2889 = vunpack.c.l.b16 %v2149
      %v2890 = vunpack.c.l.b16 %v2152
      %v2891 = vunpack.c.l.b16 %v2156
      %v2892 = vunpack.c.l.b16 %v2159
      %v2893 = vunpack.c.l.b16 %v2163
      %v2894 = vunpack.c.l.b16 %v2166
      %v2895 = vunpack.c.l.b16 %v2170
      %v2896 = vunpack.c.l.b16 %v2173
      %v2897 = vunpack.c.l.b16 %v2177
      %v2898 = vunpack.c.l.b16 %v2180
      %v2899 = vunpack.c.l.b16 %v2184
      %v2900 = vunpack.c.l.b16 %v2187
      %v2901 = vunpack.c.l.b16 %v2191
      %v2902 = vunpack.c.l.b16 %v2194
      %v2903 = vunpack.c.l.b16 %v2198
      %v2904 = vunpack.c.l.b16 %v2201
      %v2905 = vunpack.c.l.b16 %v2205
      %v2906 = vunpack.c.l.b16 %v2208
      %v2907 = vunpack.c.l.b16 %v2212
      %v2908 = vunpack.c.l.b16 %v2215
      %v2909 = vunpack.c.l.b16 %v2219
      %v2910 = vunpack.c.l.b16 %v2222
      %v2911 = vpack.c.b16 %v2880, %v2879
      %v2912 = vpack.c.b16 %v2882, %v2881
      %v2913 = vpack.c.b16 %v2884, %v2883
      %v2914 = vpack.c.b16 %v2886, %v2885
      %v2915 = vpack.c.b16 %v2888, %v2887
      %v2916 = vpack.c.b16 %v2890, %v2889
      %v2917 = vpack.c.b16 %v2892, %v2891
      %v2918 = vpack.c.b16 %v2894, %v2893
      %v2919 = vpack.c.b16 %v2896, %v2895
      %v2920 = vpack.c.b16 %v2898, %v2897
      %v2921 = vpack.c.b16 %v2900, %v2899
      %v2922 = vpack.c.b16 %v2902, %v2901
      %v2923 = vpack.c.b16 %v2904, %v2903
      %v2924 = vpack.c.b16 %v2906, %v2905
      %v2925 = vpack.c.b16 %v2908, %v2907
      %v2926 = vpack.c.b16 %v2910, %v2909
      %2927 = vrot.lane.b32.xlu0 %v2911, 32
      %v2928 = vpop.permute.xlu0 %2927
      %2929 = vrot.lane.b32.xlu0 %v2912, 32
      %v2930 = vpop.permute.xlu0 %2929
      %2931 = vrot.lane.b32.xlu0 %v2913, 32
      %v2932 = vpop.permute.xlu0 %2931
      %2933 = vrot.lane.b32.xlu0 %v2914, 32
      %v2934 = vpop.permute.xlu0 %2933
      %2935 = vrot.lane.b32.xlu0 %v2915, 32
      %v2936 = vpop.permute.xlu0 %2935
      %2937 = vrot.lane.b32.xlu0 %v2916, 32
      %v2938 = vpop.permute.xlu0 %2937
      %2939 = vrot.lane.b32.xlu0 %v2917, 32
      %v2940 = vpop.permute.xlu0 %2939
      %2941 = vrot.lane.b32.xlu0 %v2918, 32
      %v2942 = vpop.permute.xlu0 %2941
      %2943 = vrot.lane.b32.xlu0 %v2919, 32
      %v2944 = vpop.permute.xlu0 %2943
      %2945 = vrot.lane.b32.xlu0 %v2920, 32
      %v2946 = vpop.permute.xlu0 %2945
      %2947 = vrot.lane.b32.xlu0 %v2921, 32
      %v2948 = vpop.permute.xlu0 %2947
      %2949 = vrot.lane.b32.xlu0 %v2922, 32
      %v2950 = vpop.permute.xlu0 %2949
      %2951 = vrot.lane.b32.xlu0 %v2923, 32
      %v2952 = vpop.permute.xlu0 %2951
      %2953 = vrot.lane.b32.xlu0 %v2924, 32
      %v2954 = vpop.permute.xlu0 %2953
      %2955 = vrot.lane.b32.xlu0 %v2925, 32
      %v2956 = vpop.permute.xlu0 %2955
      %2957 = vrot.lane.b32.xlu0 %v2926, 32
      %v2958 = vpop.permute.xlu0 %2957
      %vm2959 = vcmask 31744
      %v2962 = vsel %vm2959, %v2271, %v2336
      %v2965 = vsel %vm2959, %v2272, %v2338
      %v2968 = vsel %vm2959, %v2273, %v2340
      %v2971 = vsel %vm2959, %v2274, %v2342
      %v2974 = vsel %vm2959, %v2275, %v2344
      %v2977 = vsel %vm2959, %v2276, %v2346
      %v2980 = vsel %vm2959, %v2277, %v2348
      %v2983 = vsel %vm2959, %v2278, %v2350
      %v2986 = vsel %vm2959, %v2279, %v2352
      %v2989 = vsel %vm2959, %v2280, %v2354
      %v2992 = vsel %vm2959, %v2281, %v2356
      %v2995 = vsel %vm2959, %v2282, %v2358
      %v2998 = vsel %vm2959, %v2283, %v2360
      %v3001 = vsel %vm2959, %v2284, %v2362
      %v3004 = vsel %vm2959, %v2285, %v2364
      %v3007 = vsel %vm2959, %v2286, %v2366
      %vm3008 = vcmask 64512
      %v3010 = vsel %vm3008, %v2962, %v2416
      %v3012 = vsel %vm3008, %v2965, %v2418
      %v3014 = vsel %vm3008, %v2968, %v2420
      %v3016 = vsel %vm3008, %v2971, %v2422
      %v3018 = vsel %vm3008, %v2974, %v2424
      %v3020 = vsel %vm3008, %v2977, %v2426
      %v3022 = vsel %vm3008, %v2980, %v2428
      %v3024 = vsel %vm3008, %v2983, %v2430
      %v3026 = vsel %vm3008, %v2986, %v2432
      %v3028 = vsel %vm3008, %v2989, %v2434
      %v3030 = vsel %vm3008, %v2992, %v2436
      %v3032 = vsel %vm3008, %v2995, %v2438
      %v3034 = vsel %vm3008, %v2998, %v2440
      %v3036 = vsel %vm3008, %v3001, %v2442
      %v3038 = vsel %vm3008, %v3004, %v2444
      %v3040 = vsel %vm3008, %v3007, %v2446
      %vm3041 = vcmask 97280
      %v3043 = vsel %vm3041, %v3010, %v2512
      %v3045 = vsel %vm3041, %v3012, %v2514
      %v3047 = vsel %vm3041, %v3014, %v2516
      %v3049 = vsel %vm3041, %v3016, %v2518
      %v3051 = vsel %vm3041, %v3018, %v2520
      %v3053 = vsel %vm3041, %v3020, %v2522
      %v3055 = vsel %vm3041, %v3022, %v2524
      %v3057 = vsel %vm3041, %v3024, %v2526
      %v3059 = vsel %vm3041, %v3026, %v2528
      %v3061 = vsel %vm3041, %v3028, %v2530
      %v3063 = vsel %vm3041, %v3030, %v2532
      %v3065 = vsel %vm3041, %v3032, %v2534
      %v3067 = vsel %vm3041, %v3034, %v2536
      %v3069 = vsel %vm3041, %v3036, %v2538
      %v3071 = vsel %vm3041, %v3038, %v2540
      %v3073 = vsel %vm3041, %v3040, %v2542
      %vm3074 = vcmask 130048
      %v3076 = vsel %vm3074, %v3043, %v2592
      %v3078 = vsel %vm3074, %v3045, %v2594
      %v3080 = vsel %vm3074, %v3047, %v2596
      %v3082 = vsel %vm3074, %v3049, %v2598
      %v3084 = vsel %vm3074, %v3051, %v2600
      %v3086 = vsel %vm3074, %v3053, %v2602
      %v3088 = vsel %vm3074, %v3055, %v2604
      %v3090 = vsel %vm3074, %v3057, %v2606
      %v3092 = vsel %vm3074, %v3059, %v2608
      %v3094 = vsel %vm3074, %v3061, %v2610
      %v3096 = vsel %vm3074, %v3063, %v2612
      %v3098 = vsel %vm3074, %v3065, %v2614
      %v3100 = vsel %vm3074, %v3067, %v2616
      %v3102 = vsel %vm3074, %v3069, %v2618
      %v3104 = vsel %vm3074, %v3071, %v2620
      %v3106 = vsel %vm3074, %v3073, %v2622
      %vm3107 = vcmask 162816
      %v3109 = vsel %vm3107, %v3076, %v2672
      %v3111 = vsel %vm3107, %v3078, %v2674
      %v3113 = vsel %vm3107, %v3080, %v2676
      %v3115 = vsel %vm3107, %v3082, %v2678
      %v3117 = vsel %vm3107, %v3084, %v2680
      %v3119 = vsel %vm3107, %v3086, %v2682
      %v3121 = vsel %vm3107, %v3088, %v2684
      %v3123 = vsel %vm3107, %v3090, %v2686
      %v3125 = vsel %vm3107, %v3092, %v2688
      %v3127 = vsel %vm3107, %v3094, %v2690
      %v3129 = vsel %vm3107, %v3096, %v2692
      %v3131 = vsel %vm3107, %v3098, %v2694
      %v3133 = vsel %vm3107, %v3100, %v2696
      %v3135 = vsel %vm3107, %v3102, %v2698
      %v3137 = vsel %vm3107, %v3104, %v2700
      %v3139 = vsel %vm3107, %v3106, %v2702
      %vm3140 = vcmask 195584
      %v3142 = vsel %vm3140, %v3109, %v2768
      %v3144 = vsel %vm3140, %v3111, %v2770
      %v3146 = vsel %vm3140, %v3113, %v2772
      %v3148 = vsel %vm3140, %v3115, %v2774
      %v3150 = vsel %vm3140, %v3117, %v2776
      %v3152 = vsel %vm3140, %v3119, %v2778
      %v3154 = vsel %vm3140, %v3121, %v2780
      %v3156 = vsel %vm3140, %v3123, %v2782
      %v3158 = vsel %vm3140, %v3125, %v2784
      %v3160 = vsel %vm3140, %v3127, %v2786
      %v3162 = vsel %vm3140, %v3129, %v2788
      %v3164 = vsel %vm3140, %v3131, %v2790
      %v3166 = vsel %vm3140, %v3133, %v2792
      %v3168 = vsel %vm3140, %v3135, %v2794
      %v3170 = vsel %vm3140, %v3137, %v2796
      %v3172 = vsel %vm3140, %v3139, %v2798
      %vm3173 = vcmask 228352
      %v3175 = vsel %vm3173, %v3142, %v2848
      %v3177 = vsel %vm3173, %v3144, %v2850
      %v3179 = vsel %vm3173, %v3146, %v2852
      %v3181 = vsel %vm3173, %v3148, %v2854
      %v3183 = vsel %vm3173, %v3150, %v2856
      %v3185 = vsel %vm3173, %v3152, %v2858
      %v3187 = vsel %vm3173, %v3154, %v2860
      %v3189 = vsel %vm3173, %v3156, %v2862
      %v3191 = vsel %vm3173, %v3158, %v2864
      %v3193 = vsel %vm3173, %v3160, %v2866
      %v3195 = vsel %vm3173, %v3162, %v2868
      %v3197 = vsel %vm3173, %v3164, %v2870
      %v3199 = vsel %vm3173, %v3166, %v2872
      %v3201 = vsel %vm3173, %v3168, %v2874
      %v3203 = vsel %vm3173, %v3170, %v2876
      %v3205 = vsel %vm3173, %v3172, %v2878
      %vm3206 = vcmask 261120
      %v3208 = vsel %vm3206, %v3175, %v2928
      %v3210 = vsel %vm3206, %v3177, %v2930
      %v3212 = vsel %vm3206, %v3179, %v2932
      %v3214 = vsel %vm3206, %v3181, %v2934
      %v3216 = vsel %vm3206, %v3183, %v2936
      %v3218 = vsel %vm3206, %v3185, %v2938
      %v3220 = vsel %vm3206, %v3187, %v2940
      %v3222 = vsel %vm3206, %v3189, %v2942
      %v3224 = vsel %vm3206, %v3191, %v2944
      %v3226 = vsel %vm3206, %v3193, %v2946
      %v3228 = vsel %vm3206, %v3195, %v2948
      %v3230 = vsel %vm3206, %v3197, %v2950
      %v3232 = vsel %vm3206, %v3199, %v2952
      %v3234 = vsel %vm3206, %v3201, %v2954
      %v3236 = vsel %vm3206, %v3203, %v2956
      %v3238 = vsel %vm3206, %v3205, %v2958
      %v3239 = vld [vmem:[%s1] sm:$0xf]
      %v3240 = vld [vmem:[%s1 + $0x4] sm:$0xf]
      %v3241 = vld [vmem:[%s1 + $0x8] sm:$0xf]
      %v3242 = vld [vmem:[%s1 + $0xc] sm:$0xf]
      %v3243 = vld [vmem:[%s1 + $0x10] sm:$0x3]
      %v3249 = vunpack.c.l.b16 %v3239
      %v3250 = vunpack.c.l.b16 %v3240
      %v3251 = vunpack.c.l.b16 %v3241
      %v3252 = vunpack.c.l.b16 %v3242
      %v3253 = vunpack.c.l.b16 %v3243
      %v3254 = vpack.c.b16 %v3250, %v3249
      %v3255 = vpack.c.b16 %v3252, %v3251
      %v3256 = vpack.c.b16 %v3253, %v3253
      %vm3259 = vcmask 293888
      %v3260 = vsel %vm3259, %v3208, 0
      %v3262 = vsel %vm3259, %v3210, 0
      %v3264 = vsel %vm3259, %v3212, 0
      %v3266 = vsel %vm3259, %v3214, 0
      %v3268 = vsel %vm3259, %v3216, 0
      %v3270 = vsel %vm3259, %v3218, 0
      %v3272 = vsel %vm3259, %v3220, 0
      %v3274 = vsel %vm3259, %v3222, 0
      %v3276 = vsel %vm3259, %v3224, 0
      %v3278 = vsel %vm3259, %v3226, 0
      %v3280 = vsel %vm3259, %v3228, 0
      %v3282 = vsel %vm3259, %v3230, 0
      %v3284 = vsel %vm3259, %v3232, 0
      %v3286 = vsel %vm3259, %v3234, 0
      %v3288 = vsel %vm3259, %v3236, 0
      %v3290 = vsel %vm3259, %v3238, 0
      %vm3292 = vcmask 1041408
      %v3294 = vsel %vm3292, %v3256, 0
      %3296 = vmatprep.subr.bf16.mxu0 0
      %3297 = vmatpush1.bf16.msra.mxu0 0
      %3298 = vmatprep.subr.bf16.mxu0 0
      %3299 = vmatpush1.bf16.msra.mxu0 0
      %3300 = vmatprep.subr.bf16.mxu0 0
      %3301 = vmatpush1.bf16.msra.mxu0 0
      %3302 = vmatprep.subr.bf16.mxu0 0
      %3303 = vmatpush1.bf16.msra.mxu0 0
      %3304 = vmatprep.subr.bf16.mxu0 0
      %3305 = vmatpush1.bf16.msra.mxu0 0
      %3306 = vmatprep.subr.bf16.mxu0 0
      %3307 = vmatpush1.bf16.msra.mxu0 %v3294
      %3308 = vmatprep.subr.bf16.mxu0 0
      %3309 = vmatpush1.bf16.msra.mxu0 %v3255
      %3310 = vmatprep.subr.bf16.mxu0 0
      %3311 = vmatpush1.bf16.msra.mxu0 %v3254
      %3312 = vmatprep.subr.bf16.mxu0 0
      %3313 = vmatpush2.bf16.msra.mxu0 0
      %3314 = vmatprep.subr.bf16.mxu0 0
      %3315 = vmatpush2.bf16.msra.mxu0 0
      %3316 = vmatprep.subr.bf16.mxu0 0
      %3317 = vmatpush2.bf16.msra.mxu0 0
      %3318 = vmatprep.subr.bf16.mxu0 0
      %3319 = vmatpush2.bf16.msra.mxu0 0
      %3320 = vmatprep.subr.bf16.mxu0 0
      %3321 = vmatpush2.bf16.msra.mxu0 0
      %3322 = vmatprep.subr.bf16.mxu0 0
      %3323 = vmatpush2.bf16.msra.mxu0 0
      %3324 = vmatprep.subr.bf16.mxu0 0
      %3325 = vmatpush2.bf16.msra.mxu0 0
      %3326 = vmatprep.subr.bf16.mxu0 0
      %3327 = vmatpush2.bf16.msra.mxu0 0
      %3328 = vmatprep.mubr.bf16.mxu0 0
      %3329 = vmatmul.mubr.bf16.gmra.mxu0 %v3260
      %v3330 = vpop.f32.mrf.mxu0
      %v3331 = vadd.f32 0.0, %v3330
      %v3332 = vpop.f32.mrf.mxu0
      %v3333 = vpop.f32.mrf.mxu0
      %v3334 = vadd.f32 0.0, %v3333
      %v3335 = vpop.f32.mrf.mxu0
      %3336 = vmatprep.mubr.bf16.mxu0 0
      %3337 = vmatmul.mubr.bf16.gmra.mxu0 %v3262
      %v3338 = vpop.f32.mrf.mxu0
      %v3339 = vadd.f32 0.0, %v3338
      %v3340 = vpop.f32.mrf.mxu0
      %v3341 = vpop.f32.mrf.mxu0
      %v3342 = vadd.f32 0.0, %v3341
      %v3343 = vpop.f32.mrf.mxu0
      %3344 = vmatprep.mubr.bf16.mxu0 0
      %3345 = vmatmul.mubr.bf16.gmra.mxu0 %v3264
      %v3346 = vpop.f32.mrf.mxu0
      %v3347 = vadd.f32 0.0, %v3346
      %v3348 = vpop.f32.mrf.mxu0
      %v3349 = vpop.f32.mrf.mxu0
      %v3350 = vadd.f32 0.0, %v3349
      %v3351 = vpop.f32.mrf.mxu0
      %3352 = vmatprep.mubr.bf16.mxu0 0
      %3353 = vmatmul.mubr.bf16.gmra.mxu0 %v3266
      %v3354 = vpop.f32.mrf.mxu0
      %v3355 = vadd.f32 0.0, %v3354
      %v3356 = vpop.f32.mrf.mxu0
      %v3357 = vpop.f32.mrf.mxu0
      %v3358 = vadd.f32 0.0, %v3357
      %v3359 = vpop.f32.mrf.mxu0
      %3360 = vmatprep.mubr.bf16.mxu0 0
      %3361 = vmatmul.mubr.bf16.gmra.mxu0 %v3268
      %v3362 = vpop.f32.mrf.mxu0
      %v3363 = vadd.f32 0.0, %v3362
      %v3364 = vpop.f32.mrf.mxu0
      %v3365 = vpop.f32.mrf.mxu0
      %v3366 = vadd.f32 0.0, %v3365
      %v3367 = vpop.f32.mrf.mxu0
      %3368 = vmatprep.mubr.bf16.mxu0 0
      %3369 = vmatmul.mubr.bf16.gmra.mxu0 %v3270
      %v3370 = vpop.f32.mrf.mxu0
      %v3371 = vadd.f32 0.0, %v3370
      %v3372 = vpop.f32.mrf.mxu0
      %v3373 = vpop.f32.mrf.mxu0
      %v3374 = vadd.f32 0.0, %v3373
      %v3375 = vpop.f32.mrf.mxu0
      %3376 = vmatprep.mubr.bf16.mxu0 0
      %3377 = vmatmul.mubr.bf16.gmra.mxu0 %v3272
      %v3378 = vpop.f32.mrf.mxu0
      %v3379 = vadd.f32 0.0, %v3378
      %v3380 = vpop.f32.mrf.mxu0
      %v3381 = vpop.f32.mrf.mxu0
      %v3382 = vadd.f32 0.0, %v3381
      %v3383 = vpop.f32.mrf.mxu0
      %3384 = vmatprep.mubr.bf16.mxu0 0
      %3385 = vmatmul.mubr.bf16.gmra.mxu0 %v3274
      %v3386 = vpop.f32.mrf.mxu0
      %v3387 = vadd.f32 0.0, %v3386
      %v3388 = vpop.f32.mrf.mxu0
      %v3389 = vpop.f32.mrf.mxu0
      %v3390 = vadd.f32 0.0, %v3389
      %v3391 = vpop.f32.mrf.mxu0
      %3392 = vmatprep.mubr.bf16.mxu0 0
      %3393 = vmatmul.mubr.bf16.gmra.mxu0 %v3276
      %v3394 = vpop.f32.mrf.mxu0
      %v3395 = vadd.f32 0.0, %v3394
      %v3396 = vpop.f32.mrf.mxu0
      %v3397 = vpop.f32.mrf.mxu0
      %v3398 = vadd.f32 0.0, %v3397
      %v3399 = vpop.f32.mrf.mxu0
      %3400 = vmatprep.mubr.bf16.mxu0 0
      %3401 = vmatmul.mubr.bf16.gmra.mxu0 %v3278
      %v3402 = vpop.f32.mrf.mxu0
      %v3403 = vadd.f32 0.0, %v3402
      %v3404 = vpop.f32.mrf.mxu0
      %v3405 = vpop.f32.mrf.mxu0
      %v3406 = vadd.f32 0.0, %v3405
      %v3407 = vpop.f32.mrf.mxu0
      %3408 = vmatprep.mubr.bf16.mxu0 0
      %3409 = vmatmul.mubr.bf16.gmra.mxu0 %v3280
      %v3410 = vpop.f32.mrf.mxu0
      %v3411 = vadd.f32 0.0, %v3410
      %v3412 = vpop.f32.mrf.mxu0
      %v3413 = vpop.f32.mrf.mxu0
      %v3414 = vadd.f32 0.0, %v3413
      %v3415 = vpop.f32.mrf.mxu0
      %3416 = vmatprep.mubr.bf16.mxu0 0
      %3417 = vmatmul.mubr.bf16.gmra.mxu0 %v3282
      %v3418 = vpop.f32.mrf.mxu0
      %v3419 = vadd.f32 0.0, %v3418
      %v3420 = vpop.f32.mrf.mxu0
      %v3421 = vpop.f32.mrf.mxu0
      %v3422 = vadd.f32 0.0, %v3421
      %v3423 = vpop.f32.mrf.mxu0
      %3424 = vmatprep.mubr.bf16.mxu0 0
      %3425 = vmatmul.mubr.bf16.gmra.mxu0 %v3284
      %v3426 = vpop.f32.mrf.mxu0
      %v3427 = vadd.f32 0.0, %v3426
      %v3428 = vpop.f32.mrf.mxu0
      %v3429 = vpop.f32.mrf.mxu0
      %v3430 = vadd.f32 0.0, %v3429
      %v3431 = vpop.f32.mrf.mxu0
      %3432 = vmatprep.mubr.bf16.mxu0 0
      %3433 = vmatmul.mubr.bf16.gmra.mxu0 %v3286
      %v3434 = vpop.f32.mrf.mxu0
      %v3435 = vadd.f32 0.0, %v3434
      %v3436 = vpop.f32.mrf.mxu0
      %v3437 = vpop.f32.mrf.mxu0
      %v3438 = vadd.f32 0.0, %v3437
      %v3439 = vpop.f32.mrf.mxu0
      %3440 = vmatprep.mubr.bf16.mxu0 0
      %3441 = vmatmul.mubr.bf16.gmra.mxu0 %v3288
      %v3442 = vpop.f32.mrf.mxu0
      %v3443 = vadd.f32 0.0, %v3442
      %v3444 = vpop.f32.mrf.mxu0
      %v3445 = vpop.f32.mrf.mxu0
      %v3446 = vadd.f32 0.0, %v3445
      %v3447 = vpop.f32.mrf.mxu0
      %3448 = vmatprep.mubr.bf16.mxu0 0
      %3449 = vmatmul.mubr.bf16.gmra.mxu0 %v3290
      %v3450 = vpop.f32.mrf.mxu0
      %v3451 = vadd.f32 0.0, %v3450
      %v3452 = vpop.f32.mrf.mxu0
      %v3453 = vpop.f32.mrf.mxu0
      %v3454 = vadd.f32 0.0, %v3453
      %v3455 = vpop.f32.mrf.mxu0
      %3456 = vdwg.mxu0
      %v3457 = vld [vmem:[%s2] sm:$0x1]
      %v3459 = vlaneseq
      %v3460 = vshrl.u32 %v3459, 7
      %v3461 = vsub.s32 0, %v3460
      %v3462 = vrot.slane %v3457, %v3461
      %v3464 = vmul.f32 %v3331, %v3462
      %v3465 = vmul.f32 %v3334, %v3462
      %v3466 = vmul.f32 %v3339, %v3462
      %v3467 = vmul.f32 %v3342, %v3462
      %v3468 = vmul.f32 %v3347, %v3462
      %v3469 = vmul.f32 %v3350, %v3462
      %v3470 = vmul.f32 %v3355, %v3462
      %v3471 = vmul.f32 %v3358, %v3462
      %v3472 = vmul.f32 %v3363, %v3462
      %v3473 = vmul.f32 %v3366, %v3462
      %v3474 = vmul.f32 %v3371, %v3462
      %v3475 = vmul.f32 %v3374, %v3462
      %v3476 = vmul.f32 %v3379, %v3462
      %v3477 = vmul.f32 %v3382, %v3462
      %v3478 = vmul.f32 %v3387, %v3462
      %v3479 = vmul.f32 %v3390, %v3462
      %v3480 = vmul.f32 %v3395, %v3462
      %v3481 = vmul.f32 %v3398, %v3462
      %v3482 = vmul.f32 %v3403, %v3462
      %v3483 = vmul.f32 %v3406, %v3462
      %v3484 = vmul.f32 %v3411, %v3462
      %v3485 = vmul.f32 %v3414, %v3462
      %v3486 = vmul.f32 %v3419, %v3462
      %v3487 = vmul.f32 %v3422, %v3462
      %v3488 = vmul.f32 %v3427, %v3462
      %v3489 = vmul.f32 %v3430, %v3462
      %v3490 = vmul.f32 %v3435, %v3462
      %v3491 = vmul.f32 %v3438, %v3462
      %v3492 = vmul.f32 %v3443, %v3462
      %v3493 = vmul.f32 %v3446, %v3462
      %v3494 = vmul.f32 %v3451, %v3462
      %v3495 = vmul.f32 %v3454, %v3462
      %v3496 = vld [vmem:[%s3] sm:$0x1]
      %v3498 = vlaneseq
      %v3499 = vshrl.u32 %v3498, 7
      %v3500 = vsub.s32 0, %v3499
      %v3501 = vrot.slane %v3496, %v3500
      %v3503 = vadd.f32 %v3464, %v3501
      %v3504 = vadd.f32 %v3465, %v3501
      %v3505 = vadd.f32 %v3466, %v3501
      %v3506 = vadd.f32 %v3467, %v3501
      %v3507 = vadd.f32 %v3468, %v3501
      %v3508 = vadd.f32 %v3469, %v3501
      %v3509 = vadd.f32 %v3470, %v3501
      %v3510 = vadd.f32 %v3471, %v3501
      %v3511 = vadd.f32 %v3472, %v3501
      %v3512 = vadd.f32 %v3473, %v3501
      %v3513 = vadd.f32 %v3474, %v3501
      %v3514 = vadd.f32 %v3475, %v3501
      %v3515 = vadd.f32 %v3476, %v3501
      %v3516 = vadd.f32 %v3477, %v3501
      %v3517 = vadd.f32 %v3478, %v3501
      %v3518 = vadd.f32 %v3479, %v3501
      %v3519 = vadd.f32 %v3480, %v3501
      %v3520 = vadd.f32 %v3481, %v3501
      %v3521 = vadd.f32 %v3482, %v3501
      %v3522 = vadd.f32 %v3483, %v3501
      %v3523 = vadd.f32 %v3484, %v3501
      %v3524 = vadd.f32 %v3485, %v3501
      %v3525 = vadd.f32 %v3486, %v3501
      %v3526 = vadd.f32 %v3487, %v3501
      %v3527 = vadd.f32 %v3488, %v3501
      %v3528 = vadd.f32 %v3489, %v3501
      %v3529 = vadd.f32 %v3490, %v3501
      %v3530 = vadd.f32 %v3491, %v3501
      %v3531 = vadd.f32 %v3492, %v3501
      %v3532 = vadd.f32 %v3493, %v3501
      %v3533 = vadd.f32 %v3494, %v3501
      %v3534 = vadd.f32 %v3495, %v3501
      %v3535 = vmax.f32 %v3503, 0.0
      %v3536 = vmax.f32 %v3504, 0.0
      %v3537 = vmax.f32 %v3505, 0.0
      %v3538 = vmax.f32 %v3506, 0.0
      %v3539 = vmax.f32 %v3507, 0.0
      %v3540 = vmax.f32 %v3508, 0.0
      %v3541 = vmax.f32 %v3509, 0.0
      %v3542 = vmax.f32 %v3510, 0.0
      %v3543 = vmax.f32 %v3511, 0.0
      %v3544 = vmax.f32 %v3512, 0.0
      %v3545 = vmax.f32 %v3513, 0.0
      %v3546 = vmax.f32 %v3514, 0.0
      %v3547 = vmax.f32 %v3515, 0.0
      %v3548 = vmax.f32 %v3516, 0.0
      %v3549 = vmax.f32 %v3517, 0.0
      %v3550 = vmax.f32 %v3518, 0.0
      %v3551 = vmax.f32 %v3519, 0.0
      %v3552 = vmax.f32 %v3520, 0.0
      %v3553 = vmax.f32 %v3521, 0.0
      %v3554 = vmax.f32 %v3522, 0.0
      %v3555 = vmax.f32 %v3523, 0.0
      %v3556 = vmax.f32 %v3524, 0.0
      %v3557 = vmax.f32 %v3525, 0.0
      %v3558 = vmax.f32 %v3526, 0.0
      %v3559 = vmax.f32 %v3527, 0.0
      %v3560 = vmax.f32 %v3528, 0.0
      %v3561 = vmax.f32 %v3529, 0.0
      %v3562 = vmax.f32 %v3530, 0.0
      %v3563 = vmax.f32 %v3531, 0.0
      %v3564 = vmax.f32 %v3532, 0.0
      %v3565 = vmax.f32 %v3533, 0.0
      %v3566 = vmax.f32 %v3534, 0.0
      %v3567 = vpack.c.bf16 %v3536, %v3535
      %v3568 = vpack.c.bf16 %v3538, %v3537
      %v3569 = vpack.c.bf16 %v3540, %v3539
      %v3570 = vpack.c.bf16 %v3542, %v3541
      %v3571 = vpack.c.bf16 %v3544, %v3543
      %v3572 = vpack.c.bf16 %v3546, %v3545
      %v3573 = vpack.c.bf16 %v3548, %v3547
      %v3574 = vpack.c.bf16 %v3550, %v3549
      %v3575 = vpack.c.bf16 %v3552, %v3551
      %v3576 = vpack.c.bf16 %v3554, %v3553
      %v3577 = vpack.c.bf16 %v3556, %v3555
      %v3578 = vpack.c.bf16 %v3558, %v3557
      %v3579 = vpack.c.bf16 %v3560, %v3559
      %v3580 = vpack.c.bf16 %v3562, %v3561
      %v3581 = vpack.c.bf16 %v3564, %v3563
      %v3582 = vpack.c.bf16 %v3566, %v3565
      %v3599 = vunpack.c.l.b16 %v3567
      %v3600 = vunpack.c.h.b16 %v3567
      %v3601 = vunpack.c.l.b16 %v3568
      %v3602 = vunpack.c.h.b16 %v3568
      %v3603 = vunpack.c.l.b16 %v3569
      %v3604 = vunpack.c.h.b16 %v3569
      %v3605 = vunpack.c.l.b16 %v3570
      %v3606 = vunpack.c.h.b16 %v3570
      %v3607 = vunpack.c.l.b16 %v3571
      %v3608 = vunpack.c.h.b16 %v3571
      %v3609 = vunpack.c.l.b16 %v3572
      %v3610 = vunpack.c.h.b16 %v3572
      %v3611 = vunpack.c.l.b16 %v3573
      %v3612 = vunpack.c.h.b16 %v3573
      %v3613 = vunpack.c.l.b16 %v3574
      %v3614 = vunpack.c.h.b16 %v3574
      %v3615 = vunpack.c.l.b16 %v3575
      %v3616 = vunpack.c.h.b16 %v3575
      %v3617 = vunpack.c.l.b16 %v3576
      %v3618 = vunpack.c.h.b16 %v3576
      %v3619 = vunpack.c.l.b16 %v3577
      %v3620 = vunpack.c.h.b16 %v3577
      %v3621 = vunpack.c.l.b16 %v3578
      %v3622 = vunpack.c.h.b16 %v3578
      %v3623 = vunpack.c.l.b16 %v3579
      %v3624 = vunpack.c.h.b16 %v3579
      %v3625 = vunpack.c.l.b16 %v3580
      %v3626 = vunpack.c.h.b16 %v3580
      %v3627 = vunpack.c.l.b16 %v3581
      %v3628 = vunpack.c.h.b16 %v3581
      %v3629 = vunpack.c.l.b16 %v3582
      %v3630 = vunpack.c.h.b16 %v3582
      %v3631 = vpack.c.b16 %v3599, %v3599
      %v3632 = vpack.c.b16 %v3600, %v3600
      %v3633 = vpack.c.b16 %v3601, %v3601
      %v3634 = vpack.c.b16 %v3602, %v3602
      %v3635 = vpack.c.b16 %v3603, %v3603
      %v3636 = vpack.c.b16 %v3604, %v3604
      %v3637 = vpack.c.b16 %v3605, %v3605
      %v3638 = vpack.c.b16 %v3606, %v3606
      %v3639 = vpack.c.b16 %v3607, %v3607
      %v3640 = vpack.c.b16 %v3608, %v3608
      %v3641 = vpack.c.b16 %v3609, %v3609
      %v3642 = vpack.c.b16 %v3610, %v3610
      %v3643 = vpack.c.b16 %v3611, %v3611
      %v3644 = vpack.c.b16 %v3612, %v3612
      %v3645 = vpack.c.b16 %v3613, %v3613
      %v3646 = vpack.c.b16 %v3614, %v3614
      %v3647 = vpack.c.b16 %v3615, %v3615
      %v3648 = vpack.c.b16 %v3616, %v3616
      %v3649 = vpack.c.b16 %v3617, %v3617
      %v3650 = vpack.c.b16 %v3618, %v3618
      %v3651 = vpack.c.b16 %v3619, %v3619
      %v3652 = vpack.c.b16 %v3620, %v3620
      %v3653 = vpack.c.b16 %v3621, %v3621
      %v3654 = vpack.c.b16 %v3622, %v3622
      %v3655 = vpack.c.b16 %v3623, %v3623
      %v3656 = vpack.c.b16 %v3624, %v3624
      %v3657 = vpack.c.b16 %v3625, %v3625
      %v3658 = vpack.c.b16 %v3626, %v3626
      %v3659 = vpack.c.b16 %v3627, %v3627
      %v3660 = vpack.c.b16 %v3628, %v3628
      %v3661 = vpack.c.b16 %v3629, %v3629
      %v3662 = vpack.c.b16 %v3630, %v3630
      %vm3663 = vsmask.f32 4368
      %vm3664 = vmor %vm291, %vm3663
      %v3666 = vshrl.u32 %v3631, 16
      %v3668 = vrot.slane %v3666, 7
      %v3669 = vshll.u32 %v3631, 16
      %v3671 = vor.u32 %v3668, %v3669
      %v3672 = vrot.slane %v3668, 4
      %v3674 = vshrl.u32 %v3632, 16
      %v3676 = vrot.slane %v3674, 7
      %v3677 = vshll.u32 %v3632, 16
      %v3679 = vor.u32 %v3676, %v3677
      %v3680 = vsel %vm3664, %v3672, %v3679
      %v3681 = vrot.slane %v3676, 4
      %v3683 = vshrl.u32 %v3633, 16
      %v3685 = vrot.slane %v3683, 7
      %v3686 = vshll.u32 %v3633, 16
      %v3688 = vor.u32 %v3685, %v3686
      %v3689 = vrot.slane %v3685, 4
      %v3691 = vshrl.u32 %v3634, 16
      %v3693 = vrot.slane %v3691, 7
      %v3694 = vshll.u32 %v3634, 16
      %v3696 = vor.u32 %v3693, %v3694
      %v3697 = vsel %vm3664, %v3689, %v3696
      %v3698 = vrot.slane %v3693, 4
      %v3700 = vshrl.u32 %v3635, 16
      %v3702 = vrot.slane %v3700, 7
      %v3703 = vshll.u32 %v3635, 16
      %v3705 = vor.u32 %v3702, %v3703
      %v3706 = vrot.slane %v3702, 4
      %v3708 = vshrl.u32 %v3636, 16
      %v3710 = vrot.slane %v3708, 7
      %v3711 = vshll.u32 %v3636, 16
      %v3713 = vor.u32 %v3710, %v3711
      %v3714 = vsel %vm3664, %v3706, %v3713
      %v3715 = vrot.slane %v3710, 4
      %v3717 = vshrl.u32 %v3637, 16
      %v3719 = vrot.slane %v3717, 7
      %v3720 = vshll.u32 %v3637, 16
      %v3722 = vor.u32 %v3719, %v3720
      %v3723 = vrot.slane %v3719, 4
      %v3725 = vshrl.u32 %v3638, 16
      %v3727 = vrot.slane %v3725, 7
      %v3728 = vshll.u32 %v3638, 16
      %v3730 = vor.u32 %v3727, %v3728
      %v3731 = vsel %vm3664, %v3723, %v3730
      %v3732 = vrot.slane %v3727, 4
      %v3734 = vshrl.u32 %v3639, 16
      %v3736 = vrot.slane %v3734, 7
      %v3737 = vshll.u32 %v3639, 16
      %v3739 = vor.u32 %v3736, %v3737
      %v3740 = vrot.slane %v3736, 4
      %v3742 = vshrl.u32 %v3640, 16
      %v3744 = vrot.slane %v3742, 7
      %v3745 = vshll.u32 %v3640, 16
      %v3747 = vor.u32 %v3744, %v3745
      %v3748 = vsel %vm3664, %v3740, %v3747
      %v3749 = vrot.slane %v3744, 4
      %v3751 = vshrl.u32 %v3641, 16
      %v3753 = vrot.slane %v3751, 7
      %v3754 = vshll.u32 %v3641, 16
      %v3756 = vor.u32 %v3753, %v3754
      %v3757 = vrot.slane %v3753, 4
      %v3759 = vshrl.u32 %v3642, 16
      %v3761 = vrot.slane %v3759, 7
      %v3762 = vshll.u32 %v3642, 16
      %v3764 = vor.u32 %v3761, %v3762
      %v3765 = vsel %vm3664, %v3757, %v3764
      %v3766 = vrot.slane %v3761, 4
      %v3768 = vshrl.u32 %v3643, 16
      %v3770 = vrot.slane %v3768, 7
      %v3771 = vshll.u32 %v3643, 16
      %v3773 = vor.u32 %v3770, %v3771
      %v3774 = vrot.slane %v3770, 4
      %v3776 = vshrl.u32 %v3644, 16
      %v3778 = vrot.slane %v3776, 7
      %v3779 = vshll.u32 %v3644, 16
      %v3781 = vor.u32 %v3778, %v3779
      %v3782 = vsel %vm3664, %v3774, %v3781
      %v3783 = vrot.slane %v3778, 4
      %v3785 = vshrl.u32 %v3645, 16
      %v3787 = vrot.slane %v3785, 7
      %v3788 = vshll.u32 %v3645, 16
      %v3790 = vor.u32 %v3787, %v3788
      %v3791 = vrot.slane %v3787, 4
      %v3793 = vshrl.u32 %v3646, 16
      %v3795 = vrot.slane %v3793, 7
      %v3796 = vshll.u32 %v3646, 16
      %v3798 = vor.u32 %v3795, %v3796
      %v3799 = vsel %vm3664, %v3791, %v3798
      %v3800 = vrot.slane %v3795, 4
      %v3802 = vshrl.u32 %v3647, 16
      %v3804 = vrot.slane %v3802, 7
      %v3805 = vshll.u32 %v3647, 16
      %v3807 = vor.u32 %v3804, %v3805
      %v3808 = vrot.slane %v3804, 4
      %v3810 = vshrl.u32 %v3648, 16
      %v3812 = vrot.slane %v3810, 7
      %v3813 = vshll.u32 %v3648, 16
      %v3815 = vor.u32 %v3812, %v3813
      %v3816 = vsel %vm3664, %v3808, %v3815
      %v3817 = vrot.slane %v3812, 4
      %v3819 = vshrl.u32 %v3649, 16
      %v3821 = vrot.slane %v3819, 7
      %v3822 = vshll.u32 %v3649, 16
      %v3824 = vor.u32 %v3821, %v3822
      %v3825 = vrot.slane %v3821, 4
      %v3827 = vshrl.u32 %v3650, 16
      %v3829 = vrot.slane %v3827, 7
      %v3830 = vshll.u32 %v3650, 16
      %v3832 = vor.u32 %v3829, %v3830
      %v3833 = vsel %vm3664, %v3825, %v3832
      %v3834 = vrot.slane %v3829, 4
      %v3836 = vshrl.u32 %v3651, 16
      %v3838 = vrot.slane %v3836, 7
      %v3839 = vshll.u32 %v3651, 16
      %v3841 = vor.u32 %v3838, %v3839
      %v3842 = vrot.slane %v3838, 4
      %v3844 = vshrl.u32 %v3652, 16
      %v3846 = vrot.slane %v3844, 7
      %v3847 = vshll.u32 %v3652, 16
      %v3849 = vor.u32 %v3846, %v3847
      %v3850 = vsel %vm3664, %v3842, %v3849
      %v3851 = vrot.slane %v3846, 4
      %v3853 = vshrl.u32 %v3653, 16
      %v3855 = vrot.slane %v3853, 7
      %v3856 = vshll.u32 %v3653, 16
      %v3858 = vor.u32 %v3855, %v3856
      %v3859 = vrot.slane %v3855, 4
      %v3861 = vshrl.u32 %v3654, 16
      %v3863 = vrot.slane %v3861, 7
      %v3864 = vshll.u32 %v3654, 16
      %v3866 = vor.u32 %v3863, %v3864
      %v3867 = vsel %vm3664, %v3859, %v3866
      %v3868 = vrot.slane %v3863, 4
      %v3870 = vshrl.u32 %v3655, 16
      %v3872 = vrot.slane %v3870, 7
      %v3873 = vshll.u32 %v3655, 16
      %v3875 = vor.u32 %v3872, %v3873
      %v3876 = vrot.slane %v3872, 4
      %v3878 = vshrl.u32 %v3656, 16
      %v3880 = vrot.slane %v3878, 7
      %v3881 = vshll.u32 %v3656, 16
      %v3883 = vor.u32 %v3880, %v3881
      %v3884 = vsel %vm3664, %v3876, %v3883
      %v3885 = vrot.slane %v3880, 4
      %v3887 = vshrl.u32 %v3657, 16
      %v3889 = vrot.slane %v3887, 7
      %v3890 = vshll.u32 %v3657, 16
      %v3892 = vor.u32 %v3889, %v3890
      %v3893 = vrot.slane %v3889, 4
      %v3895 = vshrl.u32 %v3658, 16
      %v3897 = vrot.slane %v3895, 7
      %v3898 = vshll.u32 %v3658, 16
      %v3900 = vor.u32 %v3897, %v3898
      %v3901 = vsel %vm3664, %v3893, %v3900
      %v3902 = vrot.slane %v3897, 4
      %v3904 = vshrl.u32 %v3659, 16
      %v3906 = vrot.slane %v3904, 7
      %v3907 = vshll.u32 %v3659, 16
      %v3909 = vor.u32 %v3906, %v3907
      %v3910 = vrot.slane %v3906, 4
      %v3912 = vshrl.u32 %v3660, 16
      %v3914 = vrot.slane %v3912, 7
      %v3915 = vshll.u32 %v3660, 16
      %v3917 = vor.u32 %v3914, %v3915
      %v3918 = vsel %vm3664, %v3910, %v3917
      %v3919 = vrot.slane %v3914, 4
      %v3921 = vshrl.u32 %v3661, 16
      %v3923 = vrot.slane %v3921, 7
      %v3924 = vshll.u32 %v3661, 16
      %v3926 = vor.u32 %v3923, %v3924
      %v3927 = vrot.slane %v3923, 4
      %v3929 = vshrl.u32 %v3662, 16
      %v3931 = vrot.slane %v3929, 7
      %v3932 = vshll.u32 %v3662, 16
      %v3934 = vor.u32 %v3931, %v3932
      %v3935 = vsel %vm3664, %v3927, %v3934
      %v3936 = vrot.slane %v3931, 4
      %vm3985 = vcmask 60416
      %vm3986 = vmand %vm3985, %vm341
      %v3987 = vld [vmem:[%s289] sm:$0xf]
      %v3988 = vsel %vm3986, %v3671, %v3987
      %3989 = vst [vmem:[%s289] sm:$0xf] %v3988
      %3990 = vst.msk [vmem:[%s289 + $0x4] sm:$0xf] %vm280, %v3680
      %v3991 = vld [vmem:[%s289 + $0x8] sm:$0x1]
      %v3992 = vsel %vm292, %v3681, %v3991
      %3993 = vst [vmem:[%s289 + $0x8] sm:$0x1] %v3992
      %v3994 = vld [vmem:[%s289 + $0xc] sm:$0xf]
      %v3995 = vsel %vm3986, %v3688, %v3994
      %3996 = vst [vmem:[%s289 + $0xc] sm:$0xf] %v3995
      %3997 = vst.msk [vmem:[%s289 + $0x10] sm:$0xf] %vm280, %v3697
      %v3998 = vld [vmem:[%s289 + $0x14] sm:$0x1]
      %v3999 = vsel %vm292, %v3698, %v3998
      %4000 = vst [vmem:[%s289 + $0x14] sm:$0x1] %v3999
      %v4001 = vld [vmem:[%s289 + $0x18] sm:$0xf]
      %v4002 = vsel %vm3986, %v3705, %v4001
      %4003 = vst [vmem:[%s289 + $0x18] sm:$0xf] %v4002
      %4004 = vst.msk [vmem:[%s289 + $0x1c] sm:$0xf] %vm280, %v3714
      %v4005 = vld [vmem:[%s289 + $0x20] sm:$0x1]
      %v4006 = vsel %vm292, %v3715, %v4005
      %4007 = vst [vmem:[%s289 + $0x20] sm:$0x1] %v4006
      %v4008 = vld [vmem:[%s289 + $0x24] sm:$0xf]
      %v4009 = vsel %vm3986, %v3722, %v4008
      %4010 = vst [vmem:[%s289 + $0x24] sm:$0xf] %v4009
      %4011 = vst.msk [vmem:[%s289 + $0x28] sm:$0xf] %vm280, %v3731
      %v4012 = vld [vmem:[%s289 + $0x2c] sm:$0x1]
      %v4013 = vsel %vm292, %v3732, %v4012
      %4014 = vst [vmem:[%s289 + $0x2c] sm:$0x1] %v4013
      %v4015 = vld [vmem:[%s289 + $0x30] sm:$0xf]
      %v4016 = vsel %vm3986, %v3739, %v4015
      %4017 = vst [vmem:[%s289 + $0x30] sm:$0xf] %v4016
      %4018 = vst.msk [vmem:[%s289 + $0x34] sm:$0xf] %vm280, %v3748
      %v4019 = vld [vmem:[%s289 + $0x38] sm:$0x1]
      %v4020 = vsel %vm292, %v3749, %v4019
      %4021 = vst [vmem:[%s289 + $0x38] sm:$0x1] %v4020
      %v4022 = vld [vmem:[%s289 + $0x3c] sm:$0xf]
      %v4023 = vsel %vm3986, %v3756, %v4022
      %4024 = vst [vmem:[%s289 + $0x3c] sm:$0xf] %v4023
      %4025 = vst.msk [vmem:[%s289 + $0x40] sm:$0xf] %vm280, %v3765
      %v4026 = vld [vmem:[%s289 + $0x44] sm:$0x1]
      %v4027 = vsel %vm292, %v3766, %v4026
      %4028 = vst [vmem:[%s289 + $0x44] sm:$0x1] %v4027
      %v4029 = vld [vmem:[%s289 + $0x48] sm:$0xf]
      %v4030 = vsel %vm3986, %v3773, %v4029
      %4031 = vst [vmem:[%s289 + $0x48] sm:$0xf] %v4030
      %4032 = vst.msk [vmem:[%s289 + $0x4c] sm:$0xf] %vm280, %v3782
      %v4033 = vld [vmem:[%s289 + $0x50] sm:$0x1]
      %v4034 = vsel %vm292, %v3783, %v4033
      %4035 = vst [vmem:[%s289 + $0x50] sm:$0x1] %v4034
      %v4036 = vld [vmem:[%s289 + $0x54] sm:$0xf]
      %v4037 = vsel %vm3986, %v3790, %v4036
      %4038 = vst [vmem:[%s289 + $0x54] sm:$0xf] %v4037
      %4039 = vst.msk [vmem:[%s289 + $0x58] sm:$0xf] %vm280, %v3799
      %v4040 = vld [vmem:[%s289 + $0x5c] sm:$0x1]
      %v4041 = vsel %vm292, %v3800, %v4040
      %4042 = vst [vmem:[%s289 + $0x5c] sm:$0x1] %v4041
      %v4043 = vld [vmem:[%s289 + $0x60] sm:$0xf]
      %v4044 = vsel %vm3986, %v3807, %v4043
      %4045 = vst [vmem:[%s289 + $0x60] sm:$0xf] %v4044
      %4046 = vst.msk [vmem:[%s289 + $0x64] sm:$0xf] %vm280, %v3816
      %v4047 = vld [vmem:[%s289 + $0x68] sm:$0x1]
      %v4048 = vsel %vm292, %v3817, %v4047
      %4049 = vst [vmem:[%s289 + $0x68] sm:$0x1] %v4048
      %v4050 = vld [vmem:[%s289 + $0x6c] sm:$0xf]
      %v4051 = vsel %vm3986, %v3824, %v4050
      %4052 = vst [vmem:[%s289 + $0x6c] sm:$0xf] %v4051
      %4053 = vst.msk [vmem:[%s289 + $0x70] sm:$0xf] %vm280, %v3833
      %v4054 = vld [vmem:[%s289 + $0x74] sm:$0x1]
      %v4055 = vsel %vm292, %v3834, %v4054
      %4056 = vst [vmem:[%s289 + $0x74] sm:$0x1] %v4055
      %v4057 = vld [vmem:[%s289 + $0x78] sm:$0xf]
      %v4058 = vsel %vm3986, %v3841, %v4057
      %4059 = vst [vmem:[%s289 + $0x78] sm:$0xf] %v4058
      %4060 = vst.msk [vmem:[%s289 + $0x7c] sm:$0xf] %vm280, %v3850
      %v4061 = vld [vmem:[%s289 + $0x80] sm:$0x1]
      %v4062 = vsel %vm292, %v3851, %v4061
      %4063 = vst [vmem:[%s289 + $0x80] sm:$0x1] %v4062
      %v4064 = vld [vmem:[%s289 + $0x84] sm:$0xf]
      %v4065 = vsel %vm3986, %v3858, %v4064
      %4066 = vst [vmem:[%s289 + $0x84] sm:$0xf] %v4065
      %4067 = vst.msk [vmem:[%s289 + $0x88] sm:$0xf] %vm280, %v3867
      %v4068 = vld [vmem:[%s289 + $0x8c] sm:$0x1]
      %v4069 = vsel %vm292, %v3868, %v4068
      %4070 = vst [vmem:[%s289 + $0x8c] sm:$0x1] %v4069
      %v4071 = vld [vmem:[%s289 + $0x90] sm:$0xf]
      %v4072 = vsel %vm3986, %v3875, %v4071
      %4073 = vst [vmem:[%s289 + $0x90] sm:$0xf] %v4072
      %4074 = vst.msk [vmem:[%s289 + $0x94] sm:$0xf] %vm280, %v3884
      %v4075 = vld [vmem:[%s289 + $0x98] sm:$0x1]
      %v4076 = vsel %vm292, %v3885, %v4075
      %4077 = vst [vmem:[%s289 + $0x98] sm:$0x1] %v4076
      %v4078 = vld [vmem:[%s289 + $0x9c] sm:$0xf]
      %v4079 = vsel %vm3986, %v3892, %v4078
      %4080 = vst [vmem:[%s289 + $0x9c] sm:$0xf] %v4079
      %4081 = vst.msk [vmem:[%s289 + $0xa0] sm:$0xf] %vm280, %v3901
      %v4082 = vld [vmem:[%s289 + $0xa4] sm:$0x1]
      %v4083 = vsel %vm292, %v3902, %v4082
      %4084 = vst [vmem:[%s289 + $0xa4] sm:$0x1] %v4083
      %v4085 = vld [vmem:[%s289 + $0xa8] sm:$0xf]
      %v4086 = vsel %vm3986, %v3909, %v4085
      %4087 = vst [vmem:[%s289 + $0xa8] sm:$0xf] %v4086
      %4088 = vst.msk [vmem:[%s289 + $0xac] sm:$0xf] %vm280, %v3918
      %v4089 = vld [vmem:[%s289 + $0xb0] sm:$0x1]
      %v4090 = vsel %vm292, %v3919, %v4089
      %4091 = vst [vmem:[%s289 + $0xb0] sm:$0x1] %v4090
      %v4092 = vld [vmem:[%s289 + $0xb4] sm:$0xf]
      %v4093 = vsel %vm3986, %v3926, %v4092
      %4094 = vst [vmem:[%s289 + $0xb4] sm:$0xf] %v4093
      %4095 = vst.msk [vmem:[%s289 + $0xb8] sm:$0xf] %vm280, %v3935
      %v4096 = vld [vmem:[%s289 + $0xbc] sm:$0x1]
      %v4097 = vsel %vm292, %v3936, %v4096
      %4098 = vst [vmem:[%s289 + $0xbc] sm:$0x1] %v4097
      %v4099 = vld [vmem:[#allocation2] sm:$0xf]
      %v4100 = vld [vmem:[#allocation2 + $0x4] sm:$0xf]
      %v4101 = vld [vmem:[#allocation2 + $0xc] sm:$0xf]
      %v4102 = vld [vmem:[#allocation2 + $0x10] sm:$0xf]
      %v4103 = vld [vmem:[#allocation2 + $0x18] sm:$0xf]
      %v4104 = vld [vmem:[#allocation2 + $0x1c] sm:$0xf]
      %v4105 = vld [vmem:[#allocation2 + $0x24] sm:$0xf]
      %v4106 = vld [vmem:[#allocation2 + $0x28] sm:$0xf]
      %v4107 = vld [vmem:[#allocation2 + $0x30] sm:$0xf]
      %v4108 = vld [vmem:[#allocation2 + $0x34] sm:$0xf]
      %v4109 = vld [vmem:[#allocation2 + $0x3c] sm:$0xf]
      %v4110 = vld [vmem:[#allocation2 + $0x40] sm:$0xf]
      %v4111 = vld [vmem:[#allocation2 + $0x48] sm:$0xf]
      %v4112 = vld [vmem:[#allocation2 + $0x4c] sm:$0xf]
      %v4113 = vld [vmem:[#allocation2 + $0x54] sm:$0xf]
      %v4114 = vld [vmem:[#allocation2 + $0x58] sm:$0xf]
      %v4115 = vld [vmem:[#allocation2 + $0x60] sm:$0xf]
      %v4116 = vld [vmem:[#allocation2 + $0x64] sm:$0xf]
      %v4117 = vld [vmem:[#allocation2 + $0x6c] sm:$0xf]
      %v4118 = vld [vmem:[#allocation2 + $0x70] sm:$0xf]
      %v4119 = vld [vmem:[#allocation2 + $0x78] sm:$0xf]
      %v4120 = vld [vmem:[#allocation2 + $0x7c] sm:$0xf]
      %v4121 = vld [vmem:[#allocation2 + $0x84] sm:$0xf]
      %v4122 = vld [vmem:[#allocation2 + $0x88] sm:$0xf]
      %v4123 = vld [vmem:[#allocation2 + $0x90] sm:$0xf]
      %v4124 = vld [vmem:[#allocation2 + $0x94] sm:$0xf]
      %v4125 = vld [vmem:[#allocation2 + $0x9c] sm:$0xf]
      %v4126 = vld [vmem:[#allocation2 + $0xa0] sm:$0xf]
      %v4127 = vld [vmem:[#allocation2 + $0xa8] sm:$0xf]
      %v4128 = vld [vmem:[#allocation2 + $0xac] sm:$0xf]
      %v4129 = vld [vmem:[#allocation2 + $0xb4] sm:$0xf]
      %v4130 = vld [vmem:[#allocation2 + $0xb8] sm:$0xf]
      %v4131 = vld [vmem:[#allocation2 + $0x8] sm:$0x1]
      %v4132 = vld [vmem:[#allocation2 + $0x14] sm:$0x1]
      %v4133 = vld [vmem:[#allocation2 + $0x20] sm:$0x1]
      %v4134 = vld [vmem:[#allocation2 + $0x2c] sm:$0x1]
      %v4135 = vld [vmem:[#allocation2 + $0x38] sm:$0x1]
      %v4136 = vld [vmem:[#allocation2 + $0x44] sm:$0x1]
      %v4137 = vld [vmem:[#allocation2 + $0x50] sm:$0x1]
      %v4138 = vld [vmem:[#allocation2 + $0x5c] sm:$0x1]
      %v4139 = vld [vmem:[#allocation2 + $0x68] sm:$0x1]
      %v4140 = vld [vmem:[#allocation2 + $0x74] sm:$0x1]
      %v4141 = vld [vmem:[#allocation2 + $0x80] sm:$0x1]
      %v4142 = vld [vmem:[#allocation2 + $0x8c] sm:$0x1]
      %v4143 = vld [vmem:[#allocation2 + $0x98] sm:$0x1]
      %v4144 = vld [vmem:[#allocation2 + $0xa4] sm:$0x1]
      %v4145 = vld [vmem:[#allocation2 + $0xb0] sm:$0x1]
      %v4146 = vld [vmem:[#allocation2 + $0xbc] sm:$0x1]
      %v4148 = vshrl.u32 %v4099, 16
      %v4150 = vrot.slane %v4148, 4
      %v4151 = vshll.u32 %v4099, 16
      %v4153 = vrot.slane %v4151, 5
      %v4154 = vor.u32 %v4150, %v4153
      %v4155 = vrot.slane %v4154, 4
      %v4157 = vshll.u32 %v4100, 16
      %v4159 = vrot.slane %v4157, 5
      %v4160 = vsel %vm441, %v4155, %v4159
      %v4161 = vshrl.u32 %v4100, 16
      %v4163 = vrot.slane %v4161, 4
      %v4164 = vor.u32 %v4163, %v4159
      %v4165 = vrot.slane %v4164, 4
      %v4167 = vshll.u32 %v4131, 16
      %v4169 = vrot.slane %v4167, 5
      %v4170 = vsel %vm441, %v4165, %v4169
      %v4172 = vshrl.u32 %v4101, 16
      %v4174 = vrot.slane %v4172, 4
      %v4175 = vshll.u32 %v4101, 16
      %v4177 = vrot.slane %v4175, 5
      %v4178 = vor.u32 %v4174, %v4177
      %v4179 = vrot.slane %v4178, 4
      %v4181 = vshll.u32 %v4102, 16
      %v4183 = vrot.slane %v4181, 5
      %v4184 = vsel %vm441, %v4179, %v4183
      %v4185 = vshrl.u32 %v4102, 16
      %v4187 = vrot.slane %v4185, 4
      %v4188 = vor.u32 %v4187, %v4183
      %v4189 = vrot.slane %v4188, 4
      %v4191 = vshll.u32 %v4132, 16
      %v4193 = vrot.slane %v4191, 5
      %v4194 = vsel %vm441, %v4189, %v4193
      %v4196 = vshrl.u32 %v4103, 16
      %v4198 = vrot.slane %v4196, 4
      %v4199 = vshll.u32 %v4103, 16
      %v4201 = vrot.slane %v4199, 5
      %v4202 = vor.u32 %v4198, %v4201
      %v4203 = vrot.slane %v4202, 4
      %v4205 = vshll.u32 %v4104, 16
      %v4207 = vrot.slane %v4205, 5
      %v4208 = vsel %vm441, %v4203, %v4207
      %v4209 = vshrl.u32 %v4104, 16
      %v4211 = vrot.slane %v4209, 4
      %v4212 = vor.u32 %v4211, %v4207
      %v4213 = vrot.slane %v4212, 4
      %v4215 = vshll.u32 %v4133, 16
      %v4217 = vrot.slane %v4215, 5
      %v4218 = vsel %vm441, %v4213, %v4217
      %v4220 = vshrl.u32 %v4105, 16
      %v4222 = vrot.slane %v4220, 4
      %v4223 = vshll.u32 %v4105, 16
      %v4225 = vrot.slane %v4223, 5
      %v4226 = vor.u32 %v4222, %v4225
      %v4227 = vrot.slane %v4226, 4
      %v4229 = vshll.u32 %v4106, 16
      %v4231 = vrot.slane %v4229, 5
      %v4232 = vsel %vm441, %v4227, %v4231
      %v4233 = vshrl.u32 %v4106, 16
      %v4235 = vrot.slane %v4233, 4
      %v4236 = vor.u32 %v4235, %v4231
      %v4237 = vrot.slane %v4236, 4
      %v4239 = vshll.u32 %v4134, 16
      %v4241 = vrot.slane %v4239, 5
      %v4242 = vsel %vm441, %v4237, %v4241
      %v4244 = vshrl.u32 %v4107, 16
      %v4246 = vrot.slane %v4244, 4
      %v4247 = vshll.u32 %v4107, 16
      %v4249 = vrot.slane %v4247, 5
      %v4250 = vor.u32 %v4246, %v4249
      %v4251 = vrot.slane %v4250, 4
      %v4253 = vshll.u32 %v4108, 16
      %v4255 = vrot.slane %v4253, 5
      %v4256 = vsel %vm441, %v4251, %v4255
      %v4257 = vshrl.u32 %v4108, 16
      %v4259 = vrot.slane %v4257, 4
      %v4260 = vor.u32 %v4259, %v4255
      %v4261 = vrot.slane %v4260, 4
      %v4263 = vshll.u32 %v4135, 16
      %v4265 = vrot.slane %v4263, 5
      %v4266 = vsel %vm441, %v4261, %v4265
      %v4268 = vshrl.u32 %v4109, 16
      %v4270 = vrot.slane %v4268, 4
      %v4271 = vshll.u32 %v4109, 16
      %v4273 = vrot.slane %v4271, 5
      %v4274 = vor.u32 %v4270, %v4273
      %v4275 = vrot.slane %v4274, 4
      %v4277 = vshll.u32 %v4110, 16
      %v4279 = vrot.slane %v4277, 5
      %v4280 = vsel %vm441, %v4275, %v4279
      %v4281 = vshrl.u32 %v4110, 16
      %v4283 = vrot.slane %v4281, 4
      %v4284 = vor.u32 %v4283, %v4279
      %v4285 = vrot.slane %v4284, 4
      %v4287 = vshll.u32 %v4136, 16
      %v4289 = vrot.slane %v4287, 5
      %v4290 = vsel %vm441, %v4285, %v4289
      %v4292 = vshrl.u32 %v4111, 16
      %v4294 = vrot.slane %v4292, 4
      %v4295 = vshll.u32 %v4111, 16
      %v4297 = vrot.slane %v4295, 5
      %v4298 = vor.u32 %v4294, %v4297
      %v4299 = vrot.slane %v4298, 4
      %v4301 = vshll.u32 %v4112, 16
      %v4303 = vrot.slane %v4301, 5
      %v4304 = vsel %vm441, %v4299, %v4303
      %v4305 = vshrl.u32 %v4112, 16
      %v4307 = vrot.slane %v4305, 4
      %v4308 = vor.u32 %v4307, %v4303
      %v4309 = vrot.slane %v4308, 4
      %v4311 = vshll.u32 %v4137, 16
      %v4313 = vrot.slane %v4311, 5
      %v4314 = vsel %vm441, %v4309, %v4313
      %v4316 = vshrl.u32 %v4113, 16
      %v4318 = vrot.slane %v4316, 4
      %v4319 = vshll.u32 %v4113, 16
      %v4321 = vrot.slane %v4319, 5
      %v4322 = vor.u32 %v4318, %v4321
      %v4323 = vrot.slane %v4322, 4
      %v4325 = vshll.u32 %v4114, 16
      %v4327 = vrot.slane %v4325, 5
      %v4328 = vsel %vm441, %v4323, %v4327
      %v4329 = vshrl.u32 %v4114, 16
      %v4331 = vrot.slane %v4329, 4
      %v4332 = vor.u32 %v4331, %v4327
      %v4333 = vrot.slane %v4332, 4
      %v4335 = vshll.u32 %v4138, 16
      %v4337 = vrot.slane %v4335, 5
      %v4338 = vsel %vm441, %v4333, %v4337
      %v4340 = vshrl.u32 %v4115, 16
      %v4342 = vrot.slane %v4340, 4
      %v4343 = vshll.u32 %v4115, 16
      %v4345 = vrot.slane %v4343, 5
      %v4346 = vor.u32 %v4342, %v4345
      %v4347 = vrot.slane %v4346, 4
      %v4349 = vshll.u32 %v4116, 16
      %v4351 = vrot.slane %v4349, 5
      %v4352 = vsel %vm441, %v4347, %v4351
      %v4353 = vshrl.u32 %v4116, 16
      %v4355 = vrot.slane %v4353, 4
      %v4356 = vor.u32 %v4355, %v4351
      %v4357 = vrot.slane %v4356, 4
      %v4359 = vshll.u32 %v4139, 16
      %v4361 = vrot.slane %v4359, 5
      %v4362 = vsel %vm441, %v4357, %v4361
      %v4364 = vshrl.u32 %v4117, 16
      %v4366 = vrot.slane %v4364, 4
      %v4367 = vshll.u32 %v4117, 16
      %v4369 = vrot.slane %v4367, 5
      %v4370 = vor.u32 %v4366, %v4369
      %v4371 = vrot.slane %v4370, 4
      %v4373 = vshll.u32 %v4118, 16
      %v4375 = vrot.slane %v4373, 5
      %v4376 = vsel %vm441, %v4371, %v4375
      %v4377 = vshrl.u32 %v4118, 16
      %v4379 = vrot.slane %v4377, 4
      %v4380 = vor.u32 %v4379, %v4375
      %v4381 = vrot.slane %v4380, 4
      %v4383 = vshll.u32 %v4140, 16
      %v4385 = vrot.slane %v4383, 5
      %v4386 = vsel %vm441, %v4381, %v4385
      %v4388 = vshrl.u32 %v4119, 16
      %v4390 = vrot.slane %v4388, 4
      %v4391 = vshll.u32 %v4119, 16
      %v4393 = vrot.slane %v4391, 5
      %v4394 = vor.u32 %v4390, %v4393
      %v4395 = vrot.slane %v4394, 4
      %v4397 = vshll.u32 %v4120, 16
      %v4399 = vrot.slane %v4397, 5
      %v4400 = vsel %vm441, %v4395, %v4399
      %v4401 = vshrl.u32 %v4120, 16
      %v4403 = vrot.slane %v4401, 4
      %v4404 = vor.u32 %v4403, %v4399
      %v4405 = vrot.slane %v4404, 4
      %v4407 = vshll.u32 %v4141, 16
      %v4409 = vrot.slane %v4407, 5
      %v4410 = vsel %vm441, %v4405, %v4409
      %v4412 = vshrl.u32 %v4121, 16
      %v4414 = vrot.slane %v4412, 4
      %v4415 = vshll.u32 %v4121, 16
      %v4417 = vrot.slane %v4415, 5
      %v4418 = vor.u32 %v4414, %v4417
      %v4419 = vrot.slane %v4418, 4
      %v4421 = vshll.u32 %v4122, 16
      %v4423 = vrot.slane %v4421, 5
      %v4424 = vsel %vm441, %v4419, %v4423
      %v4425 = vshrl.u32 %v4122, 16
      %v4427 = vrot.slane %v4425, 4
      %v4428 = vor.u32 %v4427, %v4423
      %v4429 = vrot.slane %v4428, 4
      %v4431 = vshll.u32 %v4142, 16
      %v4433 = vrot.slane %v4431, 5
      %v4434 = vsel %vm441, %v4429, %v4433
      %v4436 = vshrl.u32 %v4123, 16
      %v4438 = vrot.slane %v4436, 4
      %v4439 = vshll.u32 %v4123, 16
      %v4441 = vrot.slane %v4439, 5
      %v4442 = vor.u32 %v4438, %v4441
      %v4443 = vrot.slane %v4442, 4
      %v4445 = vshll.u32 %v4124, 16
      %v4447 = vrot.slane %v4445, 5
      %v4448 = vsel %vm441, %v4443, %v4447
      %v4449 = vshrl.u32 %v4124, 16
      %v4451 = vrot.slane %v4449, 4
      %v4452 = vor.u32 %v4451, %v4447
      %v4453 = vrot.slane %v4452, 4
      %v4455 = vshll.u32 %v4143, 16
      %v4457 = vrot.slane %v4455, 5
      %v4458 = vsel %vm441, %v4453, %v4457
      %v4460 = vshrl.u32 %v4125, 16
      %v4462 = vrot.slane %v4460, 4
      %v4463 = vshll.u32 %v4125, 16
      %v4465 = vrot.slane %v4463, 5
      %v4466 = vor.u32 %v4462, %v4465
      %v4467 = vrot.slane %v4466, 4
      %v4469 = vshll.u32 %v4126, 16
      %v4471 = vrot.slane %v4469, 5
      %v4472 = vsel %vm441, %v4467, %v4471
      %v4473 = vshrl.u32 %v4126, 16
      %v4475 = vrot.slane %v4473, 4
      %v4476 = vor.u32 %v4475, %v4471
      %v4477 = vrot.slane %v4476, 4
      %v4479 = vshll.u32 %v4144, 16
      %v4481 = vrot.slane %v4479, 5
      %v4482 = vsel %vm441, %v4477, %v4481
      %v4484 = vshrl.u32 %v4127, 16
      %v4486 = vrot.slane %v4484, 4
      %v4487 = vshll.u32 %v4127, 16
      %v4489 = vrot.slane %v4487, 5
      %v4490 = vor.u32 %v4486, %v4489
      %v4491 = vrot.slane %v4490, 4
      %v4493 = vshll.u32 %v4128, 16
      %v4495 = vrot.slane %v4493, 5
      %v4496 = vsel %vm441, %v4491, %v4495
      %v4497 = vshrl.u32 %v4128, 16
      %v4499 = vrot.slane %v4497, 4
      %v4500 = vor.u32 %v4499, %v4495
      %v4501 = vrot.slane %v4500, 4
      %v4503 = vshll.u32 %v4145, 16
      %v4505 = vrot.slane %v4503, 5
      %v4506 = vsel %vm441, %v4501, %v4505
      %v4508 = vshrl.u32 %v4129, 16
      %v4510 = vrot.slane %v4508, 4
      %v4511 = vshll.u32 %v4129, 16
      %v4513 = vrot.slane %v4511, 5
      %v4514 = vor.u32 %v4510, %v4513
      %v4515 = vrot.slane %v4514, 4
      %v4517 = vshll.u32 %v4130, 16
      %v4519 = vrot.slane %v4517, 5
      %v4520 = vsel %vm441, %v4515, %v4519
      %v4521 = vshrl.u32 %v4130, 16
      %v4523 = vrot.slane %v4521, 4
      %v4524 = vor.u32 %v4523, %v4519
      %v4525 = vrot.slane %v4524, 4
      %v4527 = vshll.u32 %v4146, 16
      %v4529 = vrot.slane %v4527, 5
      %v4530 = vsel %vm441, %v4525, %v4529
      %v4531 = vld [vmem:[#allocation2] sm:$0xe]
      %v4532 = vld [vmem:[#allocation2 + $0xc] sm:$0xe]
      %v4533 = vld [vmem:[#allocation2 + $0x18] sm:$0xe]
      %v4534 = vld [vmem:[#allocation2 + $0x24] sm:$0xe]
      %v4535 = vld [vmem:[#allocation2 + $0x30] sm:$0xe]
      %v4536 = vld [vmem:[#allocation2 + $0x3c] sm:$0xe]
      %v4537 = vld [vmem:[#allocation2 + $0x48] sm:$0xe]
      %v4538 = vld [vmem:[#allocation2 + $0x54] sm:$0xe]
      %v4539 = vld [vmem:[#allocation2 + $0x60] sm:$0xe]
      %v4540 = vld [vmem:[#allocation2 + $0x6c] sm:$0xe]
      %v4541 = vld [vmem:[#allocation2 + $0x78] sm:$0xe]
      %v4542 = vld [vmem:[#allocation2 + $0x84] sm:$0xe]
      %v4543 = vld [vmem:[#allocation2 + $0x90] sm:$0xe]
      %v4544 = vld [vmem:[#allocation2 + $0x9c] sm:$0xe]
      %v4545 = vld [vmem:[#allocation2 + $0xa8] sm:$0xe]
      %v4546 = vld [vmem:[#allocation2 + $0xb4] sm:$0xe]
      %v4595 = vrot.slane %v4531, 5
      %v4596 = vrot.slane %v4595, 4
      %v4597 = vrot.slane %v4100, 5
      %v4598 = vsel %vm892, %v4596, %v4597
      %v4599 = vrot.slane %v4597, 4
      %v4600 = vrot.slane %v4131, 5
      %v4601 = vsel %vm892, %v4599, %v4600
      %v4602 = vrot.slane %v4532, 5
      %v4603 = vrot.slane %v4602, 4
      %v4604 = vrot.slane %v4102, 5
      %v4605 = vsel %vm892, %v4603, %v4604
      %v4606 = vrot.slane %v4604, 4
      %v4607 = vrot.slane %v4132, 5
      %v4608 = vsel %vm892, %v4606, %v4607
      %v4609 = vrot.slane %v4533, 5
      %v4610 = vrot.slane %v4609, 4
      %v4611 = vrot.slane %v4104, 5
      %v4612 = vsel %vm892, %v4610, %v4611
      %v4613 = vrot.slane %v4611, 4
      %v4614 = vrot.slane %v4133, 5
      %v4615 = vsel %vm892, %v4613, %v4614
      %v4616 = vrot.slane %v4534, 5
      %v4617 = vrot.slane %v4616, 4
      %v4618 = vrot.slane %v4106, 5
      %v4619 = vsel %vm892, %v4617, %v4618
      %v4620 = vrot.slane %v4618, 4
      %v4621 = vrot.slane %v4134, 5
      %v4622 = vsel %vm892, %v4620, %v4621
      %v4623 = vrot.slane %v4535, 5
      %v4624 = vrot.slane %v4623, 4
      %v4625 = vrot.slane %v4108, 5
      %v4626 = vsel %vm892, %v4624, %v4625
      %v4627 = vrot.slane %v4625, 4
      %v4628 = vrot.slane %v4135, 5
      %v4629 = vsel %vm892, %v4627, %v4628
      %v4630 = vrot.slane %v4536, 5
      %v4631 = vrot.slane %v4630, 4
      %v4632 = vrot.slane %v4110, 5
      %v4633 = vsel %vm892, %v4631, %v4632
      %v4634 = vrot.slane %v4632, 4
      %v4635 = vrot.slane %v4136, 5
      %v4636 = vsel %vm892, %v4634, %v4635
      %v4637 = vrot.slane %v4537, 5
      %v4638 = vrot.slane %v4637, 4
      %v4639 = vrot.slane %v4112, 5
      %v4640 = vsel %vm892, %v4638, %v4639
      %v4641 = vrot.slane %v4639, 4
      %v4642 = vrot.slane %v4137, 5
      %v4643 = vsel %vm892, %v4641, %v4642
      %v4644 = vrot.slane %v4538, 5
      %v4645 = vrot.slane %v4644, 4
      %v4646 = vrot.slane %v4114, 5
      %v4647 = vsel %vm892, %v4645, %v4646
      %v4648 = vrot.slane %v4646, 4
      %v4649 = vrot.slane %v4138, 5
      %v4650 = vsel %vm892, %v4648, %v4649
      %v4651 = vrot.slane %v4539, 5
      %v4652 = vrot.slane %v4651, 4
      %v4653 = vrot.slane %v4116, 5
      %v4654 = vsel %vm892, %v4652, %v4653
      %v4655 = vrot.slane %v4653, 4
      %v4656 = vrot.slane %v4139, 5
      %v4657 = vsel %vm892, %v4655, %v4656
      %v4658 = vrot.slane %v4540, 5
      %v4659 = vrot.slane %v4658, 4
      %v4660 = vrot.slane %v4118, 5
      %v4661 = vsel %vm892, %v4659, %v4660
      %v4662 = vrot.slane %v4660, 4
      %v4663 = vrot.slane %v4140, 5
      %v4664 = vsel %vm892, %v4662, %v4663
      %v4665 = vrot.slane %v4541, 5
      %v4666 = vrot.slane %v4665, 4
      %v4667 = vrot.slane %v4120, 5
      %v4668 = vsel %vm892, %v4666, %v4667
      %v4669 = vrot.slane %v4667, 4
      %v4670 = vrot.slane %v4141, 5
      %v4671 = vsel %vm892, %v4669, %v4670
      %v4672 = vrot.slane %v4542, 5
      %v4673 = vrot.slane %v4672, 4
      %v4674 = vrot.slane %v4122, 5
      %v4675 = vsel %vm892, %v4673, %v4674
      %v4676 = vrot.slane %v4674, 4
      %v4677 = vrot.slane %v4142, 5
      %v4678 = vsel %vm892, %v4676, %v4677
      %v4679 = vrot.slane %v4543, 5
      %v4680 = vrot.slane %v4679, 4
      %v4681 = vrot.slane %v4124, 5
      %v4682 = vsel %vm892, %v4680, %v4681
      %v4683 = vrot.slane %v4681, 4
      %v4684 = vrot.slane %v4143, 5
      %v4685 = vsel %vm892, %v4683, %v4684
      %v4686 = vrot.slane %v4544, 5
      %v4687 = vrot.slane %v4686, 4
      %v4688 = vrot.slane %v4126, 5
      %v4689 = vsel %vm892, %v4687, %v4688
      %v4690 = vrot.slane %v4688, 4
      %v4691 = vrot.slane %v4144, 5
      %v4692 = vsel %vm892, %v4690, %v4691
      %v4693 = vrot.slane %v4545, 5
      %v4694 = vrot.slane %v4693, 4
      %v4695 = vrot.slane %v4128, 5
      %v4696 = vsel %vm892, %v4694, %v4695
      %v4697 = vrot.slane %v4695, 4
      %v4698 = vrot.slane %v4145, 5
      %v4699 = vsel %vm892, %v4697, %v4698
      %v4700 = vrot.slane %v4546, 5
      %v4701 = vrot.slane %v4700, 4
      %v4702 = vrot.slane %v4130, 5
      %v4703 = vsel %vm892, %v4701, %v4702
      %v4704 = vrot.slane %v4702, 4
      %v4705 = vrot.slane %v4146, 5
      %v4706 = vsel %vm892, %v4704, %v4705
      %v4707 = vld [vmem:[%s289] sm:$0xf]
      %v4708 = vld [vmem:[%s289 + $0x4] sm:$0xf]
      %v4709 = vld [vmem:[%s289 + $0xc] sm:$0xf]
      %v4710 = vld [vmem:[%s289 + $0x10] sm:$0xf]
      %v4711 = vld [vmem:[%s289 + $0x18] sm:$0xf]
      %v4712 = vld [vmem:[%s289 + $0x1c] sm:$0xf]
      %v4713 = vld [vmem:[%s289 + $0x24] sm:$0xf]
      %v4714 = vld [vmem:[%s289 + $0x28] sm:$0xf]
      %v4715 = vld [vmem:[%s289 + $0x30] sm:$0xf]
      %v4716 = vld [vmem:[%s289 + $0x34] sm:$0xf]
      %v4717 = vld [vmem:[%s289 + $0x3c] sm:$0xf]
      %v4718 = vld [vmem:[%s289 + $0x40] sm:$0xf]
      %v4719 = vld [vmem:[%s289 + $0x48] sm:$0xf]
      %v4720 = vld [vmem:[%s289 + $0x4c] sm:$0xf]
      %v4721 = vld [vmem:[%s289 + $0x54] sm:$0xf]
      %v4722 = vld [vmem:[%s289 + $0x58] sm:$0xf]
      %v4723 = vld [vmem:[%s289 + $0x60] sm:$0xf]
      %v4724 = vld [vmem:[%s289 + $0x64] sm:$0xf]
      %v4725 = vld [vmem:[%s289 + $0x6c] sm:$0xf]
      %v4726 = vld [vmem:[%s289 + $0x70] sm:$0xf]
      %v4727 = vld [vmem:[%s289 + $0x78] sm:$0xf]
      %v4728 = vld [vmem:[%s289 + $0x7c] sm:$0xf]
      %v4729 = vld [vmem:[%s289 + $0x84] sm:$0xf]
      %v4730 = vld [vmem:[%s289 + $0x88] sm:$0xf]
      %v4731 = vld [vmem:[%s289 + $0x90] sm:$0xf]
      %v4732 = vld [vmem:[%s289 + $0x94] sm:$0xf]
      %v4733 = vld [vmem:[%s289 + $0x9c] sm:$0xf]
      %v4734 = vld [vmem:[%s289 + $0xa0] sm:$0xf]
      %v4735 = vld [vmem:[%s289 + $0xa8] sm:$0xf]
      %v4736 = vld [vmem:[%s289 + $0xac] sm:$0xf]
      %v4737 = vld [vmem:[%s289 + $0xb4] sm:$0xf]
      %v4738 = vld [vmem:[%s289 + $0xb8] sm:$0xf]
      %v4739 = vld [vmem:[%s289 + $0x8] sm:$0x1]
      %v4740 = vld [vmem:[%s289 + $0x14] sm:$0x1]
      %v4741 = vld [vmem:[%s289 + $0x20] sm:$0x1]
      %v4742 = vld [vmem:[%s289 + $0x2c] sm:$0x1]
      %v4743 = vld [vmem:[%s289 + $0x38] sm:$0x1]
      %v4744 = vld [vmem:[%s289 + $0x44] sm:$0x1]
      %v4745 = vld [vmem:[%s289 + $0x50] sm:$0x1]
      %v4746 = vld [vmem:[%s289 + $0x5c] sm:$0x1]
      %v4747 = vld [vmem:[%s289 + $0x68] sm:$0x1]
      %v4748 = vld [vmem:[%s289 + $0x74] sm:$0x1]
      %v4749 = vld [vmem:[%s289 + $0x80] sm:$0x1]
      %v4750 = vld [vmem:[%s289 + $0x8c] sm:$0x1]
      %v4751 = vld [vmem:[%s289 + $0x98] sm:$0x1]
      %v4752 = vld [vmem:[%s289 + $0xa4] sm:$0x1]
      %v4753 = vld [vmem:[%s289 + $0xb0] sm:$0x1]
      %v4754 = vld [vmem:[%s289 + $0xbc] sm:$0x1]
      %v4756 = vshrl.u32 %v4707, 16
      %v4758 = vrot.slane %v4756, 4
      %v4759 = vshll.u32 %v4707, 16
      %v4761 = vrot.slane %v4759, 5
      %v4762 = vor.u32 %v4758, %v4761
      %v4763 = vrot.slane %v4762, 4
      %v4765 = vshll.u32 %v4708, 16
      %v4767 = vrot.slane %v4765, 5
      %v4768 = vsel %vm441, %v4763, %v4767
      %v4769 = vshrl.u32 %v4708, 16
      %v4771 = vrot.slane %v4769, 4
      %v4772 = vor.u32 %v4771, %v4767
      %v4773 = vrot.slane %v4772, 4
      %v4775 = vshll.u32 %v4739, 16
      %v4777 = vrot.slane %v4775, 5
      %v4778 = vsel %vm441, %v4773, %v4777
      %v4780 = vshrl.u32 %v4709, 16
      %v4782 = vrot.slane %v4780, 4
      %v4783 = vshll.u32 %v4709, 16
      %v4785 = vrot.slane %v4783, 5
      %v4786 = vor.u32 %v4782, %v4785
      %v4787 = vrot.slane %v4786, 4
      %v4789 = vshll.u32 %v4710, 16
      %v4791 = vrot.slane %v4789, 5
      %v4792 = vsel %vm441, %v4787, %v4791
      %v4793 = vshrl.u32 %v4710, 16
      %v4795 = vrot.slane %v4793, 4
      %v4796 = vor.u32 %v4795, %v4791
      %v4797 = vrot.slane %v4796, 4
      %v4799 = vshll.u32 %v4740, 16
      %v4801 = vrot.slane %v4799, 5
      %v4802 = vsel %vm441, %v4797, %v4801
      %v4804 = vshrl.u32 %v4711, 16
      %v4806 = vrot.slane %v4804, 4
      %v4807 = vshll.u32 %v4711, 16
      %v4809 = vrot.slane %v4807, 5
      %v4810 = vor.u32 %v4806, %v4809
      %v4811 = vrot.slane %v4810, 4
      %v4813 = vshll.u32 %v4712, 16
      %v4815 = vrot.slane %v4813, 5
      %v4816 = vsel %vm441, %v4811, %v4815
      %v4817 = vshrl.u32 %v4712, 16
      %v4819 = vrot.slane %v4817, 4
      %v4820 = vor.u32 %v4819, %v4815
      %v4821 = vrot.slane %v4820, 4
      %v4823 = vshll.u32 %v4741, 16
      %v4825 = vrot.slane %v4823, 5
      %v4826 = vsel %vm441, %v4821, %v4825
      %v4828 = vshrl.u32 %v4713, 16
      %v4830 = vrot.slane %v4828, 4
      %v4831 = vshll.u32 %v4713, 16
      %v4833 = vrot.slane %v4831, 5
      %v4834 = vor.u32 %v4830, %v4833
      %v4835 = vrot.slane %v4834, 4
      %v4837 = vshll.u32 %v4714, 16
      %v4839 = vrot.slane %v4837, 5
      %v4840 = vsel %vm441, %v4835, %v4839
      %v4841 = vshrl.u32 %v4714, 16
      %v4843 = vrot.slane %v4841, 4
      %v4844 = vor.u32 %v4843, %v4839
      %v4845 = vrot.slane %v4844, 4
      %v4847 = vshll.u32 %v4742, 16
      %v4849 = vrot.slane %v4847, 5
      %v4850 = vsel %vm441, %v4845, %v4849
      %v4852 = vshrl.u32 %v4715, 16
      %v4854 = vrot.slane %v4852, 4
      %v4855 = vshll.u32 %v4715, 16
      %v4857 = vrot.slane %v4855, 5
      %v4858 = vor.u32 %v4854, %v4857
      %v4859 = vrot.slane %v4858, 4
      %v4861 = vshll.u32 %v4716, 16
      %v4863 = vrot.slane %v4861, 5
      %v4864 = vsel %vm441, %v4859, %v4863
      %v4865 = vshrl.u32 %v4716, 16
      %v4867 = vrot.slane %v4865, 4
      %v4868 = vor.u32 %v4867, %v4863
      %v4869 = vrot.slane %v4868, 4
      %v4871 = vshll.u32 %v4743, 16
      %v4873 = vrot.slane %v4871, 5
      %v4874 = vsel %vm441, %v4869, %v4873
      %v4876 = vshrl.u32 %v4717, 16
      %v4878 = vrot.slane %v4876, 4
      %v4879 = vshll.u32 %v4717, 16
      %v4881 = vrot.slane %v4879, 5
      %v4882 = vor.u32 %v4878, %v4881
      %v4883 = vrot.slane %v4882, 4
      %v4885 = vshll.u32 %v4718, 16
      %v4887 = vrot.slane %v4885, 5
      %v4888 = vsel %vm441, %v4883, %v4887
      %v4889 = vshrl.u32 %v4718, 16
      %v4891 = vrot.slane %v4889, 4
      %v4892 = vor.u32 %v4891, %v4887
      %v4893 = vrot.slane %v4892, 4
      %v4895 = vshll.u32 %v4744, 16
      %v4897 = vrot.slane %v4895, 5
      %v4898 = vsel %vm441, %v4893, %v4897
      %v4900 = vshrl.u32 %v4719, 16
      %v4902 = vrot.slane %v4900, 4
      %v4903 = vshll.u32 %v4719, 16
      %v4905 = vrot.slane %v4903, 5
      %v4906 = vor.u32 %v4902, %v4905
      %v4907 = vrot.slane %v4906, 4
      %v4909 = vshll.u32 %v4720, 16
      %v4911 = vrot.slane %v4909, 5
      %v4912 = vsel %vm441, %v4907, %v4911
      %v4913 = vshrl.u32 %v4720, 16
      %v4915 = vrot.slane %v4913, 4
      %v4916 = vor.u32 %v4915, %v4911
      %v4917 = vrot.slane %v4916, 4
      %v4919 = vshll.u32 %v4745, 16
      %v4921 = vrot.slane %v4919, 5
      %v4922 = vsel %vm441, %v4917, %v4921
      %v4924 = vshrl.u32 %v4721, 16
      %v4926 = vrot.slane %v4924, 4
      %v4927 = vshll.u32 %v4721, 16
      %v4929 = vrot.slane %v4927, 5
      %v4930 = vor.u32 %v4926, %v4929
      %v4931 = vrot.slane %v4930, 4
      %v4933 = vshll.u32 %v4722, 16
      %v4935 = vrot.slane %v4933, 5
      %v4936 = vsel %vm441, %v4931, %v4935
      %v4937 = vshrl.u32 %v4722, 16
      %v4939 = vrot.slane %v4937, 4
      %v4940 = vor.u32 %v4939, %v4935
      %v4941 = vrot.slane %v4940, 4
      %v4943 = vshll.u32 %v4746, 16
      %v4945 = vrot.slane %v4943, 5
      %v4946 = vsel %vm441, %v4941, %v4945
      %v4948 = vshrl.u32 %v4723, 16
      %v4950 = vrot.slane %v4948, 4
      %v4951 = vshll.u32 %v4723, 16
      %v4953 = vrot.slane %v4951, 5
      %v4954 = vor.u32 %v4950, %v4953
      %v4955 = vrot.slane %v4954, 4
      %v4957 = vshll.u32 %v4724, 16
      %v4959 = vrot.slane %v4957, 5
      %v4960 = vsel %vm441, %v4955, %v4959
      %v4961 = vshrl.u32 %v4724, 16
      %v4963 = vrot.slane %v4961, 4
      %v4964 = vor.u32 %v4963, %v4959
      %v4965 = vrot.slane %v4964, 4
      %v4967 = vshll.u32 %v4747, 16
      %v4969 = vrot.slane %v4967, 5
      %v4970 = vsel %vm441, %v4965, %v4969
      %v4972 = vshrl.u32 %v4725, 16
      %v4974 = vrot.slane %v4972, 4
      %v4975 = vshll.u32 %v4725, 16
      %v4977 = vrot.slane %v4975, 5
      %v4978 = vor.u32 %v4974, %v4977
      %v4979 = vrot.slane %v4978, 4
      %v4981 = vshll.u32 %v4726, 16
      %v4983 = vrot.slane %v4981, 5
      %v4984 = vsel %vm441, %v4979, %v4983
      %v4985 = vshrl.u32 %v4726, 16
      %v4987 = vrot.slane %v4985, 4
      %v4988 = vor.u32 %v4987, %v4983
      %v4989 = vrot.slane %v4988, 4
      %v4991 = vshll.u32 %v4748, 16
      %v4993 = vrot.slane %v4991, 5
      %v4994 = vsel %vm441, %v4989, %v4993
      %v4996 = vshrl.u32 %v4727, 16
      %v4998 = vrot.slane %v4996, 4
      %v4999 = vshll.u32 %v4727, 16
      %v5001 = vrot.slane %v4999, 5
      %v5002 = vor.u32 %v4998, %v5001
      %v5003 = vrot.slane %v5002, 4
      %v5005 = vshll.u32 %v4728, 16
      %v5007 = vrot.slane %v5005, 5
      %v5008 = vsel %vm441, %v5003, %v5007
      %v5009 = vshrl.u32 %v4728, 16
      %v5011 = vrot.slane %v5009, 4
      %v5012 = vor.u32 %v5011, %v5007
      %v5013 = vrot.slane %v5012, 4
      %v5015 = vshll.u32 %v4749, 16
      %v5017 = vrot.slane %v5015, 5
      %v5018 = vsel %vm441, %v5013, %v5017
      %v5020 = vshrl.u32 %v4729, 16
      %v5022 = vrot.slane %v5020, 4
      %v5023 = vshll.u32 %v4729, 16
      %v5025 = vrot.slane %v5023, 5
      %v5026 = vor.u32 %v5022, %v5025
      %v5027 = vrot.slane %v5026, 4
      %v5029 = vshll.u32 %v4730, 16
      %v5031 = vrot.slane %v5029, 5
      %v5032 = vsel %vm441, %v5027, %v5031
      %v5033 = vshrl.u32 %v4730, 16
      %v5035 = vrot.slane %v5033, 4
      %v5036 = vor.u32 %v5035, %v5031
      %v5037 = vrot.slane %v5036, 4
      %v5039 = vshll.u32 %v4750, 16
      %v5041 = vrot.slane %v5039, 5
      %v5042 = vsel %vm441, %v5037, %v5041
      %v5044 = vshrl.u32 %v4731, 16
      %v5046 = vrot.slane %v5044, 4
      %v5047 = vshll.u32 %v4731, 16
      %v5049 = vrot.slane %v5047, 5
      %v5050 = vor.u32 %v5046, %v5049
      %v5051 = vrot.slane %v5050, 4
      %v5053 = vshll.u32 %v4732, 16
      %v5055 = vrot.slane %v5053, 5
      %v5056 = vsel %vm441, %v5051, %v5055
      %v5057 = vshrl.u32 %v4732, 16
      %v5059 = vrot.slane %v5057, 4
      %v5060 = vor.u32 %v5059, %v5055
      %v5061 = vrot.slane %v5060, 4
      %v5063 = vshll.u32 %v4751, 16
      %v5065 = vrot.slane %v5063, 5
      %v5066 = vsel %vm441, %v5061, %v5065
      %v5068 = vshrl.u32 %v4733, 16
      %v5070 = vrot.slane %v5068, 4
      %v5071 = vshll.u32 %v4733, 16
      %v5073 = vrot.slane %v5071, 5
      %v5074 = vor.u32 %v5070, %v5073
      %v5075 = vrot.slane %v5074, 4
      %v5077 = vshll.u32 %v4734, 16
      %v5079 = vrot.slane %v5077, 5
      %v5080 = vsel %vm441, %v5075, %v5079
      %v5081 = vshrl.u32 %v4734, 16
      %v5083 = vrot.slane %v5081, 4
      %v5084 = vor.u32 %v5083, %v5079
      %v5085 = vrot.slane %v5084, 4
      %v5087 = vshll.u32 %v4752, 16
      %v5089 = vrot.slane %v5087, 5
      %v5090 = vsel %vm441, %v5085, %v5089
      %v5092 = vshrl.u32 %v4735, 16
      %v5094 = vrot.slane %v5092, 4
      %v5095 = vshll.u32 %v4735, 16
      %v5097 = vrot.slane %v5095, 5
      %v5098 = vor.u32 %v5094, %v5097
      %v5099 = vrot.slane %v5098, 4
      %v5101 = vshll.u32 %v4736, 16
      %v5103 = vrot.slane %v5101, 5
      %v5104 = vsel %vm441, %v5099, %v5103
      %v5105 = vshrl.u32 %v4736, 16
      %v5107 = vrot.slane %v5105, 4
      %v5108 = vor.u32 %v5107, %v5103
      %v5109 = vrot.slane %v5108, 4
      %v5111 = vshll.u32 %v4753, 16
      %v5113 = vrot.slane %v5111, 5
      %v5114 = vsel %vm441, %v5109, %v5113
      %v5116 = vshrl.u32 %v4737, 16
      %v5118 = vrot.slane %v5116, 4
      %v5119 = vshll.u32 %v4737, 16
      %v5121 = vrot.slane %v5119, 5
      %v5122 = vor.u32 %v5118, %v5121
      %v5123 = vrot.slane %v5122, 4
      %v5125 = vshll.u32 %v4738, 16
      %v5127 = vrot.slane %v5125, 5
      %v5128 = vsel %vm441, %v5123, %v5127
      %v5129 = vshrl.u32 %v4738, 16
      %v5131 = vrot.slane %v5129, 4
      %v5132 = vor.u32 %v5131, %v5127
      %v5133 = vrot.slane %v5132, 4
      %v5135 = vshll.u32 %v4754, 16
      %v5137 = vrot.slane %v5135, 5
      %v5138 = vsel %vm441, %v5133, %v5137
      %v5139 = vld [vmem:[%s289] sm:$0xe]
      %v5140 = vld [vmem:[%s289 + $0xc] sm:$0xe]
      %v5141 = vld [vmem:[%s289 + $0x18] sm:$0xe]
      %v5142 = vld [vmem:[%s289 + $0x24] sm:$0xe]
      %v5143 = vld [vmem:[%s289 + $0x30] sm:$0xe]
      %v5144 = vld [vmem:[%s289 + $0x3c] sm:$0xe]
      %v5145 = vld [vmem:[%s289 + $0x48] sm:$0xe]
      %v5146 = vld [vmem:[%s289 + $0x54] sm:$0xe]
      %v5147 = vld [vmem:[%s289 + $0x60] sm:$0xe]
      %v5148 = vld [vmem:[%s289 + $0x6c] sm:$0xe]
      %v5149 = vld [vmem:[%s289 + $0x78] sm:$0xe]
      %v5150 = vld [vmem:[%s289 + $0x84] sm:$0xe]
      %v5151 = vld [vmem:[%s289 + $0x90] sm:$0xe]
      %v5152 = vld [vmem:[%s289 + $0x9c] sm:$0xe]
      %v5153 = vld [vmem:[%s289 + $0xa8] sm:$0xe]
      %v5154 = vld [vmem:[%s289 + $0xb4] sm:$0xe]
      %v5203 = vrot.slane %v5139, 5
      %v5204 = vrot.slane %v5203, 4
      %v5205 = vrot.slane %v4708, 5
      %v5206 = vsel %vm892, %v5204, %v5205
      %v5207 = vrot.slane %v5205, 4
      %v5208 = vrot.slane %v4739, 5
      %v5209 = vsel %vm892, %v5207, %v5208
      %v5210 = vrot.slane %v5140, 5
      %v5211 = vrot.slane %v5210, 4
      %v5212 = vrot.slane %v4710, 5
      %v5213 = vsel %vm892, %v5211, %v5212
      %v5214 = vrot.slane %v5212, 4
      %v5215 = vrot.slane %v4740, 5
      %v5216 = vsel %vm892, %v5214, %v5215
      %v5217 = vrot.slane %v5141, 5
      %v5218 = vrot.slane %v5217, 4
      %v5219 = vrot.slane %v4712, 5
      %v5220 = vsel %vm892, %v5218, %v5219
      %v5221 = vrot.slane %v5219, 4
      %v5222 = vrot.slane %v4741, 5
      %v5223 = vsel %vm892, %v5221, %v5222
      %v5224 = vrot.slane %v5142, 5
      %v5225 = vrot.slane %v5224, 4
      %v5226 = vrot.slane %v4714, 5
      %v5227 = vsel %vm892, %v5225, %v5226
      %v5228 = vrot.slane %v5226, 4
      %v5229 = vrot.slane %v4742, 5
      %v5230 = vsel %vm892, %v5228, %v5229
      %v5231 = vrot.slane %v5143, 5
      %v5232 = vrot.slane %v5231, 4
      %v5233 = vrot.slane %v4716, 5
      %v5234 = vsel %vm892, %v5232, %v5233
      %v5235 = vrot.slane %v5233, 4
      %v5236 = vrot.slane %v4743, 5
      %v5237 = vsel %vm892, %v5235, %v5236
      %v5238 = vrot.slane %v5144, 5
      %v5239 = vrot.slane %v5238, 4
      %v5240 = vrot.slane %v4718, 5
      %v5241 = vsel %vm892, %v5239, %v5240
      %v5242 = vrot.slane %v5240, 4
      %v5243 = vrot.slane %v4744, 5
      %v5244 = vsel %vm892, %v5242, %v5243
      %v5245 = vrot.slane %v5145, 5
      %v5246 = vrot.slane %v5245, 4
      %v5247 = vrot.slane %v4720, 5
      %v5248 = vsel %vm892, %v5246, %v5247
      %v5249 = vrot.slane %v5247, 4
      %v5250 = vrot.slane %v4745, 5
      %v5251 = vsel %vm892, %v5249, %v5250
      %v5252 = vrot.slane %v5146, 5
      %v5253 = vrot.slane %v5252, 4
      %v5254 = vrot.slane %v4722, 5
      %v5255 = vsel %vm892, %v5253, %v5254
      %v5256 = vrot.slane %v5254, 4
      %v5257 = vrot.slane %v4746, 5
      %v5258 = vsel %vm892, %v5256, %v5257
      %v5259 = vrot.slane %v5147, 5
      %v5260 = vrot.slane %v5259, 4
      %v5261 = vrot.slane %v4724, 5
      %v5262 = vsel %vm892, %v5260, %v5261
      %v5263 = vrot.slane %v5261, 4
      %v5264 = vrot.slane %v4747, 5
      %v5265 = vsel %vm892, %v5263, %v5264
      %v5266 = vrot.slane %v5148, 5
      %v5267 = vrot.slane %v5266, 4
      %v5268 = vrot.slane %v4726, 5
      %v5269 = vsel %vm892, %v5267, %v5268
      %v5270 = vrot.slane %v5268, 4
      %v5271 = vrot.slane %v4748, 5
      %v5272 = vsel %vm892, %v5270, %v5271
      %v5273 = vrot.slane %v5149, 5
      %v5274 = vrot.slane %v5273, 4
      %v5275 = vrot.slane %v4728, 5
      %v5276 = vsel %vm892, %v5274, %v5275
      %v5277 = vrot.slane %v5275, 4
      %v5278 = vrot.slane %v4749, 5
      %v5279 = vsel %vm892, %v5277, %v5278
      %v5280 = vrot.slane %v5150, 5
      %v5281 = vrot.slane %v5280, 4
      %v5282 = vrot.slane %v4730, 5
      %v5283 = vsel %vm892, %v5281, %v5282
      %v5284 = vrot.slane %v5282, 4
      %v5285 = vrot.slane %v4750, 5
      %v5286 = vsel %vm892, %v5284, %v5285
      %v5287 = vrot.slane %v5151, 5
      %v5288 = vrot.slane %v5287, 4
      %v5289 = vrot.slane %v4732, 5
      %v5290 = vsel %vm892, %v5288, %v5289
      %v5291 = vrot.slane %v5289, 4
      %v5292 = vrot.slane %v4751, 5
      %v5293 = vsel %vm892, %v5291, %v5292
      %v5294 = vrot.slane %v5152, 5
      %v5295 = vrot.slane %v5294, 4
      %v5296 = vrot.slane %v4734, 5
      %v5297 = vsel %vm892, %v5295, %v5296
      %v5298 = vrot.slane %v5296, 4
      %v5299 = vrot.slane %v4752, 5
      %v5300 = vsel %vm892, %v5298, %v5299
      %v5301 = vrot.slane %v5153, 5
      %v5302 = vrot.slane %v5301, 4
      %v5303 = vrot.slane %v4736, 5
      %v5304 = vsel %vm892, %v5302, %v5303
      %v5305 = vrot.slane %v5303, 4
      %v5306 = vrot.slane %v4753, 5
      %v5307 = vsel %vm892, %v5305, %v5306
      %v5308 = vrot.slane %v5154, 5
      %v5309 = vrot.slane %v5308, 4
      %v5310 = vrot.slane %v4738, 5
      %v5311 = vsel %vm892, %v5309, %v5310
      %v5312 = vrot.slane %v5310, 4
      %v5313 = vrot.slane %v4754, 5
      %v5314 = vsel %vm892, %v5312, %v5313
      %s5315 = scalar_lea.vmem [#allocation2], 24
      %v5316 = vld [vmem:[%s5315] sm:$0xf]
      %v5317 = vld [vmem:[%s5315 + $0x4] sm:$0xf]
      %v5318 = vld [vmem:[%s5315 + $0xc] sm:$0xf]
      %v5319 = vld [vmem:[%s5315 + $0x10] sm:$0xf]
      %v5320 = vld [vmem:[%s5315 + $0x18] sm:$0xf]
      %v5321 = vld [vmem:[%s5315 + $0x1c] sm:$0xf]
      %v5322 = vld [vmem:[%s5315 + $0x24] sm:$0xf]
      %v5323 = vld [vmem:[%s5315 + $0x28] sm:$0xf]
      %v5324 = vld [vmem:[%s5315 + $0x30] sm:$0xf]
      %v5325 = vld [vmem:[%s5315 + $0x34] sm:$0xf]
      %v5326 = vld [vmem:[%s5315 + $0x3c] sm:$0xf]
      %v5327 = vld [vmem:[%s5315 + $0x40] sm:$0xf]
      %v5328 = vld [vmem:[%s5315 + $0x48] sm:$0xf]
      %v5329 = vld [vmem:[%s5315 + $0x4c] sm:$0xf]
      %v5330 = vld [vmem:[%s5315 + $0x54] sm:$0xf]
      %v5331 = vld [vmem:[%s5315 + $0x58] sm:$0xf]
      %v5332 = vld [vmem:[%s5315 + $0x60] sm:$0xf]
      %v5333 = vld [vmem:[%s5315 + $0x64] sm:$0xf]
      %v5334 = vld [vmem:[%s5315 + $0x6c] sm:$0xf]
      %v5335 = vld [vmem:[%s5315 + $0x70] sm:$0xf]
      %v5336 = vld [vmem:[%s5315 + $0x78] sm:$0xf]
      %v5337 = vld [vmem:[%s5315 + $0x7c] sm:$0xf]
      %v5338 = vld [vmem:[%s5315 + $0x84] sm:$0xf]
      %v5339 = vld [vmem:[%s5315 + $0x88] sm:$0xf]
      %v5340 = vld [vmem:[%s5315 + $0x90] sm:$0xf]
      %v5341 = vld [vmem:[%s5315 + $0x94] sm:$0xf]
      %v5342 = vld [vmem:[%s5315 + $0x9c] sm:$0xf]
      %v5343 = vld [vmem:[%s5315 + $0xa0] sm:$0xf]
      %v5344 = vld [vmem:[%s5315 + $0xa8] sm:$0xf]
      %v5345 = vld [vmem:[%s5315 + $0xac] sm:$0xf]
      %v5346 = vld [vmem:[%s5315 + $0xb4] sm:$0xf]
      %v5347 = vld [vmem:[%s5315 + $0xb8] sm:$0xf]
      %v5348 = vld [vmem:[%s5315 + $0x8] sm:$0x1]
      %v5349 = vld [vmem:[%s5315 + $0x14] sm:$0x1]
      %v5350 = vld [vmem:[%s5315 + $0x20] sm:$0x1]
      %v5351 = vld [vmem:[%s5315 + $0x2c] sm:$0x1]
      %v5352 = vld [vmem:[%s5315 + $0x38] sm:$0x1]
      %v5353 = vld [vmem:[%s5315 + $0x44] sm:$0x1]
      %v5354 = vld [vmem:[%s5315 + $0x50] sm:$0x1]
      %v5355 = vld [vmem:[%s5315 + $0x5c] sm:$0x1]
      %v5356 = vld [vmem:[%s5315 + $0x68] sm:$0x1]
      %v5357 = vld [vmem:[%s5315 + $0x74] sm:$0x1]
      %v5358 = vld [vmem:[%s5315 + $0x80] sm:$0x1]
      %v5359 = vld [vmem:[%s5315 + $0x8c] sm:$0x1]
      %v5360 = vld [vmem:[%s5315 + $0x98] sm:$0x1]
      %v5361 = vld [vmem:[%s5315 + $0xa4] sm:$0x1]
      %v5362 = vld [vmem:[%s5315 + $0xb0] sm:$0x1]
      %v5363 = vld [vmem:[%s5315 + $0xbc] sm:$0x1]
      %v5365 = vshrl.u32 %v5316, 16
      %v5367 = vrot.slane %v5365, 4
      %v5368 = vshll.u32 %v5316, 16
      %v5370 = vrot.slane %v5368, 5
      %v5371 = vor.u32 %v5367, %v5370
      %v5372 = vrot.slane %v5371, 4
      %v5374 = vshll.u32 %v5317, 16
      %v5376 = vrot.slane %v5374, 5
      %v5377 = vsel %vm441, %v5372, %v5376
      %v5378 = vshrl.u32 %v5317, 16
      %v5380 = vrot.slane %v5378, 4
      %v5381 = vor.u32 %v5380, %v5376
      %v5382 = vrot.slane %v5381, 4
      %v5384 = vshll.u32 %v5348, 16
      %v5386 = vrot.slane %v5384, 5
      %v5387 = vsel %vm441, %v5382, %v5386
      %v5389 = vshrl.u32 %v5318, 16
      %v5391 = vrot.slane %v5389, 4
      %v5392 = vshll.u32 %v5318, 16
      %v5394 = vrot.slane %v5392, 5
      %v5395 = vor.u32 %v5391, %v5394
      %v5396 = vrot.slane %v5395, 4
      %v5398 = vshll.u32 %v5319, 16
      %v5400 = vrot.slane %v5398, 5
      %v5401 = vsel %vm441, %v5396, %v5400
      %v5402 = vshrl.u32 %v5319, 16
      %v5404 = vrot.slane %v5402, 4
      %v5405 = vor.u32 %v5404, %v5400
      %v5406 = vrot.slane %v5405, 4
      %v5408 = vshll.u32 %v5349, 16
      %v5410 = vrot.slane %v5408, 5
      %v5411 = vsel %vm441, %v5406, %v5410
      %v5413 = vshrl.u32 %v5320, 16
      %v5415 = vrot.slane %v5413, 4
      %v5416 = vshll.u32 %v5320, 16
      %v5418 = vrot.slane %v5416, 5
      %v5419 = vor.u32 %v5415, %v5418
      %v5420 = vrot.slane %v5419, 4
      %v5422 = vshll.u32 %v5321, 16
      %v5424 = vrot.slane %v5422, 5
      %v5425 = vsel %vm441, %v5420, %v5424
      %v5426 = vshrl.u32 %v5321, 16
      %v5428 = vrot.slane %v5426, 4
      %v5429 = vor.u32 %v5428, %v5424
      %v5430 = vrot.slane %v5429, 4
      %v5432 = vshll.u32 %v5350, 16
      %v5434 = vrot.slane %v5432, 5
      %v5435 = vsel %vm441, %v5430, %v5434
      %v5437 = vshrl.u32 %v5322, 16
      %v5439 = vrot.slane %v5437, 4
      %v5440 = vshll.u32 %v5322, 16
      %v5442 = vrot.slane %v5440, 5
      %v5443 = vor.u32 %v5439, %v5442
      %v5444 = vrot.slane %v5443, 4
      %v5446 = vshll.u32 %v5323, 16
      %v5448 = vrot.slane %v5446, 5
      %v5449 = vsel %vm441, %v5444, %v5448
      %v5450 = vshrl.u32 %v5323, 16
      %v5452 = vrot.slane %v5450, 4
      %v5453 = vor.u32 %v5452, %v5448
      %v5454 = vrot.slane %v5453, 4
      %v5456 = vshll.u32 %v5351, 16
      %v5458 = vrot.slane %v5456, 5
      %v5459 = vsel %vm441, %v5454, %v5458
      %v5461 = vshrl.u32 %v5324, 16
      %v5463 = vrot.slane %v5461, 4
      %v5464 = vshll.u32 %v5324, 16
      %v5466 = vrot.slane %v5464, 5
      %v5467 = vor.u32 %v5463, %v5466
      %v5468 = vrot.slane %v5467, 4
      %v5470 = vshll.u32 %v5325, 16
      %v5472 = vrot.slane %v5470, 5
      %v5473 = vsel %vm441, %v5468, %v5472
      %v5474 = vshrl.u32 %v5325, 16
      %v5476 = vrot.slane %v5474, 4
      %v5477 = vor.u32 %v5476, %v5472
      %v5478 = vrot.slane %v5477, 4
      %v5480 = vshll.u32 %v5352, 16
      %v5482 = vrot.slane %v5480, 5
      %v5483 = vsel %vm441, %v5478, %v5482
      %v5485 = vshrl.u32 %v5326, 16
      %v5487 = vrot.slane %v5485, 4
      %v5488 = vshll.u32 %v5326, 16
      %v5490 = vrot.slane %v5488, 5
      %v5491 = vor.u32 %v5487, %v5490
      %v5492 = vrot.slane %v5491, 4
      %v5494 = vshll.u32 %v5327, 16
      %v5496 = vrot.slane %v5494, 5
      %v5497 = vsel %vm441, %v5492, %v5496
      %v5498 = vshrl.u32 %v5327, 16
      %v5500 = vrot.slane %v5498, 4
      %v5501 = vor.u32 %v5500, %v5496
      %v5502 = vrot.slane %v5501, 4
      %v5504 = vshll.u32 %v5353, 16
      %v5506 = vrot.slane %v5504, 5
      %v5507 = vsel %vm441, %v5502, %v5506
      %v5509 = vshrl.u32 %v5328, 16
      %v5511 = vrot.slane %v5509, 4
      %v5512 = vshll.u32 %v5328, 16
      %v5514 = vrot.slane %v5512, 5
      %v5515 = vor.u32 %v5511, %v5514
      %v5516 = vrot.slane %v5515, 4
      %v5518 = vshll.u32 %v5329, 16
      %v5520 = vrot.slane %v5518, 5
      %v5521 = vsel %vm441, %v5516, %v5520
      %v5522 = vshrl.u32 %v5329, 16
      %v5524 = vrot.slane %v5522, 4
      %v5525 = vor.u32 %v5524, %v5520
      %v5526 = vrot.slane %v5525, 4
      %v5528 = vshll.u32 %v5354, 16
      %v5530 = vrot.slane %v5528, 5
      %v5531 = vsel %vm441, %v5526, %v5530
      %v5533 = vshrl.u32 %v5330, 16
      %v5535 = vrot.slane %v5533, 4
      %v5536 = vshll.u32 %v5330, 16
      %v5538 = vrot.slane %v5536, 5
      %v5539 = vor.u32 %v5535, %v5538
      %v5540 = vrot.slane %v5539, 4
      %v5542 = vshll.u32 %v5331, 16
      %v5544 = vrot.slane %v5542, 5
      %v5545 = vsel %vm441, %v5540, %v5544
      %v5546 = vshrl.u32 %v5331, 16
      %v5548 = vrot.slane %v5546, 4
      %v5549 = vor.u32 %v5548, %v5544
      %v5550 = vrot.slane %v5549, 4
      %v5552 = vshll.u32 %v5355, 16
      %v5554 = vrot.slane %v5552, 5
      %v5555 = vsel %vm441, %v5550, %v5554
      %v5557 = vshrl.u32 %v5332, 16
      %v5559 = vrot.slane %v5557, 4
      %v5560 = vshll.u32 %v5332, 16
      %v5562 = vrot.slane %v5560, 5
      %v5563 = vor.u32 %v5559, %v5562
      %v5564 = vrot.slane %v5563, 4
      %v5566 = vshll.u32 %v5333, 16
      %v5568 = vrot.slane %v5566, 5
      %v5569 = vsel %vm441, %v5564, %v5568
      %v5570 = vshrl.u32 %v5333, 16
      %v5572 = vrot.slane %v5570, 4
      %v5573 = vor.u32 %v5572, %v5568
      %v5574 = vrot.slane %v5573, 4
      %v5576 = vshll.u32 %v5356, 16
      %v5578 = vrot.slane %v5576, 5
      %v5579 = vsel %vm441, %v5574, %v5578
      %v5581 = vshrl.u32 %v5334, 16
      %v5583 = vrot.slane %v5581, 4
      %v5584 = vshll.u32 %v5334, 16
      %v5586 = vrot.slane %v5584, 5
      %v5587 = vor.u32 %v5583, %v5586
      %v5588 = vrot.slane %v5587, 4
      %v5590 = vshll.u32 %v5335, 16
      %v5592 = vrot.slane %v5590, 5
      %v5593 = vsel %vm441, %v5588, %v5592
      %v5594 = vshrl.u32 %v5335, 16
      %v5596 = vrot.slane %v5594, 4
      %v5597 = vor.u32 %v5596, %v5592
      %v5598 = vrot.slane %v5597, 4
      %v5600 = vshll.u32 %v5357, 16
      %v5602 = vrot.slane %v5600, 5
      %v5603 = vsel %vm441, %v5598, %v5602
      %v5605 = vshrl.u32 %v5336, 16
      %v5607 = vrot.slane %v5605, 4
      %v5608 = vshll.u32 %v5336, 16
      %v5610 = vrot.slane %v5608, 5
      %v5611 = vor.u32 %v5607, %v5610
      %v5612 = vrot.slane %v5611, 4
      %v5614 = vshll.u32 %v5337, 16
      %v5616 = vrot.slane %v5614, 5
      %v5617 = vsel %vm441, %v5612, %v5616
      %v5618 = vshrl.u32 %v5337, 16
      %v5620 = vrot.slane %v5618, 4
      %v5621 = vor.u32 %v5620, %v5616
      %v5622 = vrot.slane %v5621, 4
      %v5624 = vshll.u32 %v5358, 16
      %v5626 = vrot.slane %v5624, 5
      %v5627 = vsel %vm441, %v5622, %v5626
      %v5629 = vshrl.u32 %v5338, 16
      %v5631 = vrot.slane %v5629, 4
      %v5632 = vshll.u32 %v5338, 16
      %v5634 = vrot.slane %v5632, 5
      %v5635 = vor.u32 %v5631, %v5634
      %v5636 = vrot.slane %v5635, 4
      %v5638 = vshll.u32 %v5339, 16
      %v5640 = vrot.slane %v5638, 5
      %v5641 = vsel %vm441, %v5636, %v5640
      %v5642 = vshrl.u32 %v5339, 16
      %v5644 = vrot.slane %v5642, 4
      %v5645 = vor.u32 %v5644, %v5640
      %v5646 = vrot.slane %v5645, 4
      %v5648 = vshll.u32 %v5359, 16
      %v5650 = vrot.slane %v5648, 5
      %v5651 = vsel %vm441, %v5646, %v5650
      %v5653 = vshrl.u32 %v5340, 16
      %v5655 = vrot.slane %v5653, 4
      %v5656 = vshll.u32 %v5340, 16
      %v5658 = vrot.slane %v5656, 5
      %v5659 = vor.u32 %v5655, %v5658
      %v5660 = vrot.slane %v5659, 4
      %v5662 = vshll.u32 %v5341, 16
      %v5664 = vrot.slane %v5662, 5
      %v5665 = vsel %vm441, %v5660, %v5664
      %v5666 = vshrl.u32 %v5341, 16
      %v5668 = vrot.slane %v5666, 4
      %v5669 = vor.u32 %v5668, %v5664
      %v5670 = vrot.slane %v5669, 4
      %v5672 = vshll.u32 %v5360, 16
      %v5674 = vrot.slane %v5672, 5
      %v5675 = vsel %vm441, %v5670, %v5674
      %v5677 = vshrl.u32 %v5342, 16
      %v5679 = vrot.slane %v5677, 4
      %v5680 = vshll.u32 %v5342, 16
      %v5682 = vrot.slane %v5680, 5
      %v5683 = vor.u32 %v5679, %v5682
      %v5684 = vrot.slane %v5683, 4
      %v5686 = vshll.u32 %v5343, 16
      %v5688 = vrot.slane %v5686, 5
      %v5689 = vsel %vm441, %v5684, %v5688
      %v5690 = vshrl.u32 %v5343, 16
      %v5692 = vrot.slane %v5690, 4
      %v5693 = vor.u32 %v5692, %v5688
      %v5694 = vrot.slane %v5693, 4
      %v5696 = vshll.u32 %v5361, 16
      %v5698 = vrot.slane %v5696, 5
      %v5699 = vsel %vm441, %v5694, %v5698
      %v5701 = vshrl.u32 %v5344, 16
      %v5703 = vrot.slane %v5701, 4
      %v5704 = vshll.u32 %v5344, 16
      %v5706 = vrot.slane %v5704, 5
      %v5707 = vor.u32 %v5703, %v5706
      %v5708 = vrot.slane %v5707, 4
      %v5710 = vshll.u32 %v5345, 16
      %v5712 = vrot.slane %v5710, 5
      %v5713 = vsel %vm441, %v5708, %v5712
      %v5714 = vshrl.u32 %v5345, 16
      %v5716 = vrot.slane %v5714, 4
      %v5717 = vor.u32 %v5716, %v5712
      %v5718 = vrot.slane %v5717, 4
      %v5720 = vshll.u32 %v5362, 16
      %v5722 = vrot.slane %v5720, 5
      %v5723 = vsel %vm441, %v5718, %v5722
      %v5725 = vshrl.u32 %v5346, 16
      %v5727 = vrot.slane %v5725, 4
      %v5728 = vshll.u32 %v5346, 16
      %v5730 = vrot.slane %v5728, 5
      %v5731 = vor.u32 %v5727, %v5730
      %v5732 = vrot.slane %v5731, 4
      %v5734 = vshll.u32 %v5347, 16
      %v5736 = vrot.slane %v5734, 5
      %v5737 = vsel %vm441, %v5732, %v5736
      %v5738 = vshrl.u32 %v5347, 16
      %v5740 = vrot.slane %v5738, 4
      %v5741 = vor.u32 %v5740, %v5736
      %v5742 = vrot.slane %v5741, 4
      %v5744 = vshll.u32 %v5363, 16
      %v5746 = vrot.slane %v5744, 5
      %v5747 = vsel %vm441, %v5742, %v5746
      %v5748 = vld [vmem:[%s5315] sm:$0xe]
      %v5749 = vld [vmem:[%s5315 + $0xc] sm:$0xe]
      %v5750 = vld [vmem:[%s5315 + $0x18] sm:$0xe]
      %v5751 = vld [vmem:[%s5315 + $0x24] sm:$0xe]
      %v5752 = vld [vmem:[%s5315 + $0x30] sm:$0xe]
      %v5753 = vld [vmem:[%s5315 + $0x3c] sm:$0xe]
      %v5754 = vld [vmem:[%s5315 + $0x48] sm:$0xe]
      %v5755 = vld [vmem:[%s5315 + $0x54] sm:$0xe]
      %v5756 = vld [vmem:[%s5315 + $0x60] sm:$0xe]
      %v5757 = vld [vmem:[%s5315 + $0x6c] sm:$0xe]
      %v5758 = vld [vmem:[%s5315 + $0x78] sm:$0xe]
      %v5759 = vld [vmem:[%s5315 + $0x84] sm:$0xe]
      %v5760 = vld [vmem:[%s5315 + $0x90] sm:$0xe]
      %v5761 = vld [vmem:[%s5315 + $0x9c] sm:$0xe]
      %v5762 = vld [vmem:[%s5315 + $0xa8] sm:$0xe]
      %v5763 = vld [vmem:[%s5315 + $0xb4] sm:$0xe]
      %v5812 = vrot.slane %v5748, 5
      %v5813 = vrot.slane %v5812, 4
      %v5814 = vrot.slane %v5317, 5
      %v5815 = vsel %vm892, %v5813, %v5814
      %v5816 = vrot.slane %v5814, 4
      %v5817 = vrot.slane %v5348, 5
      %v5818 = vsel %vm892, %v5816, %v5817
      %v5819 = vrot.slane %v5749, 5
      %v5820 = vrot.slane %v5819, 4
      %v5821 = vrot.slane %v5319, 5
      %v5822 = vsel %vm892, %v5820, %v5821
      %v5823 = vrot.slane %v5821, 4
      %v5824 = vrot.slane %v5349, 5
      %v5825 = vsel %vm892, %v5823, %v5824
      %v5826 = vrot.slane %v5750, 5
      %v5827 = vrot.slane %v5826, 4
      %v5828 = vrot.slane %v5321, 5
      %v5829 = vsel %vm892, %v5827, %v5828
      %v5830 = vrot.slane %v5828, 4
      %v5831 = vrot.slane %v5350, 5
      %v5832 = vsel %vm892, %v5830, %v5831
      %v5833 = vrot.slane %v5751, 5
      %v5834 = vrot.slane %v5833, 4
      %v5835 = vrot.slane %v5323, 5
      %v5836 = vsel %vm892, %v5834, %v5835
      %v5837 = vrot.slane %v5835, 4
      %v5838 = vrot.slane %v5351, 5
      %v5839 = vsel %vm892, %v5837, %v5838
      %v5840 = vrot.slane %v5752, 5
      %v5841 = vrot.slane %v5840, 4
      %v5842 = vrot.slane %v5325, 5
      %v5843 = vsel %vm892, %v5841, %v5842
      %v5844 = vrot.slane %v5842, 4
      %v5845 = vrot.slane %v5352, 5
      %v5846 = vsel %vm892, %v5844, %v5845
      %v5847 = vrot.slane %v5753, 5
      %v5848 = vrot.slane %v5847, 4
      %v5849 = vrot.slane %v5327, 5
      %v5850 = vsel %vm892, %v5848, %v5849
      %v5851 = vrot.slane %v5849, 4
      %v5852 = vrot.slane %v5353, 5
      %v5853 = vsel %vm892, %v5851, %v5852
      %v5854 = vrot.slane %v5754, 5
      %v5855 = vrot.slane %v5854, 4
      %v5856 = vrot.slane %v5329, 5
      %v5857 = vsel %vm892, %v5855, %v5856
      %v5858 = vrot.slane %v5856, 4
      %v5859 = vrot.slane %v5354, 5
      %v5860 = vsel %vm892, %v5858, %v5859
      %v5861 = vrot.slane %v5755, 5
      %v5862 = vrot.slane %v5861, 4
      %v5863 = vrot.slane %v5331, 5
      %v5864 = vsel %vm892, %v5862, %v5863
      %v5865 = vrot.slane %v5863, 4
      %v5866 = vrot.slane %v5355, 5
      %v5867 = vsel %vm892, %v5865, %v5866
      %v5868 = vrot.slane %v5756, 5
      %v5869 = vrot.slane %v5868, 4
      %v5870 = vrot.slane %v5333, 5
      %v5871 = vsel %vm892, %v5869, %v5870
      %v5872 = vrot.slane %v5870, 4
      %v5873 = vrot.slane %v5356, 5
      %v5874 = vsel %vm892, %v5872, %v5873
      %v5875 = vrot.slane %v5757, 5
      %v5876 = vrot.slane %v5875, 4
      %v5877 = vrot.slane %v5335, 5
      %v5878 = vsel %vm892, %v5876, %v5877
      %v5879 = vrot.slane %v5877, 4
      %v5880 = vrot.slane %v5357, 5
      %v5881 = vsel %vm892, %v5879, %v5880
      %v5882 = vrot.slane %v5758, 5
      %v5883 = vrot.slane %v5882, 4
      %v5884 = vrot.slane %v5337, 5
      %v5885 = vsel %vm892, %v5883, %v5884
      %v5886 = vrot.slane %v5884, 4
      %v5887 = vrot.slane %v5358, 5
      %v5888 = vsel %vm892, %v5886, %v5887
      %v5889 = vrot.slane %v5759, 5
      %v5890 = vrot.slane %v5889, 4
      %v5891 = vrot.slane %v5339, 5
      %v5892 = vsel %vm892, %v5890, %v5891
      %v5893 = vrot.slane %v5891, 4
      %v5894 = vrot.slane %v5359, 5
      %v5895 = vsel %vm892, %v5893, %v5894
      %v5896 = vrot.slane %v5760, 5
      %v5897 = vrot.slane %v5896, 4
      %v5898 = vrot.slane %v5341, 5
      %v5899 = vsel %vm892, %v5897, %v5898
      %v5900 = vrot.slane %v5898, 4
      %v5901 = vrot.slane %v5360, 5
      %v5902 = vsel %vm892, %v5900, %v5901
      %v5903 = vrot.slane %v5761, 5
      %v5904 = vrot.slane %v5903, 4
      %v5905 = vrot.slane %v5343, 5
      %v5906 = vsel %vm892, %v5904, %v5905
      %v5907 = vrot.slane %v5905, 4
      %v5908 = vrot.slane %v5361, 5
      %v5909 = vsel %vm892, %v5907, %v5908
      %v5910 = vrot.slane %v5762, 5
      %v5911 = vrot.slane %v5910, 4
      %v5912 = vrot.slane %v5345, 5
      %v5913 = vsel %vm892, %v5911, %v5912
      %v5914 = vrot.slane %v5912, 4
      %v5915 = vrot.slane %v5362, 5
      %v5916 = vsel %vm892, %v5914, %v5915
      %v5917 = vrot.slane %v5763, 5
      %v5918 = vrot.slane %v5917, 4
      %v5919 = vrot.slane %v5347, 5
      %v5920 = vsel %vm892, %v5918, %v5919
      %v5921 = vrot.slane %v5919, 4
      %v5922 = vrot.slane %v5363, 5
      %v5923 = vsel %vm892, %v5921, %v5922
      %v5940 = vunpack.c.l.b16 %v4099
      %v5941 = vunpack.c.l.b16 %v4100
      %v5942 = vunpack.c.l.b16 %v4101
      %v5943 = vunpack.c.l.b16 %v4102
      %v5944 = vunpack.c.l.b16 %v4103
      %v5945 = vunpack.c.l.b16 %v4104
      %v5946 = vunpack.c.l.b16 %v4105
      %v5947 = vunpack.c.l.b16 %v4106
      %v5948 = vunpack.c.l.b16 %v4107
      %v5949 = vunpack.c.l.b16 %v4108
      %v5950 = vunpack.c.l.b16 %v4109
      %v5951 = vunpack.c.l.b16 %v4110
      %v5952 = vunpack.c.l.b16 %v4111
      %v5953 = vunpack.c.l.b16 %v4112
      %v5954 = vunpack.c.l.b16 %v4113
      %v5955 = vunpack.c.l.b16 %v4114
      %v5956 = vunpack.c.l.b16 %v4115
      %v5957 = vunpack.c.l.b16 %v4116
      %v5958 = vunpack.c.l.b16 %v4117
      %v5959 = vunpack.c.l.b16 %v4118
      %v5960 = vunpack.c.l.b16 %v4119
      %v5961 = vunpack.c.l.b16 %v4120
      %v5962 = vunpack.c.l.b16 %v4121
      %v5963 = vunpack.c.l.b16 %v4122
      %v5964 = vunpack.c.l.b16 %v4123
      %v5965 = vunpack.c.l.b16 %v4124
      %v5966 = vunpack.c.l.b16 %v4125
      %v5967 = vunpack.c.l.b16 %v4126
      %v5968 = vunpack.c.l.b16 %v4127
      %v5969 = vunpack.c.l.b16 %v4128
      %v5970 = vunpack.c.l.b16 %v4129
      %v5971 = vunpack.c.l.b16 %v4130
      %v5972 = vpack.c.b16 %v5941, %v5940
      %v5973 = vpack.c.b16 %v5943, %v5942
      %v5974 = vpack.c.b16 %v5945, %v5944
      %v5975 = vpack.c.b16 %v5947, %v5946
      %v5976 = vpack.c.b16 %v5949, %v5948
      %v5977 = vpack.c.b16 %v5951, %v5950
      %v5978 = vpack.c.b16 %v5953, %v5952
      %v5979 = vpack.c.b16 %v5955, %v5954
      %v5980 = vpack.c.b16 %v5957, %v5956
      %v5981 = vpack.c.b16 %v5959, %v5958
      %v5982 = vpack.c.b16 %v5961, %v5960
      %v5983 = vpack.c.b16 %v5963, %v5962
      %v5984 = vpack.c.b16 %v5965, %v5964
      %v5985 = vpack.c.b16 %v5967, %v5966
      %v5986 = vpack.c.b16 %v5969, %v5968
      %v5987 = vpack.c.b16 %v5971, %v5970
      %v5988 = vunpack.c.l.b16 %v4160
      %v5989 = vunpack.c.l.b16 %v4170
      %v5990 = vunpack.c.l.b16 %v4184
      %v5991 = vunpack.c.l.b16 %v4194
      %v5992 = vunpack.c.l.b16 %v4208
      %v5993 = vunpack.c.l.b16 %v4218
      %v5994 = vunpack.c.l.b16 %v4232
      %v5995 = vunpack.c.l.b16 %v4242
      %v5996 = vunpack.c.l.b16 %v4256
      %v5997 = vunpack.c.l.b16 %v4266
      %v5998 = vunpack.c.l.b16 %v4280
      %v5999 = vunpack.c.l.b16 %v4290
      %v6000 = vunpack.c.l.b16 %v4304
      %v6001 = vunpack.c.l.b16 %v4314
      %v6002 = vunpack.c.l.b16 %v4328
      %v6003 = vunpack.c.l.b16 %v4338
      %v6004 = vunpack.c.l.b16 %v4352
      %v6005 = vunpack.c.l.b16 %v4362
      %v6006 = vunpack.c.l.b16 %v4376
      %v6007 = vunpack.c.l.b16 %v4386
      %v6008 = vunpack.c.l.b16 %v4400
      %v6009 = vunpack.c.l.b16 %v4410
      %v6010 = vunpack.c.l.b16 %v4424
      %v6011 = vunpack.c.l.b16 %v4434
      %v6012 = vunpack.c.l.b16 %v4448
      %v6013 = vunpack.c.l.b16 %v4458
      %v6014 = vunpack.c.l.b16 %v4472
      %v6015 = vunpack.c.l.b16 %v4482
      %v6016 = vunpack.c.l.b16 %v4496
      %v6017 = vunpack.c.l.b16 %v4506
      %v6018 = vunpack.c.l.b16 %v4520
      %v6019 = vunpack.c.l.b16 %v4530
      %v6020 = vpack.c.b16 %v5989, %v5988
      %v6021 = vpack.c.b16 %v5991, %v5990
      %v6022 = vpack.c.b16 %v5993, %v5992
      %v6023 = vpack.c.b16 %v5995, %v5994
      %v6024 = vpack.c.b16 %v5997, %v5996
      %v6025 = vpack.c.b16 %v5999, %v5998
      %v6026 = vpack.c.b16 %v6001, %v6000
      %v6027 = vpack.c.b16 %v6003, %v6002
      %v6028 = vpack.c.b16 %v6005, %v6004
      %v6029 = vpack.c.b16 %v6007, %v6006
      %v6030 = vpack.c.b16 %v6009, %v6008
      %v6031 = vpack.c.b16 %v6011, %v6010
      %v6032 = vpack.c.b16 %v6013, %v6012
      %v6033 = vpack.c.b16 %v6015, %v6014
      %v6034 = vpack.c.b16 %v6017, %v6016
      %v6035 = vpack.c.b16 %v6019, %v6018
      %6036 = vrot.lane.b32.xlu0 %v6020, 8
      %v6037 = vpop.permute.xlu0 %6036
      %6038 = vrot.lane.b32.xlu0 %v6021, 8
      %v6039 = vpop.permute.xlu0 %6038
      %6040 = vrot.lane.b32.xlu0 %v6022, 8
      %v6041 = vpop.permute.xlu0 %6040
      %6042 = vrot.lane.b32.xlu0 %v6023, 8
      %v6043 = vpop.permute.xlu0 %6042
      %6044 = vrot.lane.b32.xlu0 %v6024, 8
      %v6045 = vpop.permute.xlu0 %6044
      %6046 = vrot.lane.b32.xlu0 %v6025, 8
      %v6047 = vpop.permute.xlu0 %6046
      %6048 = vrot.lane.b32.xlu0 %v6026, 8
      %v6049 = vpop.permute.xlu0 %6048
      %6050 = vrot.lane.b32.xlu0 %v6027, 8
      %v6051 = vpop.permute.xlu0 %6050
      %6052 = vrot.lane.b32.xlu0 %v6028, 8
      %v6053 = vpop.permute.xlu0 %6052
      %6054 = vrot.lane.b32.xlu0 %v6029, 8
      %v6055 = vpop.permute.xlu0 %6054
      %6056 = vrot.lane.b32.xlu0 %v6030, 8
      %v6057 = vpop.permute.xlu0 %6056
      %6058 = vrot.lane.b32.xlu0 %v6031, 8
      %v6059 = vpop.permute.xlu0 %6058
      %6060 = vrot.lane.b32.xlu0 %v6032, 8
      %v6061 = vpop.permute.xlu0 %6060
      %6062 = vrot.lane.b32.xlu0 %v6033, 8
      %v6063 = vpop.permute.xlu0 %6062
      %6064 = vrot.lane.b32.xlu0 %v6034, 8
      %v6065 = vpop.permute.xlu0 %6064
      %6066 = vrot.lane.b32.xlu0 %v6035, 8
      %v6067 = vpop.permute.xlu0 %6066
      %v6068 = vunpack.c.l.b16 %v4598
      %v6069 = vunpack.c.l.b16 %v4601
      %v6070 = vunpack.c.l.b16 %v4605
      %v6071 = vunpack.c.l.b16 %v4608
      %v6072 = vunpack.c.l.b16 %v4612
      %v6073 = vunpack.c.l.b16 %v4615
      %v6074 = vunpack.c.l.b16 %v4619
      %v6075 = vunpack.c.l.b16 %v4622
      %v6076 = vunpack.c.l.b16 %v4626
      %v6077 = vunpack.c.l.b16 %v4629
      %v6078 = vunpack.c.l.b16 %v4633
      %v6079 = vunpack.c.l.b16 %v4636
      %v6080 = vunpack.c.l.b16 %v4640
      %v6081 = vunpack.c.l.b16 %v4643
      %v6082 = vunpack.c.l.b16 %v4647
      %v6083 = vunpack.c.l.b16 %v4650
      %v6084 = vunpack.c.l.b16 %v4654
      %v6085 = vunpack.c.l.b16 %v4657
      %v6086 = vunpack.c.l.b16 %v4661
      %v6087 = vunpack.c.l.b16 %v4664
      %v6088 = vunpack.c.l.b16 %v4668
      %v6089 = vunpack.c.l.b16 %v4671
      %v6090 = vunpack.c.l.b16 %v4675
      %v6091 = vunpack.c.l.b16 %v4678
      %v6092 = vunpack.c.l.b16 %v4682
      %v6093 = vunpack.c.l.b16 %v4685
      %v6094 = vunpack.c.l.b16 %v4689
      %v6095 = vunpack.c.l.b16 %v4692
      %v6096 = vunpack.c.l.b16 %v4696
      %v6097 = vunpack.c.l.b16 %v4699
      %v6098 = vunpack.c.l.b16 %v4703
      %v6099 = vunpack.c.l.b16 %v4706
      %v6100 = vpack.c.b16 %v6069, %v6068
      %v6101 = vpack.c.b16 %v6071, %v6070
      %v6102 = vpack.c.b16 %v6073, %v6072
      %v6103 = vpack.c.b16 %v6075, %v6074
      %v6104 = vpack.c.b16 %v6077, %v6076
      %v6105 = vpack.c.b16 %v6079, %v6078
      %v6106 = vpack.c.b16 %v6081, %v6080
      %v6107 = vpack.c.b16 %v6083, %v6082
      %v6108 = vpack.c.b16 %v6085, %v6084
      %v6109 = vpack.c.b16 %v6087, %v6086
      %v6110 = vpack.c.b16 %v6089, %v6088
      %v6111 = vpack.c.b16 %v6091, %v6090
      %v6112 = vpack.c.b16 %v6093, %v6092
      %v6113 = vpack.c.b16 %v6095, %v6094
      %v6114 = vpack.c.b16 %v6097, %v6096
      %v6115 = vpack.c.b16 %v6099, %v6098
      %6116 = vrot.lane.b32.xlu0 %v6100, 16
      %v6117 = vpop.permute.xlu0 %6116
      %6118 = vrot.lane.b32.xlu0 %v6101, 16
      %v6119 = vpop.permute.xlu0 %6118
      %6120 = vrot.lane.b32.xlu0 %v6102, 16
      %v6121 = vpop.permute.xlu0 %6120
      %6122 = vrot.lane.b32.xlu0 %v6103, 16
      %v6123 = vpop.permute.xlu0 %6122
      %6124 = vrot.lane.b32.xlu0 %v6104, 16
      %v6125 = vpop.permute.xlu0 %6124
      %6126 = vrot.lane.b32.xlu0 %v6105, 16
      %v6127 = vpop.permute.xlu0 %6126
      %6128 = vrot.lane.b32.xlu0 %v6106, 16
      %v6129 = vpop.permute.xlu0 %6128
      %6130 = vrot.lane.b32.xlu0 %v6107, 16
      %v6131 = vpop.permute.xlu0 %6130
      %6132 = vrot.lane.b32.xlu0 %v6108, 16
      %v6133 = vpop.permute.xlu0 %6132
      %6134 = vrot.lane.b32.xlu0 %v6109, 16
      %v6135 = vpop.permute.xlu0 %6134
      %6136 = vrot.lane.b32.xlu0 %v6110, 16
      %v6137 = vpop.permute.xlu0 %6136
      %6138 = vrot.lane.b32.xlu0 %v6111, 16
      %v6139 = vpop.permute.xlu0 %6138
      %6140 = vrot.lane.b32.xlu0 %v6112, 16
      %v6141 = vpop.permute.xlu0 %6140
      %6142 = vrot.lane.b32.xlu0 %v6113, 16
      %v6143 = vpop.permute.xlu0 %6142
      %6144 = vrot.lane.b32.xlu0 %v6114, 16
      %v6145 = vpop.permute.xlu0 %6144
      %6146 = vrot.lane.b32.xlu0 %v6115, 16
      %v6147 = vpop.permute.xlu0 %6146
      %v6164 = vunpack.c.l.b16 %v4707
      %v6165 = vunpack.c.l.b16 %v4708
      %v6166 = vunpack.c.l.b16 %v4709
      %v6167 = vunpack.c.l.b16 %v4710
      %v6168 = vunpack.c.l.b16 %v4711
      %v6169 = vunpack.c.l.b16 %v4712
      %v6170 = vunpack.c.l.b16 %v4713
      %v6171 = vunpack.c.l.b16 %v4714
      %v6172 = vunpack.c.l.b16 %v4715
      %v6173 = vunpack.c.l.b16 %v4716
      %v6174 = vunpack.c.l.b16 %v4717
      %v6175 = vunpack.c.l.b16 %v4718
      %v6176 = vunpack.c.l.b16 %v4719
      %v6177 = vunpack.c.l.b16 %v4720
      %v6178 = vunpack.c.l.b16 %v4721
      %v6179 = vunpack.c.l.b16 %v4722
      %v6180 = vunpack.c.l.b16 %v4723
      %v6181 = vunpack.c.l.b16 %v4724
      %v6182 = vunpack.c.l.b16 %v4725
      %v6183 = vunpack.c.l.b16 %v4726
      %v6184 = vunpack.c.l.b16 %v4727
      %v6185 = vunpack.c.l.b16 %v4728
      %v6186 = vunpack.c.l.b16 %v4729
      %v6187 = vunpack.c.l.b16 %v4730
      %v6188 = vunpack.c.l.b16 %v4731
      %v6189 = vunpack.c.l.b16 %v4732
      %v6190 = vunpack.c.l.b16 %v4733
      %v6191 = vunpack.c.l.b16 %v4734
      %v6192 = vunpack.c.l.b16 %v4735
      %v6193 = vunpack.c.l.b16 %v4736
      %v6194 = vunpack.c.l.b16 %v4737
      %v6195 = vunpack.c.l.b16 %v4738
      %v6196 = vpack.c.b16 %v6165, %v6164
      %v6197 = vpack.c.b16 %v6167, %v6166
      %v6198 = vpack.c.b16 %v6169, %v6168
      %v6199 = vpack.c.b16 %v6171, %v6170
      %v6200 = vpack.c.b16 %v6173, %v6172
      %v6201 = vpack.c.b16 %v6175, %v6174
      %v6202 = vpack.c.b16 %v6177, %v6176
      %v6203 = vpack.c.b16 %v6179, %v6178
      %v6204 = vpack.c.b16 %v6181, %v6180
      %v6205 = vpack.c.b16 %v6183, %v6182
      %v6206 = vpack.c.b16 %v6185, %v6184
      %v6207 = vpack.c.b16 %v6187, %v6186
      %v6208 = vpack.c.b16 %v6189, %v6188
      %v6209 = vpack.c.b16 %v6191, %v6190
      %v6210 = vpack.c.b16 %v6193, %v6192
      %v6211 = vpack.c.b16 %v6195, %v6194
      %6212 = vrot.lane.b32.xlu0 %v6196, 24
      %v6213 = vpop.permute.xlu0 %6212
      %6214 = vrot.lane.b32.xlu0 %v6197, 24
      %v6215 = vpop.permute.xlu0 %6214
      %6216 = vrot.lane.b32.xlu0 %v6198, 24
      %v6217 = vpop.permute.xlu0 %6216
      %6218 = vrot.lane.b32.xlu0 %v6199, 24
      %v6219 = vpop.permute.xlu0 %6218
      %6220 = vrot.lane.b32.xlu0 %v6200, 24
      %v6221 = vpop.permute.xlu0 %6220
      %6222 = vrot.lane.b32.xlu0 %v6201, 24
      %v6223 = vpop.permute.xlu0 %6222
      %6224 = vrot.lane.b32.xlu0 %v6202, 24
      %v6225 = vpop.permute.xlu0 %6224
      %6226 = vrot.lane.b32.xlu0 %v6203, 24
      %v6227 = vpop.permute.xlu0 %6226
      %6228 = vrot.lane.b32.xlu0 %v6204, 24
      %v6229 = vpop.permute.xlu0 %6228
      %6230 = vrot.lane.b32.xlu0 %v6205, 24
      %v6231 = vpop.permute.xlu0 %6230
      %6232 = vrot.lane.b32.xlu0 %v6206, 24
      %v6233 = vpop.permute.xlu0 %6232
      %6234 = vrot.lane.b32.xlu0 %v6207, 24
      %v6235 = vpop.permute.xlu0 %6234
      %6236 = vrot.lane.b32.xlu0 %v6208, 24
      %v6237 = vpop.permute.xlu0 %6236
      %6238 = vrot.lane.b32.xlu0 %v6209, 24
      %v6239 = vpop.permute.xlu0 %6238
      %6240 = vrot.lane.b32.xlu0 %v6210, 24
      %v6241 = vpop.permute.xlu0 %6240
      %6242 = vrot.lane.b32.xlu0 %v6211, 24
      %v6243 = vpop.permute.xlu0 %6242
      %v6244 = vunpack.c.l.b16 %v4768
      %v6245 = vunpack.c.l.b16 %v4778
      %v6246 = vunpack.c.l.b16 %v4792
      %v6247 = vunpack.c.l.b16 %v4802
      %v6248 = vunpack.c.l.b16 %v4816
      %v6249 = vunpack.c.l.b16 %v4826
      %v6250 = vunpack.c.l.b16 %v4840
      %v6251 = vunpack.c.l.b16 %v4850
      %v6252 = vunpack.c.l.b16 %v4864
      %v6253 = vunpack.c.l.b16 %v4874
      %v6254 = vunpack.c.l.b16 %v4888
      %v6255 = vunpack.c.l.b16 %v4898
      %v6256 = vunpack.c.l.b16 %v4912
      %v6257 = vunpack.c.l.b16 %v4922
      %v6258 = vunpack.c.l.b16 %v4936
      %v6259 = vunpack.c.l.b16 %v4946
      %v6260 = vunpack.c.l.b16 %v4960
      %v6261 = vunpack.c.l.b16 %v4970
      %v6262 = vunpack.c.l.b16 %v4984
      %v6263 = vunpack.c.l.b16 %v4994
      %v6264 = vunpack.c.l.b16 %v5008
      %v6265 = vunpack.c.l.b16 %v5018
      %v6266 = vunpack.c.l.b16 %v5032
      %v6267 = vunpack.c.l.b16 %v5042
      %v6268 = vunpack.c.l.b16 %v5056
      %v6269 = vunpack.c.l.b16 %v5066
      %v6270 = vunpack.c.l.b16 %v5080
      %v6271 = vunpack.c.l.b16 %v5090
      %v6272 = vunpack.c.l.b16 %v5104
      %v6273 = vunpack.c.l.b16 %v5114
      %v6274 = vunpack.c.l.b16 %v5128
      %v6275 = vunpack.c.l.b16 %v5138
      %v6276 = vpack.c.b16 %v6245, %v6244
      %v6277 = vpack.c.b16 %v6247, %v6246
      %v6278 = vpack.c.b16 %v6249, %v6248
      %v6279 = vpack.c.b16 %v6251, %v6250
      %v6280 = vpack.c.b16 %v6253, %v6252
      %v6281 = vpack.c.b16 %v6255, %v6254
      %v6282 = vpack.c.b16 %v6257, %v6256
      %v6283 = vpack.c.b16 %v6259, %v6258
      %v6284 = vpack.c.b16 %v6261, %v6260
      %v6285 = vpack.c.b16 %v6263, %v6262
      %v6286 = vpack.c.b16 %v6265, %v6264
      %v6287 = vpack.c.b16 %v6267, %v6266
      %v6288 = vpack.c.b16 %v6269, %v6268
      %v6289 = vpack.c.b16 %v6271, %v6270
      %v6290 = vpack.c.b16 %v6273, %v6272
      %v6291 = vpack.c.b16 %v6275, %v6274
      %6292 = vrot.lane.b32.xlu0 %v6276, 32
      %v6293 = vpop.permute.xlu0 %6292
      %6294 = vrot.lane.b32.xlu0 %v6277, 32
      %v6295 = vpop.permute.xlu0 %6294
      %6296 = vrot.lane.b32.xlu0 %v6278, 32
      %v6297 = vpop.permute.xlu0 %6296
      %6298 = vrot.lane.b32.xlu0 %v6279, 32
      %v6299 = vpop.permute.xlu0 %6298
      %6300 = vrot.lane.b32.xlu0 %v6280, 32
      %v6301 = vpop.permute.xlu0 %6300
      %6302 = vrot.lane.b32.xlu0 %v6281, 32
      %v6303 = vpop.permute.xlu0 %6302
      %6304 = vrot.lane.b32.xlu0 %v6282, 32
      %v6305 = vpop.permute.xlu0 %6304
      %6306 = vrot.lane.b32.xlu0 %v6283, 32
      %v6307 = vpop.permute.xlu0 %6306
      %6308 = vrot.lane.b32.xlu0 %v6284, 32
      %v6309 = vpop.permute.xlu0 %6308
      %6310 = vrot.lane.b32.xlu0 %v6285, 32
      %v6311 = vpop.permute.xlu0 %6310
      %6312 = vrot.lane.b32.xlu0 %v6286, 32
      %v6313 = vpop.permute.xlu0 %6312
      %6314 = vrot.lane.b32.xlu0 %v6287, 32
      %v6315 = vpop.permute.xlu0 %6314
      %6316 = vrot.lane.b32.xlu0 %v6288, 32
      %v6317 = vpop.permute.xlu0 %6316
      %6318 = vrot.lane.b32.xlu0 %v6289, 32
      %v6319 = vpop.permute.xlu0 %6318
      %6320 = vrot.lane.b32.xlu0 %v6290, 32
      %v6321 = vpop.permute.xlu0 %6320
      %6322 = vrot.lane.b32.xlu0 %v6291, 32
      %v6323 = vpop.permute.xlu0 %6322
      %v6324 = vunpack.c.l.b16 %v5206
      %v6325 = vunpack.c.l.b16 %v5209
      %v6326 = vunpack.c.l.b16 %v5213
      %v6327 = vunpack.c.l.b16 %v5216
      %v6328 = vunpack.c.l.b16 %v5220
      %v6329 = vunpack.c.l.b16 %v5223
      %v6330 = vunpack.c.l.b16 %v5227
      %v6331 = vunpack.c.l.b16 %v5230
      %v6332 = vunpack.c.l.b16 %v5234
      %v6333 = vunpack.c.l.b16 %v5237
      %v6334 = vunpack.c.l.b16 %v5241
      %v6335 = vunpack.c.l.b16 %v5244
      %v6336 = vunpack.c.l.b16 %v5248
      %v6337 = vunpack.c.l.b16 %v5251
      %v6338 = vunpack.c.l.b16 %v5255
      %v6339 = vunpack.c.l.b16 %v5258
      %v6340 = vunpack.c.l.b16 %v5262
      %v6341 = vunpack.c.l.b16 %v5265
      %v6342 = vunpack.c.l.b16 %v5269
      %v6343 = vunpack.c.l.b16 %v5272
      %v6344 = vunpack.c.l.b16 %v5276
      %v6345 = vunpack.c.l.b16 %v5279
      %v6346 = vunpack.c.l.b16 %v5283
      %v6347 = vunpack.c.l.b16 %v5286
      %v6348 = vunpack.c.l.b16 %v5290
      %v6349 = vunpack.c.l.b16 %v5293
      %v6350 = vunpack.c.l.b16 %v5297
      %v6351 = vunpack.c.l.b16 %v5300
      %v6352 = vunpack.c.l.b16 %v5304
      %v6353 = vunpack.c.l.b16 %v5307
      %v6354 = vunpack.c.l.b16 %v5311
      %v6355 = vunpack.c.l.b16 %v5314
      %v6356 = vpack.c.b16 %v6325, %v6324
      %v6357 = vpack.c.b16 %v6327, %v6326
      %v6358 = vpack.c.b16 %v6329, %v6328
      %v6359 = vpack.c.b16 %v6331, %v6330
      %v6360 = vpack.c.b16 %v6333, %v6332
      %v6361 = vpack.c.b16 %v6335, %v6334
      %v6362 = vpack.c.b16 %v6337, %v6336
      %v6363 = vpack.c.b16 %v6339, %v6338
      %v6364 = vpack.c.b16 %v6341, %v6340
      %v6365 = vpack.c.b16 %v6343, %v6342
      %v6366 = vpack.c.b16 %v6345, %v6344
      %v6367 = vpack.c.b16 %v6347, %v6346
      %v6368 = vpack.c.b16 %v6349, %v6348
      %v6369 = vpack.c.b16 %v6351, %v6350
      %v6370 = vpack.c.b16 %v6353, %v6352
      %v6371 = vpack.c.b16 %v6355, %v6354
      %6372 = vrot.lane.b32.xlu0 %v6356, 40
      %v6373 = vpop.permute.xlu0 %6372
      %6374 = vrot.lane.b32.xlu0 %v6357, 40
      %v6375 = vpop.permute.xlu0 %6374
      %6376 = vrot.lane.b32.xlu0 %v6358, 40
      %v6377 = vpop.permute.xlu0 %6376
      %6378 = vrot.lane.b32.xlu0 %v6359, 40
      %v6379 = vpop.permute.xlu0 %6378
      %6380 = vrot.lane.b32.xlu0 %v6360, 40
      %v6381 = vpop.permute.xlu0 %6380
      %6382 = vrot.lane.b32.xlu0 %v6361, 40
      %v6383 = vpop.permute.xlu0 %6382
      %6384 = vrot.lane.b32.xlu0 %v6362, 40
      %v6385 = vpop.permute.xlu0 %6384
      %6386 = vrot.lane.b32.xlu0 %v6363, 40
      %v6387 = vpop.permute.xlu0 %6386
      %6388 = vrot.lane.b32.xlu0 %v6364, 40
      %v6389 = vpop.permute.xlu0 %6388
      %6390 = vrot.lane.b32.xlu0 %v6365, 40
      %v6391 = vpop.permute.xlu0 %6390
      %6392 = vrot.lane.b32.xlu0 %v6366, 40
      %v6393 = vpop.permute.xlu0 %6392
      %6394 = vrot.lane.b32.xlu0 %v6367, 40
      %v6395 = vpop.permute.xlu0 %6394
      %6396 = vrot.lane.b32.xlu0 %v6368, 40
      %v6397 = vpop.permute.xlu0 %6396
      %6398 = vrot.lane.b32.xlu0 %v6369, 40
      %v6399 = vpop.permute.xlu0 %6398
      %6400 = vrot.lane.b32.xlu0 %v6370, 40
      %v6401 = vpop.permute.xlu0 %6400
      %6402 = vrot.lane.b32.xlu0 %v6371, 40
      %v6403 = vpop.permute.xlu0 %6402
      %v6420 = vunpack.c.l.b16 %v5316
      %v6421 = vunpack.c.l.b16 %v5317
      %v6422 = vunpack.c.l.b16 %v5318
      %v6423 = vunpack.c.l.b16 %v5319
      %v6424 = vunpack.c.l.b16 %v5320
      %v6425 = vunpack.c.l.b16 %v5321
      %v6426 = vunpack.c.l.b16 %v5322
      %v6427 = vunpack.c.l.b16 %v5323
      %v6428 = vunpack.c.l.b16 %v5324
      %v6429 = vunpack.c.l.b16 %v5325
      %v6430 = vunpack.c.l.b16 %v5326
      %v6431 = vunpack.c.l.b16 %v5327
      %v6432 = vunpack.c.l.b16 %v5328
      %v6433 = vunpack.c.l.b16 %v5329
      %v6434 = vunpack.c.l.b16 %v5330
      %v6435 = vunpack.c.l.b16 %v5331
      %v6436 = vunpack.c.l.b16 %v5332
      %v6437 = vunpack.c.l.b16 %v5333
      %v6438 = vunpack.c.l.b16 %v5334
      %v6439 = vunpack.c.l.b16 %v5335
      %v6440 = vunpack.c.l.b16 %v5336
      %v6441 = vunpack.c.l.b16 %v5337
      %v6442 = vunpack.c.l.b16 %v5338
      %v6443 = vunpack.c.l.b16 %v5339
      %v6444 = vunpack.c.l.b16 %v5340
      %v6445 = vunpack.c.l.b16 %v5341
      %v6446 = vunpack.c.l.b16 %v5342
      %v6447 = vunpack.c.l.b16 %v5343
      %v6448 = vunpack.c.l.b16 %v5344
      %v6449 = vunpack.c.l.b16 %v5345
      %v6450 = vunpack.c.l.b16 %v5346
      %v6451 = vunpack.c.l.b16 %v5347
      %v6452 = vpack.c.b16 %v6421, %v6420
      %v6453 = vpack.c.b16 %v6423, %v6422
      %v6454 = vpack.c.b16 %v6425, %v6424
      %v6455 = vpack.c.b16 %v6427, %v6426
      %v6456 = vpack.c.b16 %v6429, %v6428
      %v6457 = vpack.c.b16 %v6431, %v6430
      %v6458 = vpack.c.b16 %v6433, %v6432
      %v6459 = vpack.c.b16 %v6435, %v6434
      %v6460 = vpack.c.b16 %v6437, %v6436
      %v6461 = vpack.c.b16 %v6439, %v6438
      %v6462 = vpack.c.b16 %v6441, %v6440
      %v6463 = vpack.c.b16 %v6443, %v6442
      %v6464 = vpack.c.b16 %v6445, %v6444
      %v6465 = vpack.c.b16 %v6447, %v6446
      %v6466 = vpack.c.b16 %v6449, %v6448
      %v6467 = vpack.c.b16 %v6451, %v6450
      %6468 = vrot.lane.b32.xlu0 %v6452, 48
      %v6469 = vpop.permute.xlu0 %6468
      %6470 = vrot.lane.b32.xlu0 %v6453, 48
      %v6471 = vpop.permute.xlu0 %6470
      %6472 = vrot.lane.b32.xlu0 %v6454, 48
      %v6473 = vpop.permute.xlu0 %6472
      %6474 = vrot.lane.b32.xlu0 %v6455, 48
      %v6475 = vpop.permute.xlu0 %6474
      %6476 = vrot.lane.b32.xlu0 %v6456, 48
      %v6477 = vpop.permute.xlu0 %6476
      %6478 = vrot.lane.b32.xlu0 %v6457, 48
      %v6479 = vpop.permute.xlu0 %6478
      %6480 = vrot.lane.b32.xlu0 %v6458, 48
      %v6481 = vpop.permute.xlu0 %6480
      %6482 = vrot.lane.b32.xlu0 %v6459, 48
      %v6483 = vpop.permute.xlu0 %6482
      %6484 = vrot.lane.b32.xlu0 %v6460, 48
      %v6485 = vpop.permute.xlu0 %6484
      %6486 = vrot.lane.b32.xlu0 %v6461, 48
      %v6487 = vpop.permute.xlu0 %6486
      %6488 = vrot.lane.b32.xlu0 %v6462, 48
      %v6489 = vpop.permute.xlu0 %6488
      %6490 = vrot.lane.b32.xlu0 %v6463, 48
      %v6491 = vpop.permute.xlu0 %6490
      %6492 = vrot.lane.b32.xlu0 %v6464, 48
      %v6493 = vpop.permute.xlu0 %6492
      %6494 = vrot.lane.b32.xlu0 %v6465, 48
      %v6495 = vpop.permute.xlu0 %6494
      %6496 = vrot.lane.b32.xlu0 %v6466, 48
      %v6497 = vpop.permute.xlu0 %6496
      %6498 = vrot.lane.b32.xlu0 %v6467, 48
      %v6499 = vpop.permute.xlu0 %6498
      %v6500 = vunpack.c.l.b16 %v5377
      %v6501 = vunpack.c.l.b16 %v5387
      %v6502 = vunpack.c.l.b16 %v5401
      %v6503 = vunpack.c.l.b16 %v5411
      %v6504 = vunpack.c.l.b16 %v5425
      %v6505 = vunpack.c.l.b16 %v5435
      %v6506 = vunpack.c.l.b16 %v5449
      %v6507 = vunpack.c.l.b16 %v5459
      %v6508 = vunpack.c.l.b16 %v5473
      %v6509 = vunpack.c.l.b16 %v5483
      %v6510 = vunpack.c.l.b16 %v5497
      %v6511 = vunpack.c.l.b16 %v5507
      %v6512 = vunpack.c.l.b16 %v5521
      %v6513 = vunpack.c.l.b16 %v5531
      %v6514 = vunpack.c.l.b16 %v5545
      %v6515 = vunpack.c.l.b16 %v5555
      %v6516 = vunpack.c.l.b16 %v5569
      %v6517 = vunpack.c.l.b16 %v5579
      %v6518 = vunpack.c.l.b16 %v5593
      %v6519 = vunpack.c.l.b16 %v5603
      %v6520 = vunpack.c.l.b16 %v5617
      %v6521 = vunpack.c.l.b16 %v5627
      %v6522 = vunpack.c.l.b16 %v5641
      %v6523 = vunpack.c.l.b16 %v5651
      %v6524 = vunpack.c.l.b16 %v5665
      %v6525 = vunpack.c.l.b16 %v5675
      %v6526 = vunpack.c.l.b16 %v5689
      %v6527 = vunpack.c.l.b16 %v5699
      %v6528 = vunpack.c.l.b16 %v5713
      %v6529 = vunpack.c.l.b16 %v5723
      %v6530 = vunpack.c.l.b16 %v5737
      %v6531 = vunpack.c.l.b16 %v5747
      %v6532 = vpack.c.b16 %v6501, %v6500
      %v6533 = vpack.c.b16 %v6503, %v6502
      %v6534 = vpack.c.b16 %v6505, %v6504
      %v6535 = vpack.c.b16 %v6507, %v6506
      %v6536 = vpack.c.b16 %v6509, %v6508
      %v6537 = vpack.c.b16 %v6511, %v6510
      %v6538 = vpack.c.b16 %v6513, %v6512
      %v6539 = vpack.c.b16 %v6515, %v6514
      %v6540 = vpack.c.b16 %v6517, %v6516
      %v6541 = vpack.c.b16 %v6519, %v6518
      %v6542 = vpack.c.b16 %v6521, %v6520
      %v6543 = vpack.c.b16 %v6523, %v6522
      %v6544 = vpack.c.b16 %v6525, %v6524
      %v6545 = vpack.c.b16 %v6527, %v6526
      %v6546 = vpack.c.b16 %v6529, %v6528
      %v6547 = vpack.c.b16 %v6531, %v6530
      %6548 = vrot.lane.b32.xlu0 %v6532, 56
      %v6549 = vpop.permute.xlu0 %6548
      %6550 = vrot.lane.b32.xlu0 %v6533, 56
      %v6551 = vpop.permute.xlu0 %6550
      %6552 = vrot.lane.b32.xlu0 %v6534, 56
      %v6553 = vpop.permute.xlu0 %6552
      %6554 = vrot.lane.b32.xlu0 %v6535, 56
      %v6555 = vpop.permute.xlu0 %6554
      %6556 = vrot.lane.b32.xlu0 %v6536, 56
      %v6557 = vpop.permute.xlu0 %6556
      %6558 = vrot.lane.b32.xlu0 %v6537, 56
      %v6559 = vpop.permute.xlu0 %6558
      %6560 = vrot.lane.b32.xlu0 %v6538, 56
      %v6561 = vpop.permute.xlu0 %6560
      %6562 = vrot.lane.b32.xlu0 %v6539, 56
      %v6563 = vpop.permute.xlu0 %6562
      %6564 = vrot.lane.b32.xlu0 %v6540, 56
      %v6565 = vpop.permute.xlu0 %6564
      %6566 = vrot.lane.b32.xlu0 %v6541, 56
      %v6567 = vpop.permute.xlu0 %6566
      %6568 = vrot.lane.b32.xlu0 %v6542, 56
      %v6569 = vpop.permute.xlu0 %6568
      %6570 = vrot.lane.b32.xlu0 %v6543, 56
      %v6571 = vpop.permute.xlu0 %6570
      %6572 = vrot.lane.b32.xlu0 %v6544, 56
      %v6573 = vpop.permute.xlu0 %6572
      %6574 = vrot.lane.b32.xlu0 %v6545, 56
      %v6575 = vpop.permute.xlu0 %6574
      %6576 = vrot.lane.b32.xlu0 %v6546, 56
      %v6577 = vpop.permute.xlu0 %6576
      %6578 = vrot.lane.b32.xlu0 %v6547, 56
      %v6579 = vpop.permute.xlu0 %6578
      %v6580 = vunpack.c.l.b16 %v5815
      %v6581 = vunpack.c.l.b16 %v5818
      %v6582 = vunpack.c.l.b16 %v5822
      %v6583 = vunpack.c.l.b16 %v5825
      %v6584 = vunpack.c.l.b16 %v5829
      %v6585 = vunpack.c.l.b16 %v5832
      %v6586 = vunpack.c.l.b16 %v5836
      %v6587 = vunpack.c.l.b16 %v5839
      %v6588 = vunpack.c.l.b16 %v5843
      %v6589 = vunpack.c.l.b16 %v5846
      %v6590 = vunpack.c.l.b16 %v5850
      %v6591 = vunpack.c.l.b16 %v5853
      %v6592 = vunpack.c.l.b16 %v5857
      %v6593 = vunpack.c.l.b16 %v5860
      %v6594 = vunpack.c.l.b16 %v5864
      %v6595 = vunpack.c.l.b16 %v5867
      %v6596 = vunpack.c.l.b16 %v5871
      %v6597 = vunpack.c.l.b16 %v5874
      %v6598 = vunpack.c.l.b16 %v5878
      %v6599 = vunpack.c.l.b16 %v5881
      %v6600 = vunpack.c.l.b16 %v5885
      %v6601 = vunpack.c.l.b16 %v5888
      %v6602 = vunpack.c.l.b16 %v5892
      %v6603 = vunpack.c.l.b16 %v5895
      %v6604 = vunpack.c.l.b16 %v5899
      %v6605 = vunpack.c.l.b16 %v5902
      %v6606 = vunpack.c.l.b16 %v5906
      %v6607 = vunpack.c.l.b16 %v5909
      %v6608 = vunpack.c.l.b16 %v5913
      %v6609 = vunpack.c.l.b16 %v5916
      %v6610 = vunpack.c.l.b16 %v5920
      %v6611 = vunpack.c.l.b16 %v5923
      %v6612 = vpack.c.b16 %v6581, %v6580
      %v6613 = vpack.c.b16 %v6583, %v6582
      %v6614 = vpack.c.b16 %v6585, %v6584
      %v6615 = vpack.c.b16 %v6587, %v6586
      %v6616 = vpack.c.b16 %v6589, %v6588
      %v6617 = vpack.c.b16 %v6591, %v6590
      %v6618 = vpack.c.b16 %v6593, %v6592
      %v6619 = vpack.c.b16 %v6595, %v6594
      %v6620 = vpack.c.b16 %v6597, %v6596
      %v6621 = vpack.c.b16 %v6599, %v6598
      %v6622 = vpack.c.b16 %v6601, %v6600
      %v6623 = vpack.c.b16 %v6603, %v6602
      %v6624 = vpack.c.b16 %v6605, %v6604
      %v6625 = vpack.c.b16 %v6607, %v6606
      %v6626 = vpack.c.b16 %v6609, %v6608
      %v6627 = vpack.c.b16 %v6611, %v6610
      %6628 = vrot.lane.b32.xlu0 %v6612, 64
      %v6629 = vpop.permute.xlu0 %6628
      %6630 = vrot.lane.b32.xlu0 %v6613, 64
      %v6631 = vpop.permute.xlu0 %6630
      %6632 = vrot.lane.b32.xlu0 %v6614, 64
      %v6633 = vpop.permute.xlu0 %6632
      %6634 = vrot.lane.b32.xlu0 %v6615, 64
      %v6635 = vpop.permute.xlu0 %6634
      %6636 = vrot.lane.b32.xlu0 %v6616, 64
      %v6637 = vpop.permute.xlu0 %6636
      %6638 = vrot.lane.b32.xlu0 %v6617, 64
      %v6639 = vpop.permute.xlu0 %6638
      %6640 = vrot.lane.b32.xlu0 %v6618, 64
      %v6641 = vpop.permute.xlu0 %6640
      %6642 = vrot.lane.b32.xlu0 %v6619, 64
      %v6643 = vpop.permute.xlu0 %6642
      %6644 = vrot.lane.b32.xlu0 %v6620, 64
      %v6645 = vpop.permute.xlu0 %6644
      %6646 = vrot.lane.b32.xlu0 %v6621, 64
      %v6647 = vpop.permute.xlu0 %6646
      %6648 = vrot.lane.b32.xlu0 %v6622, 64
      %v6649 = vpop.permute.xlu0 %6648
      %6650 = vrot.lane.b32.xlu0 %v6623, 64
      %v6651 = vpop.permute.xlu0 %6650
      %6652 = vrot.lane.b32.xlu0 %v6624, 64
      %v6653 = vpop.permute.xlu0 %6652
      %6654 = vrot.lane.b32.xlu0 %v6625, 64
      %v6655 = vpop.permute.xlu0 %6654
      %6656 = vrot.lane.b32.xlu0 %v6626, 64
      %v6657 = vpop.permute.xlu0 %6656
      %6658 = vrot.lane.b32.xlu0 %v6627, 64
      %v6659 = vpop.permute.xlu0 %6658
      %v6662 = vsel %vm3008, %v5972, %v6037
      %v6665 = vsel %vm3008, %v5973, %v6039
      %v6668 = vsel %vm3008, %v5974, %v6041
      %v6671 = vsel %vm3008, %v5975, %v6043
      %v6674 = vsel %vm3008, %v5976, %v6045
      %v6677 = vsel %vm3008, %v5977, %v6047
      %v6680 = vsel %vm3008, %v5978, %v6049
      %v6683 = vsel %vm3008, %v5979, %v6051
      %v6686 = vsel %vm3008, %v5980, %v6053
      %v6689 = vsel %vm3008, %v5981, %v6055
      %v6692 = vsel %vm3008, %v5982, %v6057
      %v6695 = vsel %vm3008, %v5983, %v6059
      %v6698 = vsel %vm3008, %v5984, %v6061
      %v6701 = vsel %vm3008, %v5985, %v6063
      %v6704 = vsel %vm3008, %v5986, %v6065
      %v6707 = vsel %vm3008, %v5987, %v6067
      %v6709 = vsel %vm3074, %v6662, %v6117
      %v6711 = vsel %vm3074, %v6665, %v6119
      %v6713 = vsel %vm3074, %v6668, %v6121
      %v6715 = vsel %vm3074, %v6671, %v6123
      %v6717 = vsel %vm3074, %v6674, %v6125
      %v6719 = vsel %vm3074, %v6677, %v6127
      %v6721 = vsel %vm3074, %v6680, %v6129
      %v6723 = vsel %vm3074, %v6683, %v6131
      %v6725 = vsel %vm3074, %v6686, %v6133
      %v6727 = vsel %vm3074, %v6689, %v6135
      %v6729 = vsel %vm3074, %v6692, %v6137
      %v6731 = vsel %vm3074, %v6695, %v6139
      %v6733 = vsel %vm3074, %v6698, %v6141
      %v6735 = vsel %vm3074, %v6701, %v6143
      %v6737 = vsel %vm3074, %v6704, %v6145
      %v6739 = vsel %vm3074, %v6707, %v6147
      %v6741 = vsel %vm3140, %v6709, %v6213
      %v6743 = vsel %vm3140, %v6711, %v6215
      %v6745 = vsel %vm3140, %v6713, %v6217
      %v6747 = vsel %vm3140, %v6715, %v6219
      %v6749 = vsel %vm3140, %v6717, %v6221
      %v6751 = vsel %vm3140, %v6719, %v6223
      %v6753 = vsel %vm3140, %v6721, %v6225
      %v6755 = vsel %vm3140, %v6723, %v6227
      %v6757 = vsel %vm3140, %v6725, %v6229
      %v6759 = vsel %vm3140, %v6727, %v6231
      %v6761 = vsel %vm3140, %v6729, %v6233
      %v6763 = vsel %vm3140, %v6731, %v6235
      %v6765 = vsel %vm3140, %v6733, %v6237
      %v6767 = vsel %vm3140, %v6735, %v6239
      %v6769 = vsel %vm3140, %v6737, %v6241
      %v6771 = vsel %vm3140, %v6739, %v6243
      %v6773 = vsel %vm3206, %v6741, %v6293
      %v6775 = vsel %vm3206, %v6743, %v6295
      %v6777 = vsel %vm3206, %v6745, %v6297
      %v6779 = vsel %vm3206, %v6747, %v6299
      %v6781 = vsel %vm3206, %v6749, %v6301
      %v6783 = vsel %vm3206, %v6751, %v6303
      %v6785 = vsel %vm3206, %v6753, %v6305
      %v6787 = vsel %vm3206, %v6755, %v6307
      %v6789 = vsel %vm3206, %v6757, %v6309
      %v6791 = vsel %vm3206, %v6759, %v6311
      %v6793 = vsel %vm3206, %v6761, %v6313
      %v6795 = vsel %vm3206, %v6763, %v6315
      %v6797 = vsel %vm3206, %v6765, %v6317
      %v6799 = vsel %vm3206, %v6767, %v6319
      %v6801 = vsel %vm3206, %v6769, %v6321
      %v6803 = vsel %vm3206, %v6771, %v6323
      %vm6804 = vcmask 326656
      %v6806 = vsel %vm6804, %v6773, %v6373
      %v6808 = vsel %vm6804, %v6775, %v6375
      %v6810 = vsel %vm6804, %v6777, %v6377
      %v6812 = vsel %vm6804, %v6779, %v6379
      %v6814 = vsel %vm6804, %v6781, %v6381
      %v6816 = vsel %vm6804, %v6783, %v6383
      %v6818 = vsel %vm6804, %v6785, %v6385
      %v6820 = vsel %vm6804, %v6787, %v6387
      %v6822 = vsel %vm6804, %v6789, %v6389
      %v6824 = vsel %vm6804, %v6791, %v6391
      %v6826 = vsel %vm6804, %v6793, %v6393
      %v6828 = vsel %vm6804, %v6795, %v6395
      %v6830 = vsel %vm6804, %v6797, %v6397
      %v6832 = vsel %vm6804, %v6799, %v6399
      %v6834 = vsel %vm6804, %v6801, %v6401
      %v6836 = vsel %vm6804, %v6803, %v6403
      %vm6837 = vcmask 392192
      %v6839 = vsel %vm6837, %v6806, %v6469
      %v6841 = vsel %vm6837, %v6808, %v6471
      %v6843 = vsel %vm6837, %v6810, %v6473
      %v6845 = vsel %vm6837, %v6812, %v6475
      %v6847 = vsel %vm6837, %v6814, %v6477
      %v6849 = vsel %vm6837, %v6816, %v6479
      %v6851 = vsel %vm6837, %v6818, %v6481
      %v6853 = vsel %vm6837, %v6820, %v6483
      %v6855 = vsel %vm6837, %v6822, %v6485
      %v6857 = vsel %vm6837, %v6824, %v6487
      %v6859 = vsel %vm6837, %v6826, %v6489
      %v6861 = vsel %vm6837, %v6828, %v6491
      %v6863 = vsel %vm6837, %v6830, %v6493
      %v6865 = vsel %vm6837, %v6832, %v6495
      %v6867 = vsel %vm6837, %v6834, %v6497
      %v6869 = vsel %vm6837, %v6836, %v6499
      %vm6870 = vcmask 457728
      %v6872 = vsel %vm6870, %v6839, %v6549
      %v6874 = vsel %vm6870, %v6841, %v6551
      %v6876 = vsel %vm6870, %v6843, %v6553
      %v6878 = vsel %vm6870, %v6845, %v6555
      %v6880 = vsel %vm6870, %v6847, %v6557
      %v6882 = vsel %vm6870, %v6849, %v6559
      %v6884 = vsel %vm6870, %v6851, %v6561
      %v6886 = vsel %vm6870, %v6853, %v6563
      %v6888 = vsel %vm6870, %v6855, %v6565
      %v6890 = vsel %vm6870, %v6857, %v6567
      %v6892 = vsel %vm6870, %v6859, %v6569
      %v6894 = vsel %vm6870, %v6861, %v6571
      %v6896 = vsel %vm6870, %v6863, %v6573
      %v6898 = vsel %vm6870, %v6865, %v6575
      %v6900 = vsel %vm6870, %v6867, %v6577
      %v6902 = vsel %vm6870, %v6869, %v6579
      %vm6903 = vcmask 523264
      %v6905 = vsel %vm6903, %v6872, %v6629
      %v6907 = vsel %vm6903, %v6874, %v6631
      %v6909 = vsel %vm6903, %v6876, %v6633
      %v6911 = vsel %vm6903, %v6878, %v6635
      %v6913 = vsel %vm6903, %v6880, %v6637
      %v6915 = vsel %vm6903, %v6882, %v6639
      %v6917 = vsel %vm6903, %v6884, %v6641
      %v6919 = vsel %vm6903, %v6886, %v6643
      %v6921 = vsel %vm6903, %v6888, %v6645
      %v6923 = vsel %vm6903, %v6890, %v6647
      %v6925 = vsel %vm6903, %v6892, %v6649
      %v6927 = vsel %vm6903, %v6894, %v6651
      %v6929 = vsel %vm6903, %v6896, %v6653
      %v6931 = vsel %vm6903, %v6898, %v6655
      %v6933 = vsel %vm6903, %v6900, %v6657
      %v6935 = vsel %vm6903, %v6902, %v6659
      %v6936 = vld [vmem:[%s4] sm:$0xf]
      %v6937 = vld [vmem:[%s4 + $0x4] sm:$0xf]
      %v6938 = vld [vmem:[%s4 + $0x8] sm:$0xf]
      %v6939 = vld [vmem:[%s4 + $0xc] sm:$0xf]
      %v6940 = vld [vmem:[%s4 + $0x10] sm:$0xf]
      %v6941 = vld [vmem:[%s4 + $0x14] sm:$0xf]
      %v6942 = vld [vmem:[%s4 + $0x18] sm:$0xf]
      %v6943 = vld [vmem:[%s4 + $0x1c] sm:$0xf]
      %v6944 = vld [vmem:[%s4 + $0x20] sm:$0xf]
      %v6954 = vunpack.c.l.b16 %v6936
      %v6955 = vunpack.c.l.b16 %v6937
      %v6956 = vunpack.c.l.b16 %v6938
      %v6957 = vunpack.c.l.b16 %v6939
      %v6958 = vunpack.c.l.b16 %v6940
      %v6959 = vunpack.c.l.b16 %v6941
      %v6960 = vunpack.c.l.b16 %v6942
      %v6961 = vunpack.c.l.b16 %v6943
      %v6962 = vunpack.c.l.b16 %v6944
      %v6963 = vpack.c.b16 %v6955, %v6954
      %v6964 = vpack.c.b16 %v6957, %v6956
      %v6965 = vpack.c.b16 %v6959, %v6958
      %v6966 = vpack.c.b16 %v6961, %v6960
      %v6967 = vpack.c.b16 %v6962, %v6962
      %vm6972 = vcmask 588800
      %v6973 = vsel %vm6972, %v6905, 0
      %v6975 = vsel %vm6972, %v6907, 0
      %v6977 = vsel %vm6972, %v6909, 0
      %v6979 = vsel %vm6972, %v6911, 0
      %v6981 = vsel %vm6972, %v6913, 0
      %v6983 = vsel %vm6972, %v6915, 0
      %v6985 = vsel %vm6972, %v6917, 0
      %v6987 = vsel %vm6972, %v6919, 0
      %v6989 = vsel %vm6972, %v6921, 0
      %v6991 = vsel %vm6972, %v6923, 0
      %v6993 = vsel %vm6972, %v6925, 0
      %v6995 = vsel %vm6972, %v6927, 0
      %v6997 = vsel %vm6972, %v6929, 0
      %v6999 = vsel %vm6972, %v6931, 0
      %v7001 = vsel %vm6972, %v6933, 0
      %v7003 = vsel %vm6972, %v6935, 0
      %vm7005 = vcmask 1043456
      %v7007 = vsel %vm7005, %v6967, 0
      %7009 = vmatprep.subr.bf16.mxu0 0
      %7010 = vmatpush1.bf16.msra.mxu0 0
      %7011 = vmatprep.subr.bf16.mxu0 0
      %7012 = vmatpush1.bf16.msra.mxu0 0
      %7013 = vmatprep.subr.bf16.mxu0 0
      %7014 = vmatpush1.bf16.msra.mxu0 0
      %7015 = vmatprep.subr.bf16.mxu0 0
      %7016 = vmatpush1.bf16.msra.mxu0 %v7007
      %7017 = vmatprep.subr.bf16.mxu0 0
      %7018 = vmatpush1.bf16.msra.mxu0 %v6966
      %7019 = vmatprep.subr.bf16.mxu0 0
      %7020 = vmatpush1.bf16.msra.mxu0 %v6965
      %7021 = vmatprep.subr.bf16.mxu0 0
      %7022 = vmatpush1.bf16.msra.mxu0 %v6964
      %7023 = vmatprep.subr.bf16.mxu0 0
      %7024 = vmatpush1.bf16.msra.mxu0 %v6963
      %7025 = vmatprep.subr.bf16.mxu0 0
      %7026 = vmatpush2.bf16.msra.mxu0 0
      %7027 = vmatprep.subr.bf16.mxu0 0
      %7028 = vmatpush2.bf16.msra.mxu0 0
      %7029 = vmatprep.subr.bf16.mxu0 0
      %7030 = vmatpush2.bf16.msra.mxu0 0
      %7031 = vmatprep.subr.bf16.mxu0 0
      %7032 = vmatpush2.bf16.msra.mxu0 0
      %7033 = vmatprep.subr.bf16.mxu0 0
      %7034 = vmatpush2.bf16.msra.mxu0 0
      %7035 = vmatprep.subr.bf16.mxu0 0
      %7036 = vmatpush2.bf16.msra.mxu0 0
      %7037 = vmatprep.subr.bf16.mxu0 0
      %7038 = vmatpush2.bf16.msra.mxu0 0
      %7039 = vmatprep.subr.bf16.mxu0 0
      %7040 = vmatpush2.bf16.msra.mxu0 0
      %7041 = vmatprep.mubr.bf16.mxu0 0
      %7042 = vmatmul.mubr.bf16.gmra.mxu0 %v6973
      %v7043 = vpop.f32.mrf.mxu0
      %v7044 = vadd.f32 0.0, %v7043
      %v7045 = vpop.f32.mrf.mxu0
      %v7046 = vpop.f32.mrf.mxu0
      %v7047 = vadd.f32 0.0, %v7046
      %v7048 = vpop.f32.mrf.mxu0
      %7049 = vmatprep.mubr.bf16.mxu0 0
      %7050 = vmatmul.mubr.bf16.gmra.mxu0 %v6975
      %v7051 = vpop.f32.mrf.mxu0
      %v7052 = vadd.f32 0.0, %v7051
      %v7053 = vpop.f32.mrf.mxu0
      %v7054 = vpop.f32.mrf.mxu0
      %v7055 = vadd.f32 0.0, %v7054
      %v7056 = vpop.f32.mrf.mxu0
      %7057 = vmatprep.mubr.bf16.mxu0 0
      %7058 = vmatmul.mubr.bf16.gmra.mxu0 %v6977
      %v7059 = vpop.f32.mrf.mxu0
      %v7060 = vadd.f32 0.0, %v7059
      %v7061 = vpop.f32.mrf.mxu0
      %v7062 = vpop.f32.mrf.mxu0
      %v7063 = vadd.f32 0.0, %v7062
      %v7064 = vpop.f32.mrf.mxu0
      %7065 = vmatprep.mubr.bf16.mxu0 0
      %7066 = vmatmul.mubr.bf16.gmra.mxu0 %v6979
      %v7067 = vpop.f32.mrf.mxu0
      %v7068 = vadd.f32 0.0, %v7067
      %v7069 = vpop.f32.mrf.mxu0
      %v7070 = vpop.f32.mrf.mxu0
      %v7071 = vadd.f32 0.0, %v7070
      %v7072 = vpop.f32.mrf.mxu0
      %7073 = vmatprep.mubr.bf16.mxu0 0
      %7074 = vmatmul.mubr.bf16.gmra.mxu0 %v6981
      %v7075 = vpop.f32.mrf.mxu0
      %v7076 = vadd.f32 0.0, %v7075
      %v7077 = vpop.f32.mrf.mxu0
      %v7078 = vpop.f32.mrf.mxu0
      %v7079 = vadd.f32 0.0, %v7078
      %v7080 = vpop.f32.mrf.mxu0
      %7081 = vmatprep.mubr.bf16.mxu0 0
      %7082 = vmatmul.mubr.bf16.gmra.mxu0 %v6983
      %v7083 = vpop.f32.mrf.mxu0
      %v7084 = vadd.f32 0.0, %v7083
      %v7085 = vpop.f32.mrf.mxu0
      %v7086 = vpop.f32.mrf.mxu0
      %v7087 = vadd.f32 0.0, %v7086
      %v7088 = vpop.f32.mrf.mxu0
      %7089 = vmatprep.mubr.bf16.mxu0 0
      %7090 = vmatmul.mubr.bf16.gmra.mxu0 %v6985
      %v7091 = vpop.f32.mrf.mxu0
      %v7092 = vadd.f32 0.0, %v7091
      %v7093 = vpop.f32.mrf.mxu0
      %v7094 = vpop.f32.mrf.mxu0
      %v7095 = vadd.f32 0.0, %v7094
      %v7096 = vpop.f32.mrf.mxu0
      %7097 = vmatprep.mubr.bf16.mxu0 0
      %7098 = vmatmul.mubr.bf16.gmra.mxu0 %v6987
      %v7099 = vpop.f32.mrf.mxu0
      %v7100 = vadd.f32 0.0, %v7099
      %v7101 = vpop.f32.mrf.mxu0
      %v7102 = vpop.f32.mrf.mxu0
      %v7103 = vadd.f32 0.0, %v7102
      %v7104 = vpop.f32.mrf.mxu0
      %7105 = vmatprep.mubr.bf16.mxu0 0
      %7106 = vmatmul.mubr.bf16.gmra.mxu0 %v6989
      %v7107 = vpop.f32.mrf.mxu0
      %v7108 = vadd.f32 0.0, %v7107
      %v7109 = vpop.f32.mrf.mxu0
      %v7110 = vpop.f32.mrf.mxu0
      %v7111 = vadd.f32 0.0, %v7110
      %v7112 = vpop.f32.mrf.mxu0
      %7113 = vmatprep.mubr.bf16.mxu0 0
      %7114 = vmatmul.mubr.bf16.gmra.mxu0 %v6991
      %v7115 = vpop.f32.mrf.mxu0
      %v7116 = vadd.f32 0.0, %v7115
      %v7117 = vpop.f32.mrf.mxu0
      %v7118 = vpop.f32.mrf.mxu0
      %v7119 = vadd.f32 0.0, %v7118
      %v7120 = vpop.f32.mrf.mxu0
      %7121 = vmatprep.mubr.bf16.mxu0 0
      %7122 = vmatmul.mubr.bf16.gmra.mxu0 %v6993
      %v7123 = vpop.f32.mrf.mxu0
      %v7124 = vadd.f32 0.0, %v7123
      %v7125 = vpop.f32.mrf.mxu0
      %v7126 = vpop.f32.mrf.mxu0
      %v7127 = vadd.f32 0.0, %v7126
      %v7128 = vpop.f32.mrf.mxu0
      %7129 = vmatprep.mubr.bf16.mxu0 0
      %7130 = vmatmul.mubr.bf16.gmra.mxu0 %v6995
      %v7131 = vpop.f32.mrf.mxu0
      %v7132 = vadd.f32 0.0, %v7131
      %v7133 = vpop.f32.mrf.mxu0
      %v7134 = vpop.f32.mrf.mxu0
      %v7135 = vadd.f32 0.0, %v7134
      %v7136 = vpop.f32.mrf.mxu0
      %7137 = vmatprep.mubr.bf16.mxu0 0
      %7138 = vmatmul.mubr.bf16.gmra.mxu0 %v6997
      %v7139 = vpop.f32.mrf.mxu0
      %v7140 = vadd.f32 0.0, %v7139
      %v7141 = vpop.f32.mrf.mxu0
      %v7142 = vpop.f32.mrf.mxu0
      %v7143 = vadd.f32 0.0, %v7142
      %v7144 = vpop.f32.mrf.mxu0
      %7145 = vmatprep.mubr.bf16.mxu0 0
      %7146 = vmatmul.mubr.bf16.gmra.mxu0 %v6999
      %v7147 = vpop.f32.mrf.mxu0
      %v7148 = vadd.f32 0.0, %v7147
      %v7149 = vpop.f32.mrf.mxu0
      %v7150 = vpop.f32.mrf.mxu0
      %v7151 = vadd.f32 0.0, %v7150
      %v7152 = vpop.f32.mrf.mxu0
      %7153 = vmatprep.mubr.bf16.mxu0 0
      %7154 = vmatmul.mubr.bf16.gmra.mxu0 %v7001
      %v7155 = vpop.f32.mrf.mxu0
      %v7156 = vadd.f32 0.0, %v7155
      %v7157 = vpop.f32.mrf.mxu0
      %v7158 = vpop.f32.mrf.mxu0
      %v7159 = vadd.f32 0.0, %v7158
      %v7160 = vpop.f32.mrf.mxu0
      %7161 = vmatprep.mubr.bf16.mxu0 0
      %7162 = vmatmul.mubr.bf16.gmra.mxu0 %v7003
      %v7163 = vpop.f32.mrf.mxu0
      %v7164 = vadd.f32 0.0, %v7163
      %v7165 = vpop.f32.mrf.mxu0
      %v7166 = vpop.f32.mrf.mxu0
      %v7167 = vadd.f32 0.0, %v7166
      %v7168 = vpop.f32.mrf.mxu0
      %7169 = vdwg.mxu0
      %v7170 = vld [vmem:[%s5] sm:$0x1]
      %v7172 = vlaneseq
      %v7173 = vshrl.u32 %v7172, 7
      %v7174 = vsub.s32 0, %v7173
      %v7175 = vrot.slane %v7170, %v7174
      %v7177 = vmul.f32 %v7044, %v7175
      %v7178 = vmul.f32 %v7047, %v7175
      %v7179 = vmul.f32 %v7052, %v7175
      %v7180 = vmul.f32 %v7055, %v7175
      %v7181 = vmul.f32 %v7060, %v7175
      %v7182 = vmul.f32 %v7063, %v7175
      %v7183 = vmul.f32 %v7068, %v7175
      %v7184 = vmul.f32 %v7071, %v7175
      %v7185 = vmul.f32 %v7076, %v7175
      %v7186 = vmul.f32 %v7079, %v7175
      %v7187 = vmul.f32 %v7084, %v7175
      %v7188 = vmul.f32 %v7087, %v7175
      %v7189 = vmul.f32 %v7092, %v7175
      %v7190 = vmul.f32 %v7095, %v7175
      %v7191 = vmul.f32 %v7100, %v7175
      %v7192 = vmul.f32 %v7103, %v7175
      %v7193 = vmul.f32 %v7108, %v7175
      %v7194 = vmul.f32 %v7111, %v7175
      %v7195 = vmul.f32 %v7116, %v7175
      %v7196 = vmul.f32 %v7119, %v7175
      %v7197 = vmul.f32 %v7124, %v7175
      %v7198 = vmul.f32 %v7127, %v7175
      %v7199 = vmul.f32 %v7132, %v7175
      %v7200 = vmul.f32 %v7135, %v7175
      %v7201 = vmul.f32 %v7140, %v7175
      %v7202 = vmul.f32 %v7143, %v7175
      %v7203 = vmul.f32 %v7148, %v7175
      %v7204 = vmul.f32 %v7151, %v7175
      %v7205 = vmul.f32 %v7156, %v7175
      %v7206 = vmul.f32 %v7159, %v7175
      %v7207 = vmul.f32 %v7164, %v7175
      %v7208 = vmul.f32 %v7167, %v7175
      %v7209 = vld [vmem:[%s6] sm:$0x1]
      %v7211 = vlaneseq
      %v7212 = vshrl.u32 %v7211, 7
      %v7213 = vsub.s32 0, %v7212
      %v7214 = vrot.slane %v7209, %v7213
      %v7216 = vadd.f32 %v7177, %v7214
      %v7217 = vadd.f32 %v7178, %v7214
      %v7218 = vadd.f32 %v7179, %v7214
      %v7219 = vadd.f32 %v7180, %v7214
      %v7220 = vadd.f32 %v7181, %v7214
      %v7221 = vadd.f32 %v7182, %v7214
      %v7222 = vadd.f32 %v7183, %v7214
      %v7223 = vadd.f32 %v7184, %v7214
      %v7224 = vadd.f32 %v7185, %v7214
      %v7225 = vadd.f32 %v7186, %v7214
      %v7226 = vadd.f32 %v7187, %v7214
      %v7227 = vadd.f32 %v7188, %v7214
      %v7228 = vadd.f32 %v7189, %v7214
      %v7229 = vadd.f32 %v7190, %v7214
      %v7230 = vadd.f32 %v7191, %v7214
      %v7231 = vadd.f32 %v7192, %v7214
      %v7232 = vadd.f32 %v7193, %v7214
      %v7233 = vadd.f32 %v7194, %v7214
      %v7234 = vadd.f32 %v7195, %v7214
      %v7235 = vadd.f32 %v7196, %v7214
      %v7236 = vadd.f32 %v7197, %v7214
      %v7237 = vadd.f32 %v7198, %v7214
      %v7238 = vadd.f32 %v7199, %v7214
      %v7239 = vadd.f32 %v7200, %v7214
      %v7240 = vadd.f32 %v7201, %v7214
      %v7241 = vadd.f32 %v7202, %v7214
      %v7242 = vadd.f32 %v7203, %v7214
      %v7243 = vadd.f32 %v7204, %v7214
      %v7244 = vadd.f32 %v7205, %v7214
      %v7245 = vadd.f32 %v7206, %v7214
      %v7246 = vadd.f32 %v7207, %v7214
      %v7247 = vadd.f32 %v7208, %v7214
      %7248 = vst.msk [vmem:[%s278] sm:$0xff] %vm3008, %v7216
      %7249 = vst.msk [vmem:[%s278 + $0x8] sm:$0xff] %vm3008, %v7217
      %7250 = vst.msk [vmem:[%s278 + $0x10] sm:$0xff] %vm3008, %v7218
      %7251 = vst.msk [vmem:[%s278 + $0x18] sm:$0xff] %vm3008, %v7219
      %7252 = vst.msk [vmem:[%s278 + $0x20] sm:$0xff] %vm3008, %v7220
      %7253 = vst.msk [vmem:[%s278 + $0x28] sm:$0xff] %vm3008, %v7221
      %7254 = vst.msk [vmem:[%s278 + $0x30] sm:$0xff] %vm3008, %v7222
      %7255 = vst.msk [vmem:[%s278 + $0x38] sm:$0xff] %vm3008, %v7223
      %7256 = vst.msk [vmem:[%s278 + $0x40] sm:$0xff] %vm3008, %v7224
      %7257 = vst.msk [vmem:[%s278 + $0x48] sm:$0xff] %vm3008, %v7225
      %7258 = vst.msk [vmem:[%s278 + $0x50] sm:$0xff] %vm3008, %v7226
      %7259 = vst.msk [vmem:[%s278 + $0x58] sm:$0xff] %vm3008, %v7227
      %7260 = vst.msk [vmem:[%s278 + $0x60] sm:$0xff] %vm3008, %v7228
      %7261 = vst.msk [vmem:[%s278 + $0x68] sm:$0xff] %vm3008, %v7229
      %7262 = vst.msk [vmem:[%s278 + $0x70] sm:$0xff] %vm3008, %v7230
      %7263 = vst.msk [vmem:[%s278 + $0x78] sm:$0xff] %vm3008, %v7231
      %7264 = vst.msk [vmem:[%s278 + $0x80] sm:$0xff] %vm3008, %v7232
      %7265 = vst.msk [vmem:[%s278 + $0x88] sm:$0xff] %vm3008, %v7233
      %7266 = vst.msk [vmem:[%s278 + $0x90] sm:$0xff] %vm3008, %v7234
      %7267 = vst.msk [vmem:[%s278 + $0x98] sm:$0xff] %vm3008, %v7235
      %7268 = vst.msk [vmem:[%s278 + $0xa0] sm:$0xff] %vm3008, %v7236
      %7269 = vst.msk [vmem:[%s278 + $0xa8] sm:$0xff] %vm3008, %v7237
      %7270 = vst.msk [vmem:[%s278 + $0xb0] sm:$0xff] %vm3008, %v7238
      %7271 = vst.msk [vmem:[%s278 + $0xb8] sm:$0xff] %vm3008, %v7239
      %7272 = vst.msk [vmem:[%s278 + $0xc0] sm:$0xff] %vm3008, %v7240
      %7273 = vst.msk [vmem:[%s278 + $0xc8] sm:$0xff] %vm3008, %v7241
      %7274 = vst.msk [vmem:[%s278 + $0xd0] sm:$0xff] %vm3008, %v7242
      %7275 = vst.msk [vmem:[%s278 + $0xd8] sm:$0xff] %vm3008, %v7243
      %7276 = vst.msk [vmem:[%s278 + $0xe0] sm:$0xff] %vm3008, %v7244
      %7277 = vst.msk [vmem:[%s278 + $0xe8] sm:$0xff] %vm3008, %v7245
      %7278 = vst.msk [vmem:[%s278 + $0xf0] sm:$0xff] %vm3008, %v7246
      %7279 = vst.msk [vmem:[%s278 + $0xf8] sm:$0xff] %vm3008, %v7247
      %p7280 = scmp.lt.s32.totalorder %s18, 1
      %s7281 = scalar_select %p7280, %s18, 1
      %s7282 = smul.addr %s7281, 32
      %s7283 = smul.addr %s7282, 8
      %s7284 = scalar_lea.vmem %s7, %s7283
      // Predicated region
      $region49: #{conv_block_forward.1} parent=47 // pred_check
        %p7285 = pneg %p188
      $region50: #{conv_block_forward.1} parent=47 // pred_check_branch
        %7287 = sbr.rel (%p7285) target = $region52
      $region51: #{conv_block_forward.1} parent=47 // pred_region
        _
      $region52: #{conv_block_forward.1} parent=47 // pred_fallthru
        _
    $region48: #{conv_block_forward.1} parent=5 // pred_fallthru
      _
    %p7288 = scmp.le.s32.totalorder 2, %s13
    // Predicated region
    $region53: #{conv_block_forward.1} parent=5 // pred_check
      %p7289 = pneg %p7288
    $region54: #{conv_block_forward.1} parent=5 // pred_check_branch
      %7291 = sbr.rel (%p7289) target = $region56
    $region55: #{conv_block_forward.1} parent=5 // pred_region
      %s7292 = ssub.s32 %s13, 2
      // Predicated region
      $region57: #{conv_block_forward.1} parent=55 // pred_check
        %p7293 = pneg %p194
      $region58: #{conv_block_forward.1} parent=55 // pred_check_branch
        %7295 = sbr.rel (%p7293) target = $region60
      $region59: #{conv_block_forward.1} parent=55 // pred_region
        %p7296 = scmp.lt.s32.totalorder %s19, 1
        %s7297 = scalar_select %p7296, %s19, 1
        %s7298 = smul.addr %s7297, 32
        %s7299 = smul.addr %s7298, 8
        %s7300 = scalar_lea.vmem %s7, %s7299
      $region60: #{conv_block_forward.1} parent=55 // pred_fallthru
        _
    $region56: #{conv_block_forward.1} parent=5 // pred_fallthru
      _
  $region6: #{conv_block_forward.1} parent=0 // loop_footer
    %s17 = sadd.s32 1, %s13
  $region7: #{conv_block_forward.1} parent=0 // loop_footer_branch
    %12 = sbr.rel target = $region3
  $region8: #{conv_block_forward.1} parent=0 // loop_exit
    _

</llo_original>
